<compile_context>
chip_gen: v7x
topology: tpu7x:2x2x1
jax: 0.10.0
libtpu: 0.0.40
codegen_flags: <defaults>
</compile_context>

<pallas_src>
import functools

import jax
import jax.numpy as jnp
from jax import lax
from jax.experimental import pallas as pl
from jax.experimental.pallas import tpu as pltpu

HI = lax.Precision.HIGHEST  # reference-path precision only (no global config)


# ----------------------------------------------------------------------------
# Pallas kernel: full encoder (all layers) for one batch element per grid step
# ----------------------------------------------------------------------------
def make_encoder_kernel(S, F, num_layers, temporal_heads, channel_heads):
    dF = F // temporal_heads          # temporal head dim
    dS = S // channel_heads           # channel head dim
    t_scale = 1.0 / float(dF) ** 0.5
    c_scale = 1.0 / float(dS) ** 0.5

    def kernel(x_ref,
               t_wqkv_ref, t_wo_ref, t_bqkv_ref,      # (L,F,3F), (L,F,F), (L,1,3F)
               c_wqkv_ref, c_woT_ref, c_bqkv_ref,     # (L,S,3S), (L,S,S), (L,1,3S)
               c_bo_ref,                              # (L,S,1)
               fvec_ref,                              # (L,5,F): t_bo, an_g, an_b, fn_g, fn_b
               t2_ref, t3_ref,                        # (L,3F,F), (L,5F,F) stacked Toeplitz
               cs_ref,                                # SMEM (L,4): w1,b1,b2,b3 (BN folded)
               o_ref):

        def layer_norm(z, g_row, b_row):
            mu = jnp.mean(z, axis=-1, keepdims=True)
            var = jnp.mean((z - mu) ** 2, axis=-1, keepdims=True)
            return (z - mu) * lax.rsqrt(var + 1e-5) * g_row + b_row

        def softmax_last(s):
            s = s - jnp.max(s, axis=-1, keepdims=True)
            e = jnp.exp(s)
            denom = jnp.sum(e, axis=-1, keepdims=True)
            return e * pl.reciprocal(denom, approx=True)

        x = x_ref[0].astype(jnp.float32)              # (S, F), resident across layers
        zero2 = jnp.zeros((2, F), jnp.float32)        # conv row border, built once

        for l in range(num_layers):                   # static unroll: whole encoder fused
            fvec = fvec_ref[l]                        # (5, F)

            # ---------- temporal self-attention (tokens = S, embed = F) ----------
            qkv_t = (jnp.dot(x, t_wqkv_ref[l], preferred_element_type=jnp.float32)
                     + t_bqkv_ref[l])                                     # (S, 3F)
            heads_t = []
            for h in range(temporal_heads):
                c0 = h * dF
                q = qkv_t[:, c0:c0 + dF]
                k = qkv_t[:, F + c0:F + c0 + dF]
                v = qkv_t[:, 2 * F + c0:2 * F + c0 + dF]
                s = jnp.dot(q * t_scale, k.T,
                            preferred_element_type=jnp.float32)           # (S, S)
                heads_t.append(jnp.dot(softmax_last(s), v,
                                       preferred_element_type=jnp.float32))  # (S,dF)
            o_t = jnp.concatenate(heads_t, axis=-1)                       # (S, F)
            t_out = (jnp.dot(o_t, t_wo_ref[l],
                             preferred_element_type=jnp.float32)
                     + fvec[0:1, :])                                       # (S, F)

            # ---------- channel self-attention (tokens = F, embed = S) ----------
            xt = x.T                                                       # (F, S)
            qkv_c = (jnp.dot(xt, c_wqkv_ref[l],
                             preferred_element_type=jnp.float32)
                     + c_bqkv_ref[l])                                      # (F, 3S)
            heads_c = []
            for h in range(channel_heads):
                r0 = h * dS
                q = qkv_c[:, r0:r0 + dS]
                k = qkv_c[:, S + r0:S + r0 + dS]
                v = qkv_c[:, 2 * S + r0:2 * S + r0 + dS]
                s = jnp.dot(q * c_scale, k.T,
                            preferred_element_type=jnp.float32)            # (F, F)
                heads_c.append(jnp.dot(softmax_last(s), v,
                                       preferred_element_type=jnp.float32))  # (F,dS)
            o_c = jnp.concatenate(heads_c, axis=-1)                        # (F, S)
            c_out_T = jnp.dot(o_c, c_woT_ref[l],
                              preferred_element_type=jnp.float32)          # (F, S)
            c_out = c_out_T.T + c_bo_ref[l]                                # (S,F)+(S,1)

            src1 = layer_norm(x + t_out + c_out, fvec[1:2, :], fvec[2:3, :])

            # ---------- CNN branch: 1x1 -> 3x3 -> 5x5 (BN folded, conv-as-matmul) ----------
            w1 = cs_ref[l, 0]
            b1 = cs_ref[l, 1]
            b2 = cs_ref[l, 2]
            b3 = cs_ref[l, 3]
            h1 = jnp.maximum(src1 * w1 + b1, 0.0)

            # 3x3: fused-K matmul over the 3 shifted row-windows (register values).
            hp = jnp.concatenate([zero2, h1, zero2], axis=0)               # (S+4, F)
            lhs3 = jnp.concatenate([hp[1 + p:1 + p + S, :] for p in range(3)],
                                   axis=-1)                                # (S, 3F)
            h2 = jnp.maximum(jnp.dot(lhs3, t2_ref[l],
                                     preferred_element_type=jnp.float32) + b2, 0.0)

            # 5x5
            hp = jnp.concatenate([zero2, h2, zero2], axis=0)               # (S+4, F)
            lhs5 = jnp.concatenate([hp[p:p + S, :] for p in range(5)],
                                   axis=-1)                                # (S, 5F)
            h3 = jnp.maximum(jnp.dot(lhs5, t3_ref[l],
                                     preferred_element_type=jnp.float32) + b3, 0.0)

            x = layer_norm(src1 + h3, fvec[3:4, :], fvec[4:5, :])

        o_ref[0] = x.astype(o_ref.dtype)

    return kernel


# ----------------------------------------------------------------------------
# Wrapper: parameter packing (plain JAX) + single pallas_call
# ----------------------------------------------------------------------------
def _fold_bn(w, b, bn):
    """Fold eval-mode BatchNorm into conv weight/bias."""
    g, beta, rm, rv = bn
    scale = (g / jnp.sqrt(rv + 1e-5)).reshape(())
    return w * scale, b.reshape(()) * scale + (beta.reshape(()) - rm.reshape(()) * scale)


def _toeplitz_rows(w2d, width):
    """For each conv-kernel row, the (width,width) banded column-conv matrix."""
    K = w2d.shape[0]
    pad = K // 2
    d = jnp.arange(width)[:, None] - jnp.arange(width)[None, :] + pad
    valid = (d >= 0) & (d < K)
    dc = jnp.clip(d, 0, K - 1)
    return jnp.stack([jnp.where(valid, w2d[r][dc], 0.0) for r in range(K)])


@functools.partial(jax.jit, static_argnums=(2, 3))
def encoder_forward(x, layer_params, temporal_heads, channel_heads):
    B, S, F = x.shape
    L = len(layer_params)

    # ---- pack per-layer parameters into a handful of stacked arrays ----
    t_wqkv = jnp.stack([jnp.concatenate(
        [p["t_wq"], p["t_wk"], p["t_wv"]], axis=0).T for p in layer_params])      # (L,F,3F)
    t_wo = jnp.stack([p["t_wo"].T for p in layer_params])                          # (L,F,F)
    t_bqkv = jnp.stack([jnp.concatenate(
        [p["t_bq"], p["t_bk"], p["t_bv"]])[None, :] for p in layer_params])        # (L,1,3F)
    c_wqkv = jnp.stack([jnp.concatenate(
        [p["c_wq"], p["c_wk"], p["c_wv"]], axis=0).T for p in layer_params])       # (L,S,3S)
    c_woT = jnp.stack([p["c_wo"].T for p in layer_params])                         # (L,S,S)
    c_bqkv = jnp.stack([jnp.concatenate(
        [p["c_bq"], p["c_bk"], p["c_bv"]])[None, :] for p in layer_params])        # (L,1,3S)
    c_bo = jnp.stack([p["c_bo"][:, None] for p in layer_params])                   # (L,S,1)
    fvecs = jnp.stack([jnp.stack(
        [p["t_bo"], p["an_g"], p["an_b"], p["fn_g"], p["fn_b"]])
        for p in layer_params])                                                    # (L,5,F)

    t2_l, t3_l, cs_l = [], [], []
    for p in layer_params:
        fw1, fb1 = _fold_bn(p["cnn_w1"].reshape(()), p["cnn_b1"], p["bn1"])
        fw2, fb2 = _fold_bn(p["cnn_w2"].reshape(3, 3), p["cnn_b2"], p["bn2"])
        fw3, fb3 = _fold_bn(p["cnn_w3"].reshape(5, 5), p["cnn_b3"], p["bn3"])
        t2_l.append(_toeplitz_rows(fw2, F).reshape(3 * F, F))   # vertical stack of taps
        t3_l.append(_toeplitz_rows(fw3, F).reshape(5 * F, F))
        cs_l.append(jnp.stack([fw1, fb1, fb2, fb3]))
    t2 = jnp.stack(t2_l)                                                            # (L,3F,F)
    t3 = jnp.stack(t3_l)                                                            # (L,5F,F)
    conv_scal = jnp.stack(cs_l).astype(jnp.float32)                                 # (L,4)

    kernel = make_encoder_kernel(S, F, L, temporal_heads, channel_heads)

    def full_spec(a):
        zeros = (0,) * a.ndim
        return pl.BlockSpec(a.shape, lambda b, z=zeros: z)

    vmem_args = [t_wqkv, t_wo, t_bqkv, c_wqkv, c_woT, c_bqkv, c_bo, fvecs, t2, t3]

    in_specs = ([pl.BlockSpec((1, S, F), lambda b: (b, 0, 0))]
                + [full_spec(a) for a in vmem_args]
                + [pl.BlockSpec(memory_space=pltpu.MemorySpace.SMEM)])

    return pl.pallas_call(
        kernel,
        out_shape=jax.ShapeDtypeStruct((B, S, F), x.dtype),
        grid=(B,),
        in_specs=in_specs,
        out_specs=pl.BlockSpec((1, S, F), lambda b: (b, 0, 0)),
        compiler_params=pltpu.CompilerParams(dimension_semantics=("parallel",)),
    )(x, *vmem_args, conv_scal)


# ----------------------------------------------------------------------------
# Deterministic synthetic parameter init (shapes from the nn.Module __init__)
# ----------------------------------------------------------------------------
def init_layer_params(key, S, F):
    keys = jax.random.split(key, 24)

    def w(i, shape, scale=0.08):
        return jax.random.normal(keys[i], shape, jnp.float32) * scale

    p = {}
    p["t_wq"], p["t_wk"], p["t_wv"] = w(0, (F, F)), w(1, (F, F)), w(2, (F, F))
    p["t_bq"], p["t_bk"], p["t_bv"] = w(3, (F,), 0.02), w(4, (F,), 0.02), w(5, (F,), 0.02)
    p["t_wo"], p["t_bo"] = w(6, (F, F)), w(7, (F,), 0.02)
    p["c_wq"], p["c_wk"], p["c_wv"] = w(8, (S, S)), w(9, (S, S)), w(10, (S, S))
    p["c_bq"], p["c_bk"], p["c_bv"] = w(11, (S,), 0.02), w(12, (S,), 0.02), w(13, (S,), 0.02)
    p["c_wo"], p["c_bo"] = w(14, (S, S)), w(15, (S,), 0.02)
    p["an_g"], p["an_b"] = jnp.ones((F,), jnp.float32), jnp.zeros((F,), jnp.float32)
    p["cnn_w1"], p["cnn_b1"] = w(16, (1, 1, 1, 1), 0.5) + 1.0, w(17, (1,), 0.05)
    p["cnn_w2"], p["cnn_b2"] = w(18, (1, 1, 3, 3), 0.2), w(19, (1,), 0.05)
    p["cnn_w3"], p["cnn_b3"] = w(20, (1, 1, 5, 5), 0.1), w(21, (1,), 0.05)
    one = jnp.ones((1,), jnp.float32)
    zero = jnp.zeros((1,), jnp.float32)
    # (gamma, beta, running_mean, running_var) -- eval mode
    p["bn1"] = (one * 1.10, one * 0.02, zero, one)
    p["bn2"] = (one * 0.90, one * -0.01, zero, one)
    p["bn3"] = (one * 1.05, one * 0.03, zero, one)
    p["fn_g"], p["fn_b"] = jnp.ones((F,), jnp.float32), jnp.zeros((F,), jnp.float32)
    return p


# ----------------------------------------------------------------------------
# Pure-JAX reference (mirrors the PyTorch forward), explicit HIGHEST precision
# ----------------------------------------------------------------------------
def ref_mha(x, wq, wk, wv, bq, bk, bv, wo, bo, H):
    B, L, E = x.shape
    dh = E // H
    q = jnp.matmul(x, wq.T, precision=HI) + bq
    k = jnp.matmul(x, wk.T, precision=HI) + bk
    v = jnp.matmul(x, wv.T, precision=HI) + bv
    split = lambda t: t.reshape(B, L, H, dh).transpose(0, 2, 1, 3)
    qs, ks, vs = split(q), split(k), split(v)
    s = jnp.einsum("bhqd,bhkd->bhqk", qs, ks, precision=HI) / jnp.sqrt(jnp.float32(dh))
    a = jax.nn.softmax(s, axis=-1)
    o = jnp.einsum("bhqk,bhkd->bhqd", a, vs,
                   precision=HI).transpose(0, 2, 1, 3).reshape(B, L, E)
    return jnp.matmul(o, wo.T, precision=HI) + bo


def ref_layer_norm(x, g, b):
    mu = jnp.mean(x, axis=-1, keepdims=True)
    var = jnp.mean((x - mu) ** 2, axis=-1, keepdims=True)
    return (x - mu) / jnp.sqrt(var + 1e-5) * g + b


def ref_conv(x, w, b, pad):
    y = lax.conv_general_dilated(x, w, (1, 1), [(pad, pad), (pad, pad)],
                                 dimension_numbers=("NCHW", "OIHW", "NCHW"),
                                 precision=HI)
    return y + b.reshape(1, -1, 1, 1)


def ref_bn(x, bn):
    g, beta, rm, rv = (t.reshape(1, -1, 1, 1) for t in bn)
    return (x - rm) / jnp.sqrt(rv + 1e-5) * g + beta


def ref_layer(x, p, th, ch):
    t = ref_mha(x, p["t_wq"], p["t_wk"], p["t_wv"], p["t_bq"], p["t_bk"],
                p["t_bv"], p["t_wo"], p["t_bo"], th)
    xt = jnp.swapaxes(x, -1, -2)
    c = jnp.swapaxes(
        ref_mha(xt, p["c_wq"], p["c_wk"], p["c_wv"], p["c_bq"], p["c_bk"],
                p["c_bv"], p["c_wo"], p["c_bo"], ch), -1, -2)
    src1 = ref_layer_norm(x + t + c, p["an_g"], p["an_b"])
    img = src1[:, None, :, :]
    y = jax.nn.relu(ref_bn(ref_conv(img, p["cnn_w1"], p["cnn_b1"], 0), p["bn1"]))
    y = jax.nn.relu(ref_bn(ref_conv(y, p["cnn_w2"], p["cnn_b2"], 1), p["bn2"]))
    y = jax.nn.relu(ref_bn(ref_conv(y, p["cnn_w3"], p["cnn_b3"], 2), p["bn3"]))
    return ref_layer_norm(src1 + y[:, 0], p["fn_g"], p["fn_b"])


# ----------------------------------------------------------------------------
if __name__ == "__main__":
    B, S, F = 2, 8, 32           # batch, seq_len, feature_dim
    temporal_heads, channel_heads = 2, 2
    num_layer = 2

    key = jax.random.PRNGKey(0)
    kx, *klayers = jax.random.split(key, num_layer + 1)
    x = jax.random.normal(kx, (B, S, F), jnp.float32)
    layer_params = [init_layer_params(k, S, F) for k in klayers]

    out = encoder_forward(x, layer_params, temporal_heads, channel_heads)
    out = jax.block_until_ready(out)

    ref = x
    for p in layer_params:
        ref = ref_layer(ref, p, temporal_heads, channel_heads)
    max_err = float(jnp.max(jnp.abs(out - ref)))
    # Single-pass bf16 MXU (f32 accumulate) at K<=160; errors stay ~1e-3 here.
    assert jnp.allclose(out, ref, atol=2e-2, rtol=2e-2), max_err

    print("KERNEL_OK")
</pallas_src>

<mosaic_0001>
module attributes {stable_mosaic.version = 11 : i64} {
  func.func @kernel(%arg0: i32, %arg1: memref<1x8x32xf32, #tpu.memory_space<vmem>>, %arg2: memref<2x32x96xf32, #tpu.memory_space<vmem>>, %arg3: memref<2x32x32xf32, #tpu.memory_space<vmem>>, %arg4: memref<2x1x96xf32, #tpu.memory_space<vmem>>, %arg5: memref<2x8x24xf32, #tpu.memory_space<vmem>>, %arg6: memref<2x8x8xf32, #tpu.memory_space<vmem>>, %arg7: memref<2x1x24xf32, #tpu.memory_space<vmem>>, %arg8: memref<2x8x1xf32, #tpu.memory_space<vmem>>, %arg9: memref<2x5x32xf32, #tpu.memory_space<vmem>>, %arg10: memref<2x96x32xf32, #tpu.memory_space<vmem>>, %arg11: memref<2x160x32xf32, #tpu.memory_space<vmem>>, %arg12: memref<2x4xf32, #tpu.memory_space<smem>>, %arg13: memref<1x8x32xf32, #tpu.memory_space<vmem>>) attributes {dimension_semantics = [#tpu.dimension_semantics<parallel>], iteration_bounds = array<i64: 2>, scalar_prefetch = 0 : i64, scratch_operands = 0 : i64, tpu.core_type = #tpu.core_type<tc>, window_params = [{transform_indices = @transform_0, window_bounds = array<i64: 1, 8, 32>}, {pipeline_mode = #tpu.pipeline_mode<synchronous>, transform_indices = @transform_1, window_bounds = array<i64: 2, 32, 96>}, {pipeline_mode = #tpu.pipeline_mode<synchronous>, transform_indices = @transform_2, window_bounds = array<i64: 2, 32, 32>}, {pipeline_mode = #tpu.pipeline_mode<synchronous>, transform_indices = @transform_3, window_bounds = array<i64: 2, 1, 96>}, {pipeline_mode = #tpu.pipeline_mode<synchronous>, transform_indices = @transform_4, window_bounds = array<i64: 2, 8, 24>}, {pipeline_mode = #tpu.pipeline_mode<synchronous>, transform_indices = @transform_5, window_bounds = array<i64: 2, 8, 8>}, {pipeline_mode = #tpu.pipeline_mode<synchronous>, transform_indices = @transform_6, window_bounds = array<i64: 2, 1, 24>}, {pipeline_mode = #tpu.pipeline_mode<synchronous>, transform_indices = @transform_7, window_bounds = array<i64: 2, 8, 1>}, {pipeline_mode = #tpu.pipeline_mode<synchronous>, transform_indices = @transform_8, window_bounds = array<i64: 2, 5, 32>}, {pipeline_mode = #tpu.pipeline_mode<synchronous>, transform_indices = @transform_9, window_bounds = array<i64: 2, 96, 32>}, {pipeline_mode = #tpu.pipeline_mode<synchronous>, transform_indices = @transform_10, window_bounds = array<i64: 2, 160, 32>}, {transform_indices = @transform_11, window_bounds = array<i64: 2, 4>}, {transform_indices = @transform_12, window_bounds = array<i64: 1, 8, 32>}]} {
    %c0 = arith.constant 0 : index
    %c0_0 = arith.constant 0 : index
    %c0_1 = arith.constant 0 : index
    %0 = vector.load %arg1[%c0, %c0_0, %c0_1] : memref<1x8x32xf32, #tpu.memory_space<vmem>>, vector<1x8x32xf32>
    %1 = vector.shape_cast %0 : vector<1x8x32xf32> to vector<8x32xf32>
    %cst = arith.constant 0.000000e+00 : f32
    %2 = vector.broadcast %cst : f32 to vector<2x32xf32>
    %c0_2 = arith.constant 0 : index
    %c0_3 = arith.constant 0 : index
    %c0_4 = arith.constant 0 : index
    %3 = vector.load %arg9[%c0_2, %c0_3, %c0_4] : memref<2x5x32xf32, #tpu.memory_space<vmem>>, vector<1x5x32xf32>
    %4 = vector.shape_cast %3 : vector<1x5x32xf32> to vector<5x32xf32>
    %c0_5 = arith.constant 0 : index
    %c0_6 = arith.constant 0 : index
    %c0_7 = arith.constant 0 : index
    %5 = vector.load %arg2[%c0_5, %c0_6, %c0_7] : memref<2x32x96xf32, #tpu.memory_space<vmem>>, vector<1x32x96xf32>
    %6 = vector.shape_cast %5 : vector<1x32x96xf32> to vector<32x96xf32>
    %cst_8 = arith.constant dense<0.000000e+00> : vector<8x96xf32>
    %7 = tpu.matmul %1, %6, %cst_8 {dimension_numbers = #tpu.dot_dimension_numbers<[1], [0], [0], [1], [0, 0, 1, 1], [], []>} : vector<8x32xf32>, vector<32x96xf32>, vector<8x96xf32> -> vector<8x96xf32>
    %c0_9 = arith.constant 0 : index
    %c0_10 = arith.constant 0 : index
    %c0_11 = arith.constant 0 : index
    %8 = vector.load %arg4[%c0_9, %c0_10, %c0_11] : memref<2x1x96xf32, #tpu.memory_space<vmem>>, vector<1x1x96xf32>
    %9 = vector.shape_cast %8 : vector<1x1x96xf32> to vector<1x96xf32>
    %10 = vector.broadcast %9 : vector<1x96xf32> to vector<8x96xf32>
    %11 = arith.addf %7, %10 : vector<8x96xf32>
    %12 = vector.extract_strided_slice %11 {offsets = [0, 0], sizes = [8, 16], strides = [1, 1]} : vector<8x96xf32> to vector<8x16xf32>
    %13 = vector.extract_strided_slice %11 {offsets = [0, 32], sizes = [8, 16], strides = [1, 1]} : vector<8x96xf32> to vector<8x16xf32>
    %14 = vector.extract_strided_slice %11 {offsets = [0, 64], sizes = [8, 16], strides = [1, 1]} : vector<8x96xf32> to vector<8x16xf32>
    %cst_12 = arith.constant 2.500000e-01 : f32
    %15 = vector.broadcast %cst_12 : f32 to vector<8x16xf32>
    %16 = arith.mulf %12, %15 : vector<8x16xf32>
    %17 = tpu.transpose %13, [1, 0] : vector<8x16xf32> -> vector<16x8xf32>
    %cst_13 = arith.constant dense<0.000000e+00> : vector<8x8xf32>
    %18 = tpu.matmul %16, %17, %cst_13 {dimension_numbers = #tpu.dot_dimension_numbers<[1], [0], [0], [1], [0, 0, 1, 1], [], []>} : vector<8x16xf32>, vector<16x8xf32>, vector<8x8xf32> -> vector<8x8xf32>
    %cst_14 = arith.constant dense<0xFF800000> : vector<8xf32>
    %19 = vector.multi_reduction <maximumf>, %18, %cst_14 [1] : vector<8x8xf32> to vector<8xf32>
    %20 = vector.shape_cast %19 : vector<8xf32> to vector<8x1xf32>
    %21 = vector.broadcast %20 : vector<8x1xf32> to vector<8x8xf32>
    %22 = arith.subf %18, %21 : vector<8x8xf32>
    %23 = math.exp %22 : vector<8x8xf32>
    %cst_15 = arith.constant dense<0.000000e+00> : vector<8xf32>
    %24 = vector.multi_reduction <add>, %23, %cst_15 [1] : vector<8x8xf32> to vector<8xf32>
    %25 = vector.shape_cast %24 : vector<8xf32> to vector<8x1xf32>
    %26 = tpu.reciprocal %25 {approx = true} : vector<8x1xf32> -> vector<8x1xf32>
    %27 = vector.broadcast %26 : vector<8x1xf32> to vector<8x8xf32>
    %28 = arith.mulf %23, %27 : vector<8x8xf32>
    %cst_16 = arith.constant dense<0.000000e+00> : vector<8x16xf32>
    %29 = tpu.matmul %28, %14, %cst_16 {dimension_numbers = #tpu.dot_dimension_numbers<[1], [0], [0], [1], [0, 0, 1, 1], [], []>} : vector<8x8xf32>, vector<8x16xf32>, vector<8x16xf32> -> vector<8x16xf32>
    %30 = vector.extract_strided_slice %11 {offsets = [0, 16], sizes = [8, 16], strides = [1, 1]} : vector<8x96xf32> to vector<8x16xf32>
    %31 = vector.extract_strided_slice %11 {offsets = [0, 48], sizes = [8, 16], strides = [1, 1]} : vector<8x96xf32> to vector<8x16xf32>
    %32 = vector.extract_strided_slice %11 {offsets = [0, 80], sizes = [8, 16], strides = [1, 1]} : vector<8x96xf32> to vector<8x16xf32>
    %cst_17 = arith.constant 2.500000e-01 : f32
    %33 = vector.broadcast %cst_17 : f32 to vector<8x16xf32>
    %34 = arith.mulf %30, %33 : vector<8x16xf32>
    %35 = tpu.transpose %31, [1, 0] : vector<8x16xf32> -> vector<16x8xf32>
    %cst_18 = arith.constant dense<0.000000e+00> : vector<8x8xf32>
    %36 = tpu.matmul %34, %35, %cst_18 {dimension_numbers = #tpu.dot_dimension_numbers<[1], [0], [0], [1], [0, 0, 1, 1], [], []>} : vector<8x16xf32>, vector<16x8xf32>, vector<8x8xf32> -> vector<8x8xf32>
    %cst_19 = arith.constant dense<0xFF800000> : vector<8xf32>
    %37 = vector.multi_reduction <maximumf>, %36, %cst_19 [1] : vector<8x8xf32> to vector<8xf32>
    %38 = vector.shape_cast %37 : vector<8xf32> to vector<8x1xf32>
    %39 = vector.broadcast %38 : vector<8x1xf32> to vector<8x8xf32>
    %40 = arith.subf %36, %39 : vector<8x8xf32>
    %41 = math.exp %40 : vector<8x8xf32>
    %cst_20 = arith.constant dense<0.000000e+00> : vector<8xf32>
    %42 = vector.multi_reduction <add>, %41, %cst_20 [1] : vector<8x8xf32> to vector<8xf32>
    %43 = vector.shape_cast %42 : vector<8xf32> to vector<8x1xf32>
    %44 = tpu.reciprocal %43 {approx = true} : vector<8x1xf32> -> vector<8x1xf32>
    %45 = vector.broadcast %44 : vector<8x1xf32> to vector<8x8xf32>
    %46 = arith.mulf %41, %45 : vector<8x8xf32>
    %cst_21 = arith.constant dense<0.000000e+00> : vector<8x16xf32>
    %47 = tpu.matmul %46, %32, %cst_21 {dimension_numbers = #tpu.dot_dimension_numbers<[1], [0], [0], [1], [0, 0, 1, 1], [], []>} : vector<8x8xf32>, vector<8x16xf32>, vector<8x16xf32> -> vector<8x16xf32>
    %48 = tpu.concatenate %29, %47 in 1 : vector<8x16xf32>, vector<8x16xf32> -> vector<8x32xf32>
    %c0_22 = arith.constant 0 : index
    %c0_23 = arith.constant 0 : index
    %c0_24 = arith.constant 0 : index
    %49 = vector.load %arg3[%c0_22, %c0_23, %c0_24] : memref<2x32x32xf32, #tpu.memory_space<vmem>>, vector<1x32x32xf32>
    %50 = vector.shape_cast %49 : vector<1x32x32xf32> to vector<32x32xf32>
    %cst_25 = arith.constant dense<0.000000e+00> : vector<8x32xf32>
    %51 = tpu.matmul %48, %50, %cst_25 {dimension_numbers = #tpu.dot_dimension_numbers<[1], [0], [0], [1], [0, 0, 1, 1], [], []>} : vector<8x32xf32>, vector<32x32xf32>, vector<8x32xf32> -> vector<8x32xf32>
    %52 = vector.extract_strided_slice %4 {offsets = [0, 0], sizes = [1, 32], strides = [1, 1]} : vector<5x32xf32> to vector<1x32xf32>
    %53 = vector.broadcast %52 : vector<1x32xf32> to vector<8x32xf32>
    %54 = arith.addf %51, %53 : vector<8x32xf32>
    %55 = tpu.transpose %1, [1, 0] : vector<8x32xf32> -> vector<32x8xf32>
    %c0_26 = arith.constant 0 : index
    %c0_27 = arith.constant 0 : index
    %c0_28 = arith.constant 0 : index
    %56 = vector.load %arg5[%c0_26, %c0_27, %c0_28] : memref<2x8x24xf32, #tpu.memory_space<vmem>>, vector<1x8x24xf32>
    %57 = vector.shape_cast %56 : vector<1x8x24xf32> to vector<8x24xf32>
    %cst_29 = arith.constant dense<0.000000e+00> : vector<32x24xf32>
    %58 = tpu.matmul %55, %57, %cst_29 {dimension_numbers = #tpu.dot_dimension_numbers<[1], [0], [0], [1], [0, 0, 1, 1], [], []>} : vector<32x8xf32>, vector<8x24xf32>, vector<32x24xf32> -> vector<32x24xf32>
    %c0_30 = arith.constant 0 : index
    %c0_31 = arith.constant 0 : index
    %c0_32 = arith.constant 0 : index
    %59 = vector.load %arg7[%c0_30, %c0_31, %c0_32] : memref<2x1x24xf32, #tpu.memory_space<vmem>>, vector<1x1x24xf32>
    %60 = vector.shape_cast %59 : vector<1x1x24xf32> to vector<1x24xf32>
    %61 = vector.broadcast %60 : vector<1x24xf32> to vector<32x24xf32>
    %62 = arith.addf %58, %61 : vector<32x24xf32>
    %63 = vector.extract_strided_slice %62 {offsets = [0, 0], sizes = [32, 4], strides = [1, 1]} : vector<32x24xf32> to vector<32x4xf32>
    %64 = vector.extract_strided_slice %62 {offsets = [0, 8], sizes = [32, 4], strides = [1, 1]} : vector<32x24xf32> to vector<32x4xf32>
    %65 = vector.extract_strided_slice %62 {offsets = [0, 16], sizes = [32, 4], strides = [1, 1]} : vector<32x24xf32> to vector<32x4xf32>
    %cst_33 = arith.constant 5.000000e-01 : f32
    %66 = vector.broadcast %cst_33 : f32 to vector<32x4xf32>
    %67 = arith.mulf %63, %66 : vector<32x4xf32>
    %68 = tpu.transpose %64, [1, 0] : vector<32x4xf32> -> vector<4x32xf32>
    %cst_34 = arith.constant dense<0.000000e+00> : vector<32x32xf32>
    %69 = tpu.matmul %67, %68, %cst_34 {dimension_numbers = #tpu.dot_dimension_numbers<[1], [0], [0], [1], [0, 0, 1, 1], [], []>} : vector<32x4xf32>, vector<4x32xf32>, vector<32x32xf32> -> vector<32x32xf32>
    %cst_35 = arith.constant dense<0xFF800000> : vector<32xf32>
    %70 = vector.multi_reduction <maximumf>, %69, %cst_35 [1] : vector<32x32xf32> to vector<32xf32>
    %71 = vector.shape_cast %70 : vector<32xf32> to vector<32x1xf32>
    %72 = vector.broadcast %71 : vector<32x1xf32> to vector<32x32xf32>
    %73 = arith.subf %69, %72 : vector<32x32xf32>
    %74 = math.exp %73 : vector<32x32xf32>
    %cst_36 = arith.constant dense<0.000000e+00> : vector<32xf32>
    %75 = vector.multi_reduction <add>, %74, %cst_36 [1] : vector<32x32xf32> to vector<32xf32>
    %76 = vector.shape_cast %75 : vector<32xf32> to vector<32x1xf32>
    %77 = tpu.reciprocal %76 {approx = true} : vector<32x1xf32> -> vector<32x1xf32>
    %78 = vector.broadcast %77 : vector<32x1xf32> to vector<32x32xf32>
    %79 = arith.mulf %74, %78 : vector<32x32xf32>
    %cst_37 = arith.constant dense<0.000000e+00> : vector<32x4xf32>
    %80 = tpu.matmul %79, %65, %cst_37 {dimension_numbers = #tpu.dot_dimension_numbers<[1], [0], [0], [1], [0, 0, 1, 1], [], []>} : vector<32x32xf32>, vector<32x4xf32>, vector<32x4xf32> -> vector<32x4xf32>
    %81 = vector.extract_strided_slice %62 {offsets = [0, 4], sizes = [32, 4], strides = [1, 1]} : vector<32x24xf32> to vector<32x4xf32>
    %82 = vector.extract_strided_slice %62 {offsets = [0, 12], sizes = [32, 4], strides = [1, 1]} : vector<32x24xf32> to vector<32x4xf32>
    %83 = vector.extract_strided_slice %62 {offsets = [0, 20], sizes = [32, 4], strides = [1, 1]} : vector<32x24xf32> to vector<32x4xf32>
    %cst_38 = arith.constant 5.000000e-01 : f32
    %84 = vector.broadcast %cst_38 : f32 to vector<32x4xf32>
    %85 = arith.mulf %81, %84 : vector<32x4xf32>
    %86 = tpu.transpose %82, [1, 0] : vector<32x4xf32> -> vector<4x32xf32>
    %cst_39 = arith.constant dense<0.000000e+00> : vector<32x32xf32>
    %87 = tpu.matmul %85, %86, %cst_39 {dimension_numbers = #tpu.dot_dimension_numbers<[1], [0], [0], [1], [0, 0, 1, 1], [], []>} : vector<32x4xf32>, vector<4x32xf32>, vector<32x32xf32> -> vector<32x32xf32>
    %cst_40 = arith.constant dense<0xFF800000> : vector<32xf32>
    %88 = vector.multi_reduction <maximumf>, %87, %cst_40 [1] : vector<32x32xf32> to vector<32xf32>
    %89 = vector.shape_cast %88 : vector<32xf32> to vector<32x1xf32>
    %90 = vector.broadcast %89 : vector<32x1xf32> to vector<32x32xf32>
    %91 = arith.subf %87, %90 : vector<32x32xf32>
    %92 = math.exp %91 : vector<32x32xf32>
    %cst_41 = arith.constant dense<0.000000e+00> : vector<32xf32>
    %93 = vector.multi_reduction <add>, %92, %cst_41 [1] : vector<32x32xf32> to vector<32xf32>
    %94 = vector.shape_cast %93 : vector<32xf32> to vector<32x1xf32>
    %95 = tpu.reciprocal %94 {approx = true} : vector<32x1xf32> -> vector<32x1xf32>
    %96 = vector.broadcast %95 : vector<32x1xf32> to vector<32x32xf32>
    %97 = arith.mulf %92, %96 : vector<32x32xf32>
    %cst_42 = arith.constant dense<0.000000e+00> : vector<32x4xf32>
    %98 = tpu.matmul %97, %83, %cst_42 {dimension_numbers = #tpu.dot_dimension_numbers<[1], [0], [0], [1], [0, 0, 1, 1], [], []>} : vector<32x32xf32>, vector<32x4xf32>, vector<32x4xf32> -> vector<32x4xf32>
    %99 = tpu.concatenate %80, %98 in 1 : vector<32x4xf32>, vector<32x4xf32> -> vector<32x8xf32>
    %c0_43 = arith.constant 0 : index
    %c0_44 = arith.constant 0 : index
    %c0_45 = arith.constant 0 : index
    %100 = vector.load %arg6[%c0_43, %c0_44, %c0_45] : memref<2x8x8xf32, #tpu.memory_space<vmem>>, vector<1x8x8xf32>
    %101 = vector.shape_cast %100 : vector<1x8x8xf32> to vector<8x8xf32>
    %cst_46 = arith.constant dense<0.000000e+00> : vector<32x8xf32>
    %102 = tpu.matmul %99, %101, %cst_46 {dimension_numbers = #tpu.dot_dimension_numbers<[1], [0], [0], [1], [0, 0, 1, 1], [], []>} : vector<32x8xf32>, vector<8x8xf32>, vector<32x8xf32> -> vector<32x8xf32>
    %103 = tpu.transpose %102, [1, 0] : vector<32x8xf32> -> vector<8x32xf32>
    %c0_47 = arith.constant 0 : index
    %c0_48 = arith.constant 0 : index
    %c0_49 = arith.constant 0 : index
    %104 = vector.load %arg8[%c0_47, %c0_48, %c0_49] : memref<2x8x1xf32, #tpu.memory_space<vmem>>, vector<1x8x1xf32>
    %105 = vector.shape_cast %104 : vector<1x8x1xf32> to vector<8x1xf32>
    %106 = vector.broadcast %105 : vector<8x1xf32> to vector<8x32xf32>
    %107 = arith.addf %103, %106 : vector<8x32xf32>
    %108 = arith.addf %1, %54 : vector<8x32xf32>
    %109 = arith.addf %108, %107 : vector<8x32xf32>
    %110 = vector.extract_strided_slice %4 {offsets = [1, 0], sizes = [1, 32], strides = [1, 1]} : vector<5x32xf32> to vector<1x32xf32>
    %111 = vector.extract_strided_slice %4 {offsets = [2, 0], sizes = [1, 32], strides = [1, 1]} : vector<5x32xf32> to vector<1x32xf32>
    %cst_50 = arith.constant dense<0.000000e+00> : vector<8xf32>
    %112 = vector.multi_reduction <add>, %109, %cst_50 [1] : vector<8x32xf32> to vector<8xf32>
    %113 = vector.shape_cast %112 : vector<8xf32> to vector<8x1xf32>
    %cst_51 = arith.constant 3.200000e+01 : f32
    %114 = vector.broadcast %cst_51 : f32 to vector<8x1xf32>
    %115 = arith.divf %113, %114 : vector<8x1xf32>
    %116 = vector.broadcast %115 : vector<8x1xf32> to vector<8x32xf32>
    %117 = arith.subf %109, %116 : vector<8x32xf32>
    %118 = arith.mulf %117, %117 : vector<8x32xf32>
    %cst_52 = arith.constant dense<0.000000e+00> : vector<8xf32>
    %119 = vector.multi_reduction <add>, %118, %cst_52 [1] : vector<8x32xf32> to vector<8xf32>
    %120 = vector.shape_cast %119 : vector<8xf32> to vector<8x1xf32>
    %cst_53 = arith.constant 3.200000e+01 : f32
    %121 = vector.broadcast %cst_53 : f32 to vector<8x1xf32>
    %122 = arith.divf %120, %121 : vector<8x1xf32>
    %123 = vector.broadcast %115 : vector<8x1xf32> to vector<8x32xf32>
    %124 = arith.subf %109, %123 : vector<8x32xf32>
    %cst_54 = arith.constant 9.99999974E-6 : f32
    %125 = vector.broadcast %cst_54 : f32 to vector<8x1xf32>
    %126 = arith.addf %122, %125 : vector<8x1xf32>
    %127 = math.rsqrt %126 : vector<8x1xf32>
    %128 = vector.broadcast %127 : vector<8x1xf32> to vector<8x32xf32>
    %129 = arith.mulf %124, %128 : vector<8x32xf32>
    %130 = vector.broadcast %110 : vector<1x32xf32> to vector<8x32xf32>
    %131 = arith.mulf %129, %130 : vector<8x32xf32>
    %132 = vector.broadcast %111 : vector<1x32xf32> to vector<8x32xf32>
    %133 = arith.addf %131, %132 : vector<8x32xf32>
    %c0_55 = arith.constant 0 : index
    %c0_56 = arith.constant 0 : index
    %134 = memref.load %arg12[%c0_55, %c0_56] : memref<2x4xf32, #tpu.memory_space<smem>>
    %c0_57 = arith.constant 0 : index
    %c1 = arith.constant 1 : index
    %135 = memref.load %arg12[%c0_57, %c1] : memref<2x4xf32, #tpu.memory_space<smem>>
    %c0_58 = arith.constant 0 : index
    %c2 = arith.constant 2 : index
    %136 = memref.load %arg12[%c0_58, %c2] : memref<2x4xf32, #tpu.memory_space<smem>>
    %c0_59 = arith.constant 0 : index
    %c3 = arith.constant 3 : index
    %137 = memref.load %arg12[%c0_59, %c3] : memref<2x4xf32, #tpu.memory_space<smem>>
    %138 = vector.broadcast %134 : f32 to vector<8x32xf32>
    %139 = arith.mulf %133, %138 : vector<8x32xf32>
    %140 = vector.broadcast %135 : f32 to vector<8x32xf32>
    %141 = arith.addf %139, %140 : vector<8x32xf32>
    %cst_60 = arith.constant 0.000000e+00 : f32
    %142 = vector.broadcast %cst_60 : f32 to vector<8x32xf32>
    %143 = arith.maximumf %141, %142 : vector<8x32xf32>
    %144 = tpu.concatenate %2, %143, %2 in 0 : vector<2x32xf32>, vector<8x32xf32>, vector<2x32xf32> -> vector<12x32xf32>
    %145 = vector.extract_strided_slice %144 {offsets = [1, 0], sizes = [8, 32], strides = [1, 1]} : vector<12x32xf32> to vector<8x32xf32>
    %146 = vector.extract_strided_slice %144 {offsets = [2, 0], sizes = [8, 32], strides = [1, 1]} : vector<12x32xf32> to vector<8x32xf32>
    %147 = vector.extract_strided_slice %144 {offsets = [3, 0], sizes = [8, 32], strides = [1, 1]} : vector<12x32xf32> to vector<8x32xf32>
    %148 = tpu.concatenate %145, %146, %147 in 1 : vector<8x32xf32>, vector<8x32xf32>, vector<8x32xf32> -> vector<8x96xf32>
    %c0_61 = arith.constant 0 : index
    %c0_62 = arith.constant 0 : index
    %c0_63 = arith.constant 0 : index
    %149 = vector.load %arg10[%c0_61, %c0_62, %c0_63] : memref<2x96x32xf32, #tpu.memory_space<vmem>>, vector<1x96x32xf32>
    %150 = vector.shape_cast %149 : vector<1x96x32xf32> to vector<96x32xf32>
    %cst_64 = arith.constant dense<0.000000e+00> : vector<8x32xf32>
    %151 = tpu.matmul %148, %150, %cst_64 {dimension_numbers = #tpu.dot_dimension_numbers<[1], [0], [0], [1], [0, 0, 1, 1], [], []>} : vector<8x96xf32>, vector<96x32xf32>, vector<8x32xf32> -> vector<8x32xf32>
    %152 = vector.broadcast %136 : f32 to vector<8x32xf32>
    %153 = arith.addf %151, %152 : vector<8x32xf32>
    %cst_65 = arith.constant 0.000000e+00 : f32
    %154 = vector.broadcast %cst_65 : f32 to vector<8x32xf32>
    %155 = arith.maximumf %153, %154 : vector<8x32xf32>
    %156 = tpu.concatenate %2, %155, %2 in 0 : vector<2x32xf32>, vector<8x32xf32>, vector<2x32xf32> -> vector<12x32xf32>
    %157 = vector.extract_strided_slice %156 {offsets = [0, 0], sizes = [8, 32], strides = [1, 1]} : vector<12x32xf32> to vector<8x32xf32>
    %158 = vector.extract_strided_slice %156 {offsets = [1, 0], sizes = [8, 32], strides = [1, 1]} : vector<12x32xf32> to vector<8x32xf32>
    %159 = vector.extract_strided_slice %156 {offsets = [2, 0], sizes = [8, 32], strides = [1, 1]} : vector<12x32xf32> to vector<8x32xf32>
    %160 = vector.extract_strided_slice %156 {offsets = [3, 0], sizes = [8, 32], strides = [1, 1]} : vector<12x32xf32> to vector<8x32xf32>
    %161 = vector.extract_strided_slice %156 {offsets = [4, 0], sizes = [8, 32], strides = [1, 1]} : vector<12x32xf32> to vector<8x32xf32>
    %162 = tpu.concatenate %157, %158, %159, %160, %161 in 1 : vector<8x32xf32>, vector<8x32xf32>, vector<8x32xf32>, vector<8x32xf32>, vector<8x32xf32> -> vector<8x160xf32>
    %c0_66 = arith.constant 0 : index
    %c0_67 = arith.constant 0 : index
    %c0_68 = arith.constant 0 : index
    %163 = vector.load %arg11[%c0_66, %c0_67, %c0_68] : memref<2x160x32xf32, #tpu.memory_space<vmem>>, vector<1x160x32xf32>
    %164 = vector.shape_cast %163 : vector<1x160x32xf32> to vector<160x32xf32>
    %cst_69 = arith.constant dense<0.000000e+00> : vector<8x32xf32>
    %165 = tpu.matmul %162, %164, %cst_69 {dimension_numbers = #tpu.dot_dimension_numbers<[1], [0], [0], [1], [0, 0, 1, 1], [], []>} : vector<8x160xf32>, vector<160x32xf32>, vector<8x32xf32> -> vector<8x32xf32>
    %166 = vector.broadcast %137 : f32 to vector<8x32xf32>
    %167 = arith.addf %165, %166 : vector<8x32xf32>
    %cst_70 = arith.constant 0.000000e+00 : f32
    %168 = vector.broadcast %cst_70 : f32 to vector<8x32xf32>
    %169 = arith.maximumf %167, %168 : vector<8x32xf32>
    %170 = arith.addf %133, %169 : vector<8x32xf32>
    %171 = vector.extract_strided_slice %4 {offsets = [3, 0], sizes = [1, 32], strides = [1, 1]} : vector<5x32xf32> to vector<1x32xf32>
    %172 = vector.extract_strided_slice %4 {offsets = [4, 0], sizes = [1, 32], strides = [1, 1]} : vector<5x32xf32> to vector<1x32xf32>
    %cst_71 = arith.constant dense<0.000000e+00> : vector<8xf32>
    %173 = vector.multi_reduction <add>, %170, %cst_71 [1] : vector<8x32xf32> to vector<8xf32>
    %174 = vector.shape_cast %173 : vector<8xf32> to vector<8x1xf32>
    %cst_72 = arith.constant 3.200000e+01 : f32
    %175 = vector.broadcast %cst_72 : f32 to vector<8x1xf32>
    %176 = arith.divf %174, %175 : vector<8x1xf32>
    %177 = vector.broadcast %176 : vector<8x1xf32> to vector<8x32xf32>
    %178 = arith.subf %170, %177 : vector<8x32xf32>
    %179 = arith.mulf %178, %178 : vector<8x32xf32>
    %cst_73 = arith.constant dense<0.000000e+00> : vector<8xf32>
    %180 = vector.multi_reduction <add>, %179, %cst_73 [1] : vector<8x32xf32> to vector<8xf32>
    %181 = vector.shape_cast %180 : vector<8xf32> to vector<8x1xf32>
    %cst_74 = arith.constant 3.200000e+01 : f32
    %182 = vector.broadcast %cst_74 : f32 to vector<8x1xf32>
    %183 = arith.divf %181, %182 : vector<8x1xf32>
    %184 = vector.broadcast %176 : vector<8x1xf32> to vector<8x32xf32>
    %185 = arith.subf %170, %184 : vector<8x32xf32>
    %cst_75 = arith.constant 9.99999974E-6 : f32
    %186 = vector.broadcast %cst_75 : f32 to vector<8x1xf32>
    %187 = arith.addf %183, %186 : vector<8x1xf32>
    %188 = math.rsqrt %187 : vector<8x1xf32>
    %189 = vector.broadcast %188 : vector<8x1xf32> to vector<8x32xf32>
    %190 = arith.mulf %185, %189 : vector<8x32xf32>
    %191 = vector.broadcast %171 : vector<1x32xf32> to vector<8x32xf32>
    %192 = arith.mulf %190, %191 : vector<8x32xf32>
    %193 = vector.broadcast %172 : vector<1x32xf32> to vector<8x32xf32>
    %194 = arith.addf %192, %193 : vector<8x32xf32>
    %c1_76 = arith.constant 1 : index
    %c0_77 = arith.constant 0 : index
    %c0_78 = arith.constant 0 : index
    %195 = vector.load %arg9[%c1_76, %c0_77, %c0_78] : memref<2x5x32xf32, #tpu.memory_space<vmem>>, vector<1x5x32xf32>
    %196 = vector.shape_cast %195 : vector<1x5x32xf32> to vector<5x32xf32>
    %c1_79 = arith.constant 1 : index
    %c0_80 = arith.constant 0 : index
    %c0_81 = arith.constant 0 : index
    %197 = vector.load %arg2[%c1_79, %c0_80, %c0_81] : memref<2x32x96xf32, #tpu.memory_space<vmem>>, vector<1x32x96xf32>
    %198 = vector.shape_cast %197 : vector<1x32x96xf32> to vector<32x96xf32>
    %cst_82 = arith.constant dense<0.000000e+00> : vector<8x96xf32>
    %199 = tpu.matmul %194, %198, %cst_82 {dimension_numbers = #tpu.dot_dimension_numbers<[1], [0], [0], [1], [0, 0, 1, 1], [], []>} : vector<8x32xf32>, vector<32x96xf32>, vector<8x96xf32> -> vector<8x96xf32>
    %c1_83 = arith.constant 1 : index
    %c0_84 = arith.constant 0 : index
    %c0_85 = arith.constant 0 : index
    %200 = vector.load %arg4[%c1_83, %c0_84, %c0_85] : memref<2x1x96xf32, #tpu.memory_space<vmem>>, vector<1x1x96xf32>
    %201 = vector.shape_cast %200 : vector<1x1x96xf32> to vector<1x96xf32>
    %202 = vector.broadcast %201 : vector<1x96xf32> to vector<8x96xf32>
    %203 = arith.addf %199, %202 : vector<8x96xf32>
    %204 = vector.extract_strided_slice %203 {offsets = [0, 0], sizes = [8, 16], strides = [1, 1]} : vector<8x96xf32> to vector<8x16xf32>
    %205 = vector.extract_strided_slice %203 {offsets = [0, 32], sizes = [8, 16], strides = [1, 1]} : vector<8x96xf32> to vector<8x16xf32>
    %206 = vector.extract_strided_slice %203 {offsets = [0, 64], sizes = [8, 16], strides = [1, 1]} : vector<8x96xf32> to vector<8x16xf32>
    %cst_86 = arith.constant 2.500000e-01 : f32
    %207 = vector.broadcast %cst_86 : f32 to vector<8x16xf32>
    %208 = arith.mulf %204, %207 : vector<8x16xf32>
    %209 = tpu.transpose %205, [1, 0] : vector<8x16xf32> -> vector<16x8xf32>
    %cst_87 = arith.constant dense<0.000000e+00> : vector<8x8xf32>
    %210 = tpu.matmul %208, %209, %cst_87 {dimension_numbers = #tpu.dot_dimension_numbers<[1], [0], [0], [1], [0, 0, 1, 1], [], []>} : vector<8x16xf32>, vector<16x8xf32>, vector<8x8xf32> -> vector<8x8xf32>
    %cst_88 = arith.constant dense<0xFF800000> : vector<8xf32>
    %211 = vector.multi_reduction <maximumf>, %210, %cst_88 [1] : vector<8x8xf32> to vector<8xf32>
    %212 = vector.shape_cast %211 : vector<8xf32> to vector<8x1xf32>
    %213 = vector.broadcast %212 : vector<8x1xf32> to vector<8x8xf32>
    %214 = arith.subf %210, %213 : vector<8x8xf32>
    %215 = math.exp %214 : vector<8x8xf32>
    %cst_89 = arith.constant dense<0.000000e+00> : vector<8xf32>
    %216 = vector.multi_reduction <add>, %215, %cst_89 [1] : vector<8x8xf32> to vector<8xf32>
    %217 = vector.shape_cast %216 : vector<8xf32> to vector<8x1xf32>
    %218 = tpu.reciprocal %217 {approx = true} : vector<8x1xf32> -> vector<8x1xf32>
    %219 = vector.broadcast %218 : vector<8x1xf32> to vector<8x8xf32>
    %220 = arith.mulf %215, %219 : vector<8x8xf32>
    %cst_90 = arith.constant dense<0.000000e+00> : vector<8x16xf32>
    %221 = tpu.matmul %220, %206, %cst_90 {dimension_numbers = #tpu.dot_dimension_numbers<[1], [0], [0], [1], [0, 0, 1, 1], [], []>} : vector<8x8xf32>, vector<8x16xf32>, vector<8x16xf32> -> vector<8x16xf32>
    %222 = vector.extract_strided_slice %203 {offsets = [0, 16], sizes = [8, 16], strides = [1, 1]} : vector<8x96xf32> to vector<8x16xf32>
    %223 = vector.extract_strided_slice %203 {offsets = [0, 48], sizes = [8, 16], strides = [1, 1]} : vector<8x96xf32> to vector<8x16xf32>
    %224 = vector.extract_strided_slice %203 {offsets = [0, 80], sizes = [8, 16], strides = [1, 1]} : vector<8x96xf32> to vector<8x16xf32>
    %cst_91 = arith.constant 2.500000e-01 : f32
    %225 = vector.broadcast %cst_91 : f32 to vector<8x16xf32>
    %226 = arith.mulf %222, %225 : vector<8x16xf32>
    %227 = tpu.transpose %223, [1, 0] : vector<8x16xf32> -> vector<16x8xf32>
    %cst_92 = arith.constant dense<0.000000e+00> : vector<8x8xf32>
    %228 = tpu.matmul %226, %227, %cst_92 {dimension_numbers = #tpu.dot_dimension_numbers<[1], [0], [0], [1], [0, 0, 1, 1], [], []>} : vector<8x16xf32>, vector<16x8xf32>, vector<8x8xf32> -> vector<8x8xf32>
    %cst_93 = arith.constant dense<0xFF800000> : vector<8xf32>
    %229 = vector.multi_reduction <maximumf>, %228, %cst_93 [1] : vector<8x8xf32> to vector<8xf32>
    %230 = vector.shape_cast %229 : vector<8xf32> to vector<8x1xf32>
    %231 = vector.broadcast %230 : vector<8x1xf32> to vector<8x8xf32>
    %232 = arith.subf %228, %231 : vector<8x8xf32>
    %233 = math.exp %232 : vector<8x8xf32>
    %cst_94 = arith.constant dense<0.000000e+00> : vector<8xf32>
    %234 = vector.multi_reduction <add>, %233, %cst_94 [1] : vector<8x8xf32> to vector<8xf32>
    %235 = vector.shape_cast %234 : vector<8xf32> to vector<8x1xf32>
    %236 = tpu.reciprocal %235 {approx = true} : vector<8x1xf32> -> vector<8x1xf32>
    %237 = vector.broadcast %236 : vector<8x1xf32> to vector<8x8xf32>
    %238 = arith.mulf %233, %237 : vector<8x8xf32>
    %cst_95 = arith.constant dense<0.000000e+00> : vector<8x16xf32>
    %239 = tpu.matmul %238, %224, %cst_95 {dimension_numbers = #tpu.dot_dimension_numbers<[1], [0], [0], [1], [0, 0, 1, 1], [], []>} : vector<8x8xf32>, vector<8x16xf32>, vector<8x16xf32> -> vector<8x16xf32>
    %240 = tpu.concatenate %221, %239 in 1 : vector<8x16xf32>, vector<8x16xf32> -> vector<8x32xf32>
    %c1_96 = arith.constant 1 : index
    %c0_97 = arith.constant 0 : index
    %c0_98 = arith.constant 0 : index
    %241 = vector.load %arg3[%c1_96, %c0_97, %c0_98] : memref<2x32x32xf32, #tpu.memory_space<vmem>>, vector<1x32x32xf32>
    %242 = vector.shape_cast %241 : vector<1x32x32xf32> to vector<32x32xf32>
    %cst_99 = arith.constant dense<0.000000e+00> : vector<8x32xf32>
    %243 = tpu.matmul %240, %242, %cst_99 {dimension_numbers = #tpu.dot_dimension_numbers<[1], [0], [0], [1], [0, 0, 1, 1], [], []>} : vector<8x32xf32>, vector<32x32xf32>, vector<8x32xf32> -> vector<8x32xf32>
    %244 = vector.extract_strided_slice %196 {offsets = [0, 0], sizes = [1, 32], strides = [1, 1]} : vector<5x32xf32> to vector<1x32xf32>
    %245 = vector.broadcast %244 : vector<1x32xf32> to vector<8x32xf32>
    %246 = arith.addf %243, %245 : vector<8x32xf32>
    %247 = tpu.transpose %194, [1, 0] : vector<8x32xf32> -> vector<32x8xf32>
    %c1_100 = arith.constant 1 : index
    %c0_101 = arith.constant 0 : index
    %c0_102 = arith.constant 0 : index
    %248 = vector.load %arg5[%c1_100, %c0_101, %c0_102] : memref<2x8x24xf32, #tpu.memory_space<vmem>>, vector<1x8x24xf32>
    %249 = vector.shape_cast %248 : vector<1x8x24xf32> to vector<8x24xf32>
    %cst_103 = arith.constant dense<0.000000e+00> : vector<32x24xf32>
    %250 = tpu.matmul %247, %249, %cst_103 {dimension_numbers = #tpu.dot_dimension_numbers<[1], [0], [0], [1], [0, 0, 1, 1], [], []>} : vector<32x8xf32>, vector<8x24xf32>, vector<32x24xf32> -> vector<32x24xf32>
    %c1_104 = arith.constant 1 : index
    %c0_105 = arith.constant 0 : index
    %c0_106 = arith.constant 0 : index
    %251 = vector.load %arg7[%c1_104, %c0_105, %c0_106] : memref<2x1x24xf32, #tpu.memory_space<vmem>>, vector<1x1x24xf32>
    %252 = vector.shape_cast %251 : vector<1x1x24xf32> to vector<1x24xf32>
    %253 = vector.broadcast %252 : vector<1x24xf32> to vector<32x24xf32>
    %254 = arith.addf %250, %253 : vector<32x24xf32>
    %255 = vector.extract_strided_slice %254 {offsets = [0, 0], sizes = [32, 4], strides = [1, 1]} : vector<32x24xf32> to vector<32x4xf32>
    %256 = vector.extract_strided_slice %254 {offsets = [0, 8], sizes = [32, 4], strides = [1, 1]} : vector<32x24xf32> to vector<32x4xf32>
    %257 = vector.extract_strided_slice %254 {offsets = [0, 16], sizes = [32, 4], strides = [1, 1]} : vector<32x24xf32> to vector<32x4xf32>
    %cst_107 = arith.constant 5.000000e-01 : f32
    %258 = vector.broadcast %cst_107 : f32 to vector<32x4xf32>
    %259 = arith.mulf %255, %258 : vector<32x4xf32>
    %260 = tpu.transpose %256, [1, 0] : vector<32x4xf32> -> vector<4x32xf32>
    %cst_108 = arith.constant dense<0.000000e+00> : vector<32x32xf32>
    %261 = tpu.matmul %259, %260, %cst_108 {dimension_numbers = #tpu.dot_dimension_numbers<[1], [0], [0], [1], [0, 0, 1, 1], [], []>} : vector<32x4xf32>, vector<4x32xf32>, vector<32x32xf32> -> vector<32x32xf32>
    %cst_109 = arith.constant dense<0xFF800000> : vector<32xf32>
    %262 = vector.multi_reduction <maximumf>, %261, %cst_109 [1] : vector<32x32xf32> to vector<32xf32>
    %263 = vector.shape_cast %262 : vector<32xf32> to vector<32x1xf32>
    %264 = vector.broadcast %263 : vector<32x1xf32> to vector<32x32xf32>
    %265 = arith.subf %261, %264 : vector<32x32xf32>
    %266 = math.exp %265 : vector<32x32xf32>
    %cst_110 = arith.constant dense<0.000000e+00> : vector<32xf32>
    %267 = vector.multi_reduction <add>, %266, %cst_110 [1] : vector<32x32xf32> to vector<32xf32>
    %268 = vector.shape_cast %267 : vector<32xf32> to vector<32x1xf32>
    %269 = tpu.reciprocal %268 {approx = true} : vector<32x1xf32> -> vector<32x1xf32>
    %270 = vector.broadcast %269 : vector<32x1xf32> to vector<32x32xf32>
    %271 = arith.mulf %266, %270 : vector<32x32xf32>
    %cst_111 = arith.constant dense<0.000000e+00> : vector<32x4xf32>
    %272 = tpu.matmul %271, %257, %cst_111 {dimension_numbers = #tpu.dot_dimension_numbers<[1], [0], [0], [1], [0, 0, 1, 1], [], []>} : vector<32x32xf32>, vector<32x4xf32>, vector<32x4xf32> -> vector<32x4xf32>
    %273 = vector.extract_strided_slice %254 {offsets = [0, 4], sizes = [32, 4], strides = [1, 1]} : vector<32x24xf32> to vector<32x4xf32>
    %274 = vector.extract_strided_slice %254 {offsets = [0, 12], sizes = [32, 4], strides = [1, 1]} : vector<32x24xf32> to vector<32x4xf32>
    %275 = vector.extract_strided_slice %254 {offsets = [0, 20], sizes = [32, 4], strides = [1, 1]} : vector<32x24xf32> to vector<32x4xf32>
    %cst_112 = arith.constant 5.000000e-01 : f32
    %276 = vector.broadcast %cst_112 : f32 to vector<32x4xf32>
    %277 = arith.mulf %273, %276 : vector<32x4xf32>
    %278 = tpu.transpose %274, [1, 0] : vector<32x4xf32> -> vector<4x32xf32>
    %cst_113 = arith.constant dense<0.000000e+00> : vector<32x32xf32>
    %279 = tpu.matmul %277, %278, %cst_113 {dimension_numbers = #tpu.dot_dimension_numbers<[1], [0], [0], [1], [0, 0, 1, 1], [], []>} : vector<32x4xf32>, vector<4x32xf32>, vector<32x32xf32> -> vector<32x32xf32>
    %cst_114 = arith.constant dense<0xFF800000> : vector<32xf32>
    %280 = vector.multi_reduction <maximumf>, %279, %cst_114 [1] : vector<32x32xf32> to vector<32xf32>
    %281 = vector.shape_cast %280 : vector<32xf32> to vector<32x1xf32>
    %282 = vector.broadcast %281 : vector<32x1xf32> to vector<32x32xf32>
    %283 = arith.subf %279, %282 : vector<32x32xf32>
    %284 = math.exp %283 : vector<32x32xf32>
    %cst_115 = arith.constant dense<0.000000e+00> : vector<32xf32>
    %285 = vector.multi_reduction <add>, %284, %cst_115 [1] : vector<32x32xf32> to vector<32xf32>
    %286 = vector.shape_cast %285 : vector<32xf32> to vector<32x1xf32>
    %287 = tpu.reciprocal %286 {approx = true} : vector<32x1xf32> -> vector<32x1xf32>
    %288 = vector.broadcast %287 : vector<32x1xf32> to vector<32x32xf32>
    %289 = arith.mulf %284, %288 : vector<32x32xf32>
    %cst_116 = arith.constant dense<0.000000e+00> : vector<32x4xf32>
    %290 = tpu.matmul %289, %275, %cst_116 {dimension_numbers = #tpu.dot_dimension_numbers<[1], [0], [0], [1], [0, 0, 1, 1], [], []>} : vector<32x32xf32>, vector<32x4xf32>, vector<32x4xf32> -> vector<32x4xf32>
    %291 = tpu.concatenate %272, %290 in 1 : vector<32x4xf32>, vector<32x4xf32> -> vector<32x8xf32>
    %c1_117 = arith.constant 1 : index
    %c0_118 = arith.constant 0 : index
    %c0_119 = arith.constant 0 : index
    %292 = vector.load %arg6[%c1_117, %c0_118, %c0_119] : memref<2x8x8xf32, #tpu.memory_space<vmem>>, vector<1x8x8xf32>
    %293 = vector.shape_cast %292 : vector<1x8x8xf32> to vector<8x8xf32>
    %cst_120 = arith.constant dense<0.000000e+00> : vector<32x8xf32>
    %294 = tpu.matmul %291, %293, %cst_120 {dimension_numbers = #tpu.dot_dimension_numbers<[1], [0], [0], [1], [0, 0, 1, 1], [], []>} : vector<32x8xf32>, vector<8x8xf32>, vector<32x8xf32> -> vector<32x8xf32>
    %295 = tpu.transpose %294, [1, 0] : vector<32x8xf32> -> vector<8x32xf32>
    %c1_121 = arith.constant 1 : index
    %c0_122 = arith.constant 0 : index
    %c0_123 = arith.constant 0 : index
    %296 = vector.load %arg8[%c1_121, %c0_122, %c0_123] : memref<2x8x1xf32, #tpu.memory_space<vmem>>, vector<1x8x1xf32>
    %297 = vector.shape_cast %296 : vector<1x8x1xf32> to vector<8x1xf32>
    %298 = vector.broadcast %297 : vector<8x1xf32> to vector<8x32xf32>
    %299 = arith.addf %295, %298 : vector<8x32xf32>
    %300 = arith.addf %194, %246 : vector<8x32xf32>
    %301 = arith.addf %300, %299 : vector<8x32xf32>
    %302 = vector.extract_strided_slice %196 {offsets = [1, 0], sizes = [1, 32], strides = [1, 1]} : vector<5x32xf32> to vector<1x32xf32>
    %303 = vector.extract_strided_slice %196 {offsets = [2, 0], sizes = [1, 32], strides = [1, 1]} : vector<5x32xf32> to vector<1x32xf32>
    %cst_124 = arith.constant dense<0.000000e+00> : vector<8xf32>
    %304 = vector.multi_reduction <add>, %301, %cst_124 [1] : vector<8x32xf32> to vector<8xf32>
    %305 = vector.shape_cast %304 : vector<8xf32> to vector<8x1xf32>
    %cst_125 = arith.constant 3.200000e+01 : f32
    %306 = vector.broadcast %cst_125 : f32 to vector<8x1xf32>
    %307 = arith.divf %305, %306 : vector<8x1xf32>
    %308 = vector.broadcast %307 : vector<8x1xf32> to vector<8x32xf32>
    %309 = arith.subf %301, %308 : vector<8x32xf32>
    %310 = arith.mulf %309, %309 : vector<8x32xf32>
    %cst_126 = arith.constant dense<0.000000e+00> : vector<8xf32>
    %311 = vector.multi_reduction <add>, %310, %cst_126 [1] : vector<8x32xf32> to vector<8xf32>
    %312 = vector.shape_cast %311 : vector<8xf32> to vector<8x1xf32>
    %cst_127 = arith.constant 3.200000e+01 : f32
    %313 = vector.broadcast %cst_127 : f32 to vector<8x1xf32>
    %314 = arith.divf %312, %313 : vector<8x1xf32>
    %315 = vector.broadcast %307 : vector<8x1xf32> to vector<8x32xf32>
    %316 = arith.subf %301, %315 : vector<8x32xf32>
    %cst_128 = arith.constant 9.99999974E-6 : f32
    %317 = vector.broadcast %cst_128 : f32 to vector<8x1xf32>
    %318 = arith.addf %314, %317 : vector<8x1xf32>
    %319 = math.rsqrt %318 : vector<8x1xf32>
    %320 = vector.broadcast %319 : vector<8x1xf32> to vector<8x32xf32>
    %321 = arith.mulf %316, %320 : vector<8x32xf32>
    %322 = vector.broadcast %302 : vector<1x32xf32> to vector<8x32xf32>
    %323 = arith.mulf %321, %322 : vector<8x32xf32>
    %324 = vector.broadcast %303 : vector<1x32xf32> to vector<8x32xf32>
    %325 = arith.addf %323, %324 : vector<8x32xf32>
    %c1_129 = arith.constant 1 : index
    %c0_130 = arith.constant 0 : index
    %326 = memref.load %arg12[%c1_129, %c0_130] : memref<2x4xf32, #tpu.memory_space<smem>>
    %c1_131 = arith.constant 1 : index
    %c1_132 = arith.constant 1 : index
    %327 = memref.load %arg12[%c1_131, %c1_132] : memref<2x4xf32, #tpu.memory_space<smem>>
    %c1_133 = arith.constant 1 : index
    %c2_134 = arith.constant 2 : index
    %328 = memref.load %arg12[%c1_133, %c2_134] : memref<2x4xf32, #tpu.memory_space<smem>>
    %c1_135 = arith.constant 1 : index
    %c3_136 = arith.constant 3 : index
    %329 = memref.load %arg12[%c1_135, %c3_136] : memref<2x4xf32, #tpu.memory_space<smem>>
    %330 = vector.broadcast %326 : f32 to vector<8x32xf32>
    %331 = arith.mulf %325, %330 : vector<8x32xf32>
    %332 = vector.broadcast %327 : f32 to vector<8x32xf32>
    %333 = arith.addf %331, %332 : vector<8x32xf32>
    %cst_137 = arith.constant 0.000000e+00 : f32
    %334 = vector.broadcast %cst_137 : f32 to vector<8x32xf32>
    %335 = arith.maximumf %333, %334 : vector<8x32xf32>
    %336 = tpu.concatenate %2, %335, %2 in 0 : vector<2x32xf32>, vector<8x32xf32>, vector<2x32xf32> -> vector<12x32xf32>
    %337 = vector.extract_strided_slice %336 {offsets = [1, 0], sizes = [8, 32], strides = [1, 1]} : vector<12x32xf32> to vector<8x32xf32>
    %338 = vector.extract_strided_slice %336 {offsets = [2, 0], sizes = [8, 32], strides = [1, 1]} : vector<12x32xf32> to vector<8x32xf32>
    %339 = vector.extract_strided_slice %336 {offsets = [3, 0], sizes = [8, 32], strides = [1, 1]} : vector<12x32xf32> to vector<8x32xf32>
    %340 = tpu.concatenate %337, %338, %339 in 1 : vector<8x32xf32>, vector<8x32xf32>, vector<8x32xf32> -> vector<8x96xf32>
    %c1_138 = arith.constant 1 : index
    %c0_139 = arith.constant 0 : index
    %c0_140 = arith.constant 0 : index
    %341 = vector.load %arg10[%c1_138, %c0_139, %c0_140] : memref<2x96x32xf32, #tpu.memory_space<vmem>>, vector<1x96x32xf32>
    %342 = vector.shape_cast %341 : vector<1x96x32xf32> to vector<96x32xf32>
    %cst_141 = arith.constant dense<0.000000e+00> : vector<8x32xf32>
    %343 = tpu.matmul %340, %342, %cst_141 {dimension_numbers = #tpu.dot_dimension_numbers<[1], [0], [0], [1], [0, 0, 1, 1], [], []>} : vector<8x96xf32>, vector<96x32xf32>, vector<8x32xf32> -> vector<8x32xf32>
    %344 = vector.broadcast %328 : f32 to vector<8x32xf32>
    %345 = arith.addf %343, %344 : vector<8x32xf32>
    %cst_142 = arith.constant 0.000000e+00 : f32
    %346 = vector.broadcast %cst_142 : f32 to vector<8x32xf32>
    %347 = arith.maximumf %345, %346 : vector<8x32xf32>
    %348 = tpu.concatenate %2, %347, %2 in 0 : vector<2x32xf32>, vector<8x32xf32>, vector<2x32xf32> -> vector<12x32xf32>
    %349 = vector.extract_strided_slice %348 {offsets = [0, 0], sizes = [8, 32], strides = [1, 1]} : vector<12x32xf32> to vector<8x32xf32>
    %350 = vector.extract_strided_slice %348 {offsets = [1, 0], sizes = [8, 32], strides = [1, 1]} : vector<12x32xf32> to vector<8x32xf32>
    %351 = vector.extract_strided_slice %348 {offsets = [2, 0], sizes = [8, 32], strides = [1, 1]} : vector<12x32xf32> to vector<8x32xf32>
    %352 = vector.extract_strided_slice %348 {offsets = [3, 0], sizes = [8, 32], strides = [1, 1]} : vector<12x32xf32> to vector<8x32xf32>
    %353 = vector.extract_strided_slice %348 {offsets = [4, 0], sizes = [8, 32], strides = [1, 1]} : vector<12x32xf32> to vector<8x32xf32>
    %354 = tpu.concatenate %349, %350, %351, %352, %353 in 1 : vector<8x32xf32>, vector<8x32xf32>, vector<8x32xf32>, vector<8x32xf32>, vector<8x32xf32> -> vector<8x160xf32>
    %c1_143 = arith.constant 1 : index
    %c0_144 = arith.constant 0 : index
    %c0_145 = arith.constant 0 : index
    %355 = vector.load %arg11[%c1_143, %c0_144, %c0_145] : memref<2x160x32xf32, #tpu.memory_space<vmem>>, vector<1x160x32xf32>
    %356 = vector.shape_cast %355 : vector<1x160x32xf32> to vector<160x32xf32>
    %cst_146 = arith.constant dense<0.000000e+00> : vector<8x32xf32>
    %357 = tpu.matmul %354, %356, %cst_146 {dimension_numbers = #tpu.dot_dimension_numbers<[1], [0], [0], [1], [0, 0, 1, 1], [], []>} : vector<8x160xf32>, vector<160x32xf32>, vector<8x32xf32> -> vector<8x32xf32>
    %358 = vector.broadcast %329 : f32 to vector<8x32xf32>
    %359 = arith.addf %357, %358 : vector<8x32xf32>
    %cst_147 = arith.constant 0.000000e+00 : f32
    %360 = vector.broadcast %cst_147 : f32 to vector<8x32xf32>
    %361 = arith.maximumf %359, %360 : vector<8x32xf32>
    %362 = arith.addf %325, %361 : vector<8x32xf32>
    %363 = vector.extract_strided_slice %196 {offsets = [3, 0], sizes = [1, 32], strides = [1, 1]} : vector<5x32xf32> to vector<1x32xf32>
    %364 = vector.extract_strided_slice %196 {offsets = [4, 0], sizes = [1, 32], strides = [1, 1]} : vector<5x32xf32> to vector<1x32xf32>
    %cst_148 = arith.constant dense<0.000000e+00> : vector<8xf32>
    %365 = vector.multi_reduction <add>, %362, %cst_148 [1] : vector<8x32xf32> to vector<8xf32>
    %366 = vector.shape_cast %365 : vector<8xf32> to vector<8x1xf32>
    %cst_149 = arith.constant 3.200000e+01 : f32
    %367 = vector.broadcast %cst_149 : f32 to vector<8x1xf32>
    %368 = arith.divf %366, %367 : vector<8x1xf32>
    %369 = vector.broadcast %368 : vector<8x1xf32> to vector<8x32xf32>
    %370 = arith.subf %362, %369 : vector<8x32xf32>
    %371 = arith.mulf %370, %370 : vector<8x32xf32>
    %cst_150 = arith.constant dense<0.000000e+00> : vector<8xf32>
    %372 = vector.multi_reduction <add>, %371, %cst_150 [1] : vector<8x32xf32> to vector<8xf32>
    %373 = vector.shape_cast %372 : vector<8xf32> to vector<8x1xf32>
    %cst_151 = arith.constant 3.200000e+01 : f32
    %374 = vector.broadcast %cst_151 : f32 to vector<8x1xf32>
    %375 = arith.divf %373, %374 : vector<8x1xf32>
    %376 = vector.broadcast %368 : vector<8x1xf32> to vector<8x32xf32>
    %377 = arith.subf %362, %376 : vector<8x32xf32>
    %cst_152 = arith.constant 9.99999974E-6 : f32
    %378 = vector.broadcast %cst_152 : f32 to vector<8x1xf32>
    %379 = arith.addf %375, %378 : vector<8x1xf32>
    %380 = math.rsqrt %379 : vector<8x1xf32>
    %381 = vector.broadcast %380 : vector<8x1xf32> to vector<8x32xf32>
    %382 = arith.mulf %377, %381 : vector<8x32xf32>
    %383 = vector.broadcast %363 : vector<1x32xf32> to vector<8x32xf32>
    %384 = arith.mulf %382, %383 : vector<8x32xf32>
    %385 = vector.broadcast %364 : vector<1x32xf32> to vector<8x32xf32>
    %386 = arith.addf %384, %385 : vector<8x32xf32>
    %c0_153 = arith.constant 0 : index
    %c0_154 = arith.constant 0 : index
    %c0_155 = arith.constant 0 : index
    %387 = vector.load %arg13[%c0_153, %c0_154, %c0_155] : memref<1x8x32xf32, #tpu.memory_space<vmem>>, vector<1x8x32xf32>
    %388 = vector.shape_cast %387 : vector<1x8x32xf32> to vector<8x32xf32>
    %389 = vector.shape_cast %386 : vector<8x32xf32> to vector<1x8x32xf32>
    tpu.vector_store %arg13[%c0_153, %c0_154, %c0_155], %389 {strides = array<i32>} : memref<1x8x32xf32, #tpu.memory_space<vmem>>, vector<1x8x32xf32>,
    return
  }
  func.func @transform_0(%arg0: i32) -> (i32, i32, i32) {
    %c0_i32 = arith.constant 0 : i32
    %c0_i32_0 = arith.constant 0 : i32
    %c0_i32_1 = arith.constant 0 : i32
    return %arg0, %c0_i32, %c0_i32_0 : i32, i32, i32
  }
  func.func @transform_1(%arg0: i32) -> (i32, i32, i32) {
    %c0_i32 = arith.constant 0 : i32
    %c0_i32_0 = arith.constant 0 : i32
    %c0_i32_1 = arith.constant 0 : i32
    %c0_i32_2 = arith.constant 0 : i32
    return %c0_i32, %c0_i32_0, %c0_i32_1 : i32, i32, i32
  }
  func.func @transform_2(%arg0: i32) -> (i32, i32, i32) {
    %c0_i32 = arith.constant 0 : i32
    %c0_i32_0 = arith.constant 0 : i32
    %c0_i32_1 = arith.constant 0 : i32
    %c0_i32_2 = arith.constant 0 : i32
    return %c0_i32, %c0_i32_0, %c0_i32_1 : i32, i32, i32
  }
  func.func @transform_3(%arg0: i32) -> (i32, i32, i32) {
    %c0_i32 = arith.constant 0 : i32
    %c0_i32_0 = arith.constant 0 : i32
    %c0_i32_1 = arith.constant 0 : i32
    %c0_i32_2 = arith.constant 0 : i32
    return %c0_i32, %c0_i32_0, %c0_i32_1 : i32, i32, i32
  }
  func.func @transform_4(%arg0: i32) -> (i32, i32, i32) {
    %c0_i32 = arith.constant 0 : i32
    %c0_i32_0 = arith.constant 0 : i32
    %c0_i32_1 = arith.constant 0 : i32
    %c0_i32_2 = arith.constant 0 : i32
    return %c0_i32, %c0_i32_0, %c0_i32_1 : i32, i32, i32
  }
  func.func @transform_5(%arg0: i32) -> (i32, i32, i32) {
    %c0_i32 = arith.constant 0 : i32
    %c0_i32_0 = arith.constant 0 : i32
    %c0_i32_1 = arith.constant 0 : i32
    %c0_i32_2 = arith.constant 0 : i32
    return %c0_i32, %c0_i32_0, %c0_i32_1 : i32, i32, i32
  }
  func.func @transform_6(%arg0: i32) -> (i32, i32, i32) {
    %c0_i32 = arith.constant 0 : i32
    %c0_i32_0 = arith.constant 0 : i32
    %c0_i32_1 = arith.constant 0 : i32
    %c0_i32_2 = arith.constant 0 : i32
    return %c0_i32, %c0_i32_0, %c0_i32_1 : i32, i32, i32
  }
  func.func @transform_7(%arg0: i32) -> (i32, i32, i32) {
    %c0_i32 = arith.constant 0 : i32
    %c0_i32_0 = arith.constant 0 : i32
    %c0_i32_1 = arith.constant 0 : i32
    %c0_i32_2 = arith.constant 0 : i32
    return %c0_i32, %c0_i32_0, %c0_i32_1 : i32, i32, i32
  }
  func.func @transform_8(%arg0: i32) -> (i32, i32, i32) {
    %c0_i32 = arith.constant 0 : i32
    %c0_i32_0 = arith.constant 0 : i32
    %c0_i32_1 = arith.constant 0 : i32
    %c0_i32_2 = arith.constant 0 : i32
    return %c0_i32, %c0_i32_0, %c0_i32_1 : i32, i32, i32
  }
  func.func @transform_9(%arg0: i32) -> (i32, i32, i32) {
    %c0_i32 = arith.constant 0 : i32
    %c0_i32_0 = arith.constant 0 : i32
    %c0_i32_1 = arith.constant 0 : i32
    %c0_i32_2 = arith.constant 0 : i32
    return %c0_i32, %c0_i32_0, %c0_i32_1 : i32, i32, i32
  }
  func.func @transform_10(%arg0: i32) -> (i32, i32, i32) {
    %c0_i32 = arith.constant 0 : i32
    %c0_i32_0 = arith.constant 0 : i32
    %c0_i32_1 = arith.constant 0 : i32
    %c0_i32_2 = arith.constant 0 : i32
    return %c0_i32, %c0_i32_0, %c0_i32_1 : i32, i32, i32
  }
  func.func @transform_11(%arg0: i32) -> (i32, i32) {
    %c0_i32 = arith.constant 0 : i32
    %c0_i32_0 = arith.constant 0 : i32
    %c0_i32_1 = arith.constant 0 : i32
    return %c0_i32, %c0_i32_0 : i32, i32
  }
  func.func @transform_12(%arg0: i32) -> (i32, i32, i32) {
    %c0_i32 = arith.constant 0 : i32
    %c0_i32_0 = arith.constant 0 : i32
    %c0_i32_1 = arith.constant 0 : i32
    return %arg0, %c0_i32, %c0_i32_0 : i32, i32, i32
  }
}

</mosaic_0001>

<llo_original>
// kernel: encoder_forward.1
$region0: #{encoder_forward.1}
  #allocation0 [shape = 'u32[]', space=smem, size = 0x4, offset = 0x4, fixed_abs, tag = 'smem constant byte address 0x4 - core index']
  #allocation1 [shape = 'u32[144,128]{1,0:T(1,128)}', space=vmem, size = 0x12000, scoped, tag = 'internal scratch']
  %s0 = inlined_call_operand.vmem [shape: f32[2,8,32], index: 0, kind: input, shape index: {}]
  %s1 = inlined_call_operand.vmem [shape: f32[2,32,96], index: 1, kind: input, shape index: {}]
  %s2 = inlined_call_operand.vmem [shape: f32[2,32,32], index: 2, kind: input, shape index: {}]
  %s3 = inlined_call_operand.vmem [shape: f32[2,1,96], index: 3, kind: input, shape index: {}]
  %s4 = inlined_call_operand.vmem [shape: f32[2,8,24], index: 4, kind: input, shape index: {}]
  %s5 = inlined_call_operand.vmem [shape: f32[2,8,8], index: 5, kind: input, shape index: {}]
  %s6 = inlined_call_operand.vmem [shape: f32[2,1,24], index: 6, kind: input, shape index: {}]
  %s7 = inlined_call_operand.vmem [shape: f32[2,8,1], index: 7, kind: input, shape index: {}]
  %s8 = inlined_call_operand.vmem [shape: f32[2,5,32], index: 8, kind: input, shape index: {}]
  %s9 = inlined_call_operand.vmem [shape: f32[2,96,32], index: 9, kind: input, shape index: {}]
  %s10 = inlined_call_operand.vmem [shape: f32[2,160,32], index: 10, kind: input, shape index: {}]
  %s11 = inlined_call_operand.vmem [shape: f32[2,4], index: 11, kind: input, shape index: {}]
  %s12 = inlined_call_operand.hbm [shape: f32[2,8,32], index: 12, kind: output, shape index: {}]
  %s13 = sld [smem:[#allocation0]]
  $region85: #{encoder_forward.1} parent=0
    _
  %s15 = ssub.s32 1, %s13
  %s16 = scalar_select 0, %s15, %s13
  $region1: #{encoder_forward.1} parent=0
    #allocation2 [shape = 'u8[1024]{0}', space=smem, size = 0x400, scoped, tag = 'input window, operand 11, single buffered']
    #allocation3 [shape = 's32[2]{0}', space=sflag, size = 0x8, scoped, tag = 'scoped memory for encoder_forward.1']
    #allocation4 [shape = 's32[2]{0}', space=sflag, size = 0x8, scoped, tag = 'scoped memory for encoder_forward.1']
    #allocation5 [shape = 'u8[8192]{0}', space=vmem, size = 0x2000, scoped, tag = 'output window, operand 0']
    %17 = vsyncpa [#allocation4], 0
    %18 = vsyncpa [#allocation3], 0
    %s19 = scalar_lea.sflag [#allocation3], 1
    %20 = vsyncpa %s19, 0
    loop: start=0, step=1, limit=4
    $region2: #{encoder_forward.1} parent=1 // loop_pre_header
      _
    $region3: #{encoder_forward.1} parent=1 // loop_header
      %s22 = sphi 0, %s26
      %p23 = scmp.ge.s32.totalorder %s22, 4
      %s32 = sphi 0, %s34
      %s35 = sphi 0, %s32
      %s36 = sphi 0, %s35
      %s52 = sphi 0, %s36
      %s56 = sphi 0, %s56
      %s58 = sphi 0, %s56
      %s59 = sphi 0, %s58
      %s73 = sphi 0, %s59
      %s77 = sphi 0, %s77
      %s79 = sphi 0, %s77
      %s80 = sphi 0, %s79
      %s94 = sphi 0, %s80
      %s98 = sphi 0, %s98
      %s100 = sphi 0, %s98
      %s101 = sphi 0, %s100
      %s115 = sphi 0, %s101
      %s119 = sphi 0, %s119
      %s121 = sphi 0, %s119
      %s122 = sphi 0, %s121
      %s136 = sphi 0, %s122
      %s140 = sphi 0, %s140
      %s142 = sphi 0, %s140
      %s143 = sphi 0, %s142
      %s157 = sphi 0, %s143
      %s161 = sphi 0, %s161
      %s163 = sphi 0, %s161
      %s164 = sphi 0, %s163
      %s178 = sphi 0, %s164
      %s182 = sphi 0, %s182
      %s184 = sphi 0, %s182
      %s185 = sphi 0, %s184
      %s199 = sphi 0, %s185
      %s203 = sphi 0, %s203
      %s205 = sphi 0, %s203
      %s206 = sphi 0, %s205
      %s220 = sphi 0, %s206
      %s224 = sphi 0, %s224
      %s226 = sphi 0, %s224
      %s227 = sphi 0, %s226
      %s241 = sphi 0, %s227
      %s245 = sphi 0, %s245
      %s247 = sphi 0, %s245
      %s248 = sphi 0, %s247
      %s262 = sphi 0, %s248
      %s266 = sphi 0, %s266
      %s268 = sphi 0, %s266
      %s269 = sphi 0, %s268
      %s283 = sphi 0, %s269
      %s289 = sphi 0, %s291
      %s292 = sphi 0, %s289
      %s293 = sphi 0, %s292
      %s309 = sphi 0, %s293
    $region4: #{encoder_forward.1} parent=1 // loop_header_branch
      %25 = sbr.rel (%p23) target = $region8
    $region5: #{encoder_forward.1} parent=1 // loop_body
      %s27 = ssub.s32 %s22, 1
      %s28 = ssub.s32 %s22, 2
      %s29 = sadd.s32 %s22, 1
      %s30 = ssub.s32 %s22, %s29
      %p31 = scmp.eq.s32.totalorder %s30, 0
      %s33 = sadd.s32 %s32, 1
      %s34 = scalar_select %p31, %s32, %s33
      %p37 = pneg %p31
      %p38 = scmp.eq.s32.totalorder %s22, 1
      %p39 = por %p37, %p38
      %p40 = scmp.ne.s32.totalorder %s32, %s35
      %p41 = scmp.eq.s32.totalorder %s22, 0
      %p42 = por %p40, %p41
      %p43 = scmp.ne.s32.totalorder %s32, %s35
      %p44 = scmp.eq.s32.totalorder %s27, 1
      %p45 = por %p43, %p44
      %p46 = scmp.ne.s32.totalorder %s35, %s36
      %p47 = scmp.eq.s32.totalorder %s27, 0
      %p48 = por %p46, %p47
      %p49 = scmp.ne.s32.totalorder %s35, %s36
      %p50 = scmp.eq.s32.totalorder %s28, 1
      %p51 = por %p49, %p50
      %p53 = scmp.ne.s32.totalorder %s36, %s52
      %p54 = scmp.eq.s32.totalorder %s28, 0
      %p55 = por %p53, %p54
      %s57 = sadd.s32 %s56, 1
      %p60 = scmp.eq.s32.totalorder %s22, 1
      %p61 = scmp.ne.s32.totalorder %s56, %s58
      %p62 = scmp.eq.s32.totalorder %s22, 0
      %p63 = por %p61, %p62
      %p64 = scmp.ne.s32.totalorder %s56, %s58
      %p65 = scmp.eq.s32.totalorder %s27, 1
      %p66 = por %p64, %p65
      %p67 = scmp.ne.s32.totalorder %s58, %s59
      %p68 = scmp.eq.s32.totalorder %s27, 0
      %p69 = por %p67, %p68
      %p70 = scmp.ne.s32.totalorder %s58, %s59
      %p71 = scmp.eq.s32.totalorder %s28, 1
      %p72 = por %p70, %p71
      %p74 = scmp.ne.s32.totalorder %s59, %s73
      %p75 = scmp.eq.s32.totalorder %s28, 0
      %p76 = por %p74, %p75
      %s78 = sadd.s32 %s77, 1
      %p81 = scmp.eq.s32.totalorder %s22, 1
      %p82 = scmp.ne.s32.totalorder %s77, %s79
      %p83 = scmp.eq.s32.totalorder %s22, 0
      %p84 = por %p82, %p83
      %p85 = scmp.ne.s32.totalorder %s77, %s79
      %p86 = scmp.eq.s32.totalorder %s27, 1
      %p87 = por %p85, %p86
      %p88 = scmp.ne.s32.totalorder %s79, %s80
      %p89 = scmp.eq.s32.totalorder %s27, 0
      %p90 = por %p88, %p89
      %p91 = scmp.ne.s32.totalorder %s79, %s80
      %p92 = scmp.eq.s32.totalorder %s28, 1
      %p93 = por %p91, %p92
      %p95 = scmp.ne.s32.totalorder %s80, %s94
      %p96 = scmp.eq.s32.totalorder %s28, 0
      %p97 = por %p95, %p96
      %s99 = sadd.s32 %s98, 1
      %p102 = scmp.eq.s32.totalorder %s22, 1
      %p103 = scmp.ne.s32.totalorder %s98, %s100
      %p104 = scmp.eq.s32.totalorder %s22, 0
      %p105 = por %p103, %p104
      %p106 = scmp.ne.s32.totalorder %s98, %s100
      %p107 = scmp.eq.s32.totalorder %s27, 1
      %p108 = por %p106, %p107
      %p109 = scmp.ne.s32.totalorder %s100, %s101
      %p110 = scmp.eq.s32.totalorder %s27, 0
      %p111 = por %p109, %p110
      %p112 = scmp.ne.s32.totalorder %s100, %s101
      %p113 = scmp.eq.s32.totalorder %s28, 1
      %p114 = por %p112, %p113
      %p116 = scmp.ne.s32.totalorder %s101, %s115
      %p117 = scmp.eq.s32.totalorder %s28, 0
      %p118 = por %p116, %p117
      %s120 = sadd.s32 %s119, 1
      %p123 = scmp.eq.s32.totalorder %s22, 1
      %p124 = scmp.ne.s32.totalorder %s119, %s121
      %p125 = scmp.eq.s32.totalorder %s22, 0
      %p126 = por %p124, %p125
      %p127 = scmp.ne.s32.totalorder %s119, %s121
      %p128 = scmp.eq.s32.totalorder %s27, 1
      %p129 = por %p127, %p128
      %p130 = scmp.ne.s32.totalorder %s121, %s122
      %p131 = scmp.eq.s32.totalorder %s27, 0
      %p132 = por %p130, %p131
      %p133 = scmp.ne.s32.totalorder %s121, %s122
      %p134 = scmp.eq.s32.totalorder %s28, 1
      %p135 = por %p133, %p134
      %p137 = scmp.ne.s32.totalorder %s122, %s136
      %p138 = scmp.eq.s32.totalorder %s28, 0
      %p139 = por %p137, %p138
      %s141 = sadd.s32 %s140, 1
      %p144 = scmp.eq.s32.totalorder %s22, 1
      %p145 = scmp.ne.s32.totalorder %s140, %s142
      %p146 = scmp.eq.s32.totalorder %s22, 0
      %p147 = por %p145, %p146
      %p148 = scmp.ne.s32.totalorder %s140, %s142
      %p149 = scmp.eq.s32.totalorder %s27, 1
      %p150 = por %p148, %p149
      %p151 = scmp.ne.s32.totalorder %s142, %s143
      %p152 = scmp.eq.s32.totalorder %s27, 0
      %p153 = por %p151, %p152
      %p154 = scmp.ne.s32.totalorder %s142, %s143
      %p155 = scmp.eq.s32.totalorder %s28, 1
      %p156 = por %p154, %p155
      %p158 = scmp.ne.s32.totalorder %s143, %s157
      %p159 = scmp.eq.s32.totalorder %s28, 0
      %p160 = por %p158, %p159
      %s162 = sadd.s32 %s161, 1
      %p165 = scmp.eq.s32.totalorder %s22, 1
      %p166 = scmp.ne.s32.totalorder %s161, %s163
      %p167 = scmp.eq.s32.totalorder %s22, 0
      %p168 = por %p166, %p167
      %p169 = scmp.ne.s32.totalorder %s161, %s163
      %p170 = scmp.eq.s32.totalorder %s27, 1
      %p171 = por %p169, %p170
      %p172 = scmp.ne.s32.totalorder %s163, %s164
      %p173 = scmp.eq.s32.totalorder %s27, 0
      %p174 = por %p172, %p173
      %p175 = scmp.ne.s32.totalorder %s163, %s164
      %p176 = scmp.eq.s32.totalorder %s28, 1
      %p177 = por %p175, %p176
      %p179 = scmp.ne.s32.totalorder %s164, %s178
      %p180 = scmp.eq.s32.totalorder %s28, 0
      %p181 = por %p179, %p180
      %s183 = sadd.s32 %s182, 1
      %p186 = scmp.eq.s32.totalorder %s22, 1
      %p187 = scmp.ne.s32.totalorder %s182, %s184
      %p188 = scmp.eq.s32.totalorder %s22, 0
      %p189 = por %p187, %p188
      %p190 = scmp.ne.s32.totalorder %s182, %s184
      %p191 = scmp.eq.s32.totalorder %s27, 1
      %p192 = por %p190, %p191
      %p193 = scmp.ne.s32.totalorder %s184, %s185
      %p194 = scmp.eq.s32.totalorder %s27, 0
      %p195 = por %p193, %p194
      %p196 = scmp.ne.s32.totalorder %s184, %s185
      %p197 = scmp.eq.s32.totalorder %s28, 1
      %p198 = por %p196, %p197
      %p200 = scmp.ne.s32.totalorder %s185, %s199
      %p201 = scmp.eq.s32.totalorder %s28, 0
      %p202 = por %p200, %p201
      %s204 = sadd.s32 %s203, 1
      %p207 = scmp.eq.s32.totalorder %s22, 1
      %p208 = scmp.ne.s32.totalorder %s203, %s205
      %p209 = scmp.eq.s32.totalorder %s22, 0
      %p210 = por %p208, %p209
      %p211 = scmp.ne.s32.totalorder %s203, %s205
      %p212 = scmp.eq.s32.totalorder %s27, 1
      %p213 = por %p211, %p212
      %p214 = scmp.ne.s32.totalorder %s205, %s206
      %p215 = scmp.eq.s32.totalorder %s27, 0
      %p216 = por %p214, %p215
      %p217 = scmp.ne.s32.totalorder %s205, %s206
      %p218 = scmp.eq.s32.totalorder %s28, 1
      %p219 = por %p217, %p218
      %p221 = scmp.ne.s32.totalorder %s206, %s220
      %p222 = scmp.eq.s32.totalorder %s28, 0
      %p223 = por %p221, %p222
      %s225 = sadd.s32 %s224, 1
      %p228 = scmp.eq.s32.totalorder %s22, 1
      %p229 = scmp.ne.s32.totalorder %s224, %s226
      %p230 = scmp.eq.s32.totalorder %s22, 0
      %p231 = por %p229, %p230
      %p232 = scmp.ne.s32.totalorder %s224, %s226
      %p233 = scmp.eq.s32.totalorder %s27, 1
      %p234 = por %p232, %p233
      %p235 = scmp.ne.s32.totalorder %s226, %s227
      %p236 = scmp.eq.s32.totalorder %s27, 0
      %p237 = por %p235, %p236
      %p238 = scmp.ne.s32.totalorder %s226, %s227
      %p239 = scmp.eq.s32.totalorder %s28, 1
      %p240 = por %p238, %p239
      %p242 = scmp.ne.s32.totalorder %s227, %s241
      %p243 = scmp.eq.s32.totalorder %s28, 0
      %p244 = por %p242, %p243
      %s246 = sadd.s32 %s245, 1
      %p249 = scmp.eq.s32.totalorder %s22, 1
      %p250 = scmp.ne.s32.totalorder %s245, %s247
      %p251 = scmp.eq.s32.totalorder %s22, 0
      %p252 = por %p250, %p251
      %p253 = scmp.ne.s32.totalorder %s245, %s247
      %p254 = scmp.eq.s32.totalorder %s27, 1
      %p255 = por %p253, %p254
      %p256 = scmp.ne.s32.totalorder %s247, %s248
      %p257 = scmp.eq.s32.totalorder %s27, 0
      %p258 = por %p256, %p257
      %p259 = scmp.ne.s32.totalorder %s247, %s248
      %p260 = scmp.eq.s32.totalorder %s28, 1
      %p261 = por %p259, %p260
      %p263 = scmp.ne.s32.totalorder %s248, %s262
      %p264 = scmp.eq.s32.totalorder %s28, 0
      %p265 = por %p263, %p264
      %s267 = sadd.s32 %s266, 1
      %p270 = scmp.eq.s32.totalorder %s22, 1
      %p271 = scmp.ne.s32.totalorder %s266, %s268
      %p272 = scmp.eq.s32.totalorder %s22, 0
      %p273 = por %p271, %p272
      %p274 = scmp.ne.s32.totalorder %s266, %s268
      %p275 = scmp.eq.s32.totalorder %s27, 1
      %p276 = por %p274, %p275
      %p277 = scmp.ne.s32.totalorder %s268, %s269
      %p278 = scmp.eq.s32.totalorder %s27, 0
      %p279 = por %p277, %p278
      %p280 = scmp.ne.s32.totalorder %s268, %s269
      %p281 = scmp.eq.s32.totalorder %s28, 1
      %p282 = por %p280, %p281
      %p284 = scmp.ne.s32.totalorder %s269, %s283
      %p285 = scmp.eq.s32.totalorder %s28, 0
      %p286 = por %p284, %p285
      %s287 = ssub.s32 %s22, %s29
      %p288 = scmp.eq.s32.totalorder %s287, 0
      %s290 = sadd.s32 %s289, 1
      %s291 = scalar_select %p288, %s289, %s290
      %p294 = pneg %p288
      %p295 = scmp.eq.s32.totalorder %s22, 1
      %p296 = por %p294, %p295
      %p297 = scmp.ne.s32.totalorder %s289, %s292
      %p298 = scmp.eq.s32.totalorder %s22, 0
      %p299 = por %p297, %p298
      %p300 = scmp.ne.s32.totalorder %s289, %s292
      %p301 = scmp.eq.s32.totalorder %s27, 1
      %p302 = por %p300, %p301
      %p303 = scmp.ne.s32.totalorder %s292, %s293
      %p304 = scmp.eq.s32.totalorder %s27, 0
      %p305 = por %p303, %p304
      %p306 = scmp.ne.s32.totalorder %s292, %s293
      %p307 = scmp.eq.s32.totalorder %s28, 1
      %p308 = por %p306, %p307
      %p310 = scmp.ne.s32.totalorder %s293, %s309
      %p311 = scmp.eq.s32.totalorder %s28, 0
      %p312 = por %p310, %p311
      %p313 = scmp.le.s32.totalorder 1, %s22
      %p314 = scmp.lt.s32.totalorder %s22, 3
      %p315 = pnand %p313, %p314
      %p316 = pneg %p315
      // Predicated region
      $region9: #{encoder_forward.1} parent=5 // pred_check
        _
      $region10: #{encoder_forward.1} parent=5 // pred_check_branch
        %318 = sbr.rel (%p315) target = $region12
      $region11: #{encoder_forward.1} parent=5 // pred_region
        %s319 = ssub.s32 %s22, 1
        // Predicated region
        $region13: #{encoder_forward.1} parent=11 // pred_check
          %p320 = pneg %p69
        $region14: #{encoder_forward.1} parent=11 // pred_check_branch
          %322 = sbr.rel (%p320) target = $region16
        $region15: #{encoder_forward.1} parent=11 // pred_region
          _
        $region16: #{encoder_forward.1} parent=11 // pred_fallthru
          _
        // Predicated region
        $region17: #{encoder_forward.1} parent=11 // pred_check
          %p323 = pneg %p90
        $region18: #{encoder_forward.1} parent=11 // pred_check_branch
          %325 = sbr.rel (%p323) target = $region20
        $region19: #{encoder_forward.1} parent=11 // pred_region
          _
        $region20: #{encoder_forward.1} parent=11 // pred_fallthru
          _
        // Predicated region
        $region21: #{encoder_forward.1} parent=11 // pred_check
          %p326 = pneg %p111
        $region22: #{encoder_forward.1} parent=11 // pred_check_branch
          %328 = sbr.rel (%p326) target = $region24
        $region23: #{encoder_forward.1} parent=11 // pred_region
          _
        $region24: #{encoder_forward.1} parent=11 // pred_fallthru
          _
        // Predicated region
        $region25: #{encoder_forward.1} parent=11 // pred_check
          %p329 = pneg %p132
        $region26: #{encoder_forward.1} parent=11 // pred_check_branch
          %331 = sbr.rel (%p329) target = $region28
        $region27: #{encoder_forward.1} parent=11 // pred_region
          _
        $region28: #{encoder_forward.1} parent=11 // pred_fallthru
          _
        // Predicated region
        $region29: #{encoder_forward.1} parent=11 // pred_check
          %p332 = pneg %p153
        $region30: #{encoder_forward.1} parent=11 // pred_check_branch
          %334 = sbr.rel (%p332) target = $region32
        $region31: #{encoder_forward.1} parent=11 // pred_region
          _
        $region32: #{encoder_forward.1} parent=11 // pred_fallthru
          _
        // Predicated region
        $region33: #{encoder_forward.1} parent=11 // pred_check
          %p335 = pneg %p174
        $region34: #{encoder_forward.1} parent=11 // pred_check_branch
          %337 = sbr.rel (%p335) target = $region36
        $region35: #{encoder_forward.1} parent=11 // pred_region
          _
        $region36: #{encoder_forward.1} parent=11 // pred_fallthru
          _
        // Predicated region
        $region37: #{encoder_forward.1} parent=11 // pred_check
          %p338 = pneg %p195
        $region38: #{encoder_forward.1} parent=11 // pred_check_branch
          %340 = sbr.rel (%p338) target = $region40
        $region39: #{encoder_forward.1} parent=11 // pred_region
          _
        $region40: #{encoder_forward.1} parent=11 // pred_fallthru
          _
        // Predicated region
        $region41: #{encoder_forward.1} parent=11 // pred_check
          %p341 = pneg %p216
        $region42: #{encoder_forward.1} parent=11 // pred_check_branch
          %343 = sbr.rel (%p341) target = $region44
        $region43: #{encoder_forward.1} parent=11 // pred_region
          _
        $region44: #{encoder_forward.1} parent=11 // pred_fallthru
          _
        // Predicated region
        $region45: #{encoder_forward.1} parent=11 // pred_check
          %p344 = pneg %p237
        $region46: #{encoder_forward.1} parent=11 // pred_check_branch
          %346 = sbr.rel (%p344) target = $region48
        $region47: #{encoder_forward.1} parent=11 // pred_region
          _
        $region48: #{encoder_forward.1} parent=11 // pred_fallthru
          _
        // Predicated region
        $region49: #{encoder_forward.1} parent=11 // pred_check
          %p347 = pneg %p258
        $region50: #{encoder_forward.1} parent=11 // pred_check_branch
          %349 = sbr.rel (%p347) target = $region52
        $region51: #{encoder_forward.1} parent=11 // pred_region
          _
        $region52: #{encoder_forward.1} parent=11 // pred_fallthru
          _
        // Predicated region
        $region53: #{encoder_forward.1} parent=11 // pred_check
          %p350 = pneg %p279
        $region54: #{encoder_forward.1} parent=11 // pred_check_branch
          %352 = sbr.rel (%p350) target = $region56
        $region55: #{encoder_forward.1} parent=11 // pred_region
          %s354 = ssub.s32 32, 32
          %355 = vsyncadd [#allocation4], %s354
          %s357 = sshll.u32 %s11, 4
          %s358 = int_to_ptr.vmem [resolvable:$true] %s357
          %360 = dma.vmem_to_smem %s358, 32, [#allocation2], [#allocation4]
        $region56: #{encoder_forward.1} parent=11 // pred_fallthru
          _
      $region12: #{encoder_forward.1} parent=5 // pred_fallthru
        _
      %p361 = scmp.lt.s32.totalorder %s22, 2
      // Predicated region
      $region57: #{encoder_forward.1} parent=5 // pred_check
        %p362 = pneg %p361
      $region58: #{encoder_forward.1} parent=5 // pred_check_branch
        %364 = sbr.rel (%p362) target = $region60
      $region59: #{encoder_forward.1} parent=5 // pred_region
        // Predicated region
        $region61: #{encoder_forward.1} parent=59 // pred_check
          %p365 = pneg %p42
        $region62: #{encoder_forward.1} parent=59 // pred_check_branch
          %367 = sbr.rel (%p365) target = $region64
        $region63: #{encoder_forward.1} parent=59 // pred_region
          %p368 = scmp.lt.s32.totalorder %s22, 1
          %s369 = scalar_select %p368, %s22, 1
          %s370 = smul.addr %s369, 8
          %s371 = scalar_lea.vmem %s0, %s370
        $region64: #{encoder_forward.1} parent=59 // pred_fallthru
          _
      $region60: #{encoder_forward.1} parent=5 // pred_fallthru
        _
      %p372 = scmp.le.s32.totalorder 1, %s22
      %p373 = scmp.lt.s32.totalorder %s22, 3
      %p374 = pnand %p372, %p373
      %p375 = pneg %p374
      // Predicated region
      $region65: #{encoder_forward.1} parent=5 // pred_check
        _
      $region66: #{encoder_forward.1} parent=5 // pred_check_branch
        %377 = sbr.rel (%p374) target = $region68
      $region67: #{encoder_forward.1} parent=5 // pred_region
        %s378 = ssub.s32 %s22, 1
        // Predicated region
        $region69: #{encoder_forward.1} parent=67 // pred_check
          %p379 = pneg %p279
        $region70: #{encoder_forward.1} parent=67 // pred_check_branch
          %381 = sbr.rel (%p379) target = $region72
        $region71: #{encoder_forward.1} parent=67 // pred_region
          %382 = dma.done [#allocation4], 32
        $region72: #{encoder_forward.1} parent=67 // pred_fallthru
          _
        %383 = sfence
        %p384 = scmp.lt.s32.totalorder %s27, 1
        %s385 = scalar_select %p384, %s27, 1
        %s386 = smul.addr %s385, 8
        %s387 = scalar_lea.vmem %s0, %s386
        %p388 = pneg %p48
        %p389 = pneg %p45
        %p390 = pneg %p69
        %p391 = pneg %p66
        %p392 = pneg %p90
        %p393 = pneg %p87
        %p394 = pneg %p111
        %p395 = pneg %p108
        %p396 = pneg %p132
        %p397 = pneg %p129
        %p398 = pneg %p153
        %p399 = pneg %p150
        %p400 = pneg %p174
        %p401 = pneg %p171
        %p402 = pneg %p195
        %p403 = pneg %p192
        %p404 = pneg %p216
        %p405 = pneg %p213
        %p406 = pneg %p237
        %p407 = pneg %p234
        %p408 = pneg %p258
        %p409 = pneg %p255
        %p410 = pneg %p279
        %p411 = pneg %p276
        %p412 = pneg %p305
        %p413 = pneg %p302
        %s414 = sand.u32 %s292, 1
        %s415 = scalar_lea.sflag [#allocation3], %s414
        %s416 = sand.u32 %s292, 1
        %s417 = smul.addr %s416, 8
        %s418 = scalar_lea.vmem [#allocation5], %s417
        %p419 = scmp.lt.s32.totalorder %s27, 1
        %s420 = scalar_select %p419, %s27, 1
        %s421 = smul.addr %s420, 8
        %s422 = scalar_lea.vmem %s0, %s421
        %v423 = vld [vmem:[%s422] sm:$0xff]
        %v424 = vld [vmem:[%s8] sm:$0x1f]
        %v425 = vld [vmem:[%s1] sm:$0xff]
        %v426 = vld [vmem:[%s1 + $0x8] sm:$0xff]
        %v427 = vld [vmem:[%s1 + $0x10] sm:$0xff]
        %v428 = vld [vmem:[%s1 + $0x18] sm:$0xff]
        %v429 = vld [vmem:[%s3] sm:$0x1]
        %v431 = vlaneseq
        %v432 = vshrl.u32 %v431, 7
        %v433 = vsub.s32 0, %v432
        %v434 = vrot.slane %v429, %v433
        %vm436 = vcmask 261120
        %v438 = vsel %vm436, %v423, 0
        %440 = vmatprep.subr.mxu0 0.0
        %441 = vmatpush1.msra.mxu0 %v425
        %442 = vmatprep.subr.mxu0 0.0
        %443 = vmatpush1.msra.mxu0 %v426
        %444 = vmatprep.subr.mxu0 0.0
        %445 = vmatpush1.msra.mxu0 %v427
        %446 = vmatprep.subr.mxu0 0.0
        %447 = vmatpush1.msra.mxu0 %v428
        %448 = vmatprep.subr.mxu0 0.0
        %449 = vmatpush1.msra.mxu0 0.0
        %450 = vmatprep.subr.mxu0 0.0
        %451 = vmatpush1.msra.mxu0 0.0
        %452 = vmatprep.subr.mxu0 0.0
        %453 = vmatpush1.msra.mxu0 0.0
        %454 = vmatprep.subr.mxu0 0.0
        %455 = vmatpush1.msra.mxu0 0.0
        %456 = vmatprep.subr.mxu0 0.0
        %457 = vmatpush1.msra.mxu0 0.0
        %458 = vmatprep.subr.mxu0 0.0
        %459 = vmatpush1.msra.mxu0 0.0
        %460 = vmatprep.subr.mxu0 0.0
        %461 = vmatpush1.msra.mxu0 0.0
        %462 = vmatprep.subr.mxu0 0.0
        %463 = vmatpush1.msra.mxu0 0.0
        %464 = vmatprep.subr.mxu0 0.0
        %465 = vmatpush1.msra.mxu0 0.0
        %466 = vmatprep.subr.mxu0 0.0
        %467 = vmatpush1.msra.mxu0 0.0
        %468 = vmatprep.subr.mxu0 0.0
        %469 = vmatpush1.msra.mxu0 0.0
        %470 = vmatprep.subr.mxu0 0.0
        %471 = vmatpush1.msra.mxu0 0.0
        %472 = vmatprep.subr.mxu0 0.0
        %473 = vmatpush1.msra.mxu0 0.0
        %474 = vmatprep.subr.mxu0 0.0
        %475 = vmatpush1.msra.mxu0 0.0
        %476 = vmatprep.subr.mxu0 0.0
        %477 = vmatpush1.msra.mxu0 0.0
        %478 = vmatprep.subr.mxu0 0.0
        %479 = vmatpush1.msra.mxu0 0.0
        %480 = vmatprep.subr.mxu0 0.0
        %481 = vmatpush1.msra.mxu0 0.0
        %482 = vmatprep.subr.mxu0 0.0
        %483 = vmatpush1.msra.mxu0 0.0
        %484 = vmatprep.subr.mxu0 0.0
        %485 = vmatpush1.msra.mxu0 0.0
        %486 = vmatprep.subr.mxu0 0.0
        %487 = vmatpush1.msra.mxu0 0.0
        %488 = vmatprep.subr.mxu0 0.0
        %489 = vmatpush1.msra.mxu0 0.0
        %490 = vmatprep.subr.mxu0 0.0
        %491 = vmatpush1.msra.mxu0 0.0
        %492 = vmatprep.subr.mxu0 0.0
        %493 = vmatpush1.msra.mxu0 0.0
        %494 = vmatprep.subr.mxu0 0.0
        %495 = vmatpush1.msra.mxu0 0.0
        %496 = vmatprep.subr.mxu0 0.0
        %497 = vmatpush1.msra.mxu0 0.0
        %498 = vmatprep.subr.mxu0 0.0
        %499 = vmatpush1.msra.mxu0 0.0
        %500 = vmatprep.subr.mxu0 0.0
        %501 = vmatpush1.msra.mxu0 0.0
        %502 = vmatprep.subr.mxu0 0.0
        %503 = vmatpush1.msra.mxu0 0.0
        %504 = vmatprep.mubr.f32.mxu0 0.0
        %505 = vmatmul.mubr.f32.gmra.mrb[0].mxu0 %v438
        %v506 = vpop.f32.mrb[0].mxu0
        %v507 = vadd.f32 %v434, %v506
        %v508 = vpop.f32.mrb[0].mxu0
        %509 = vdwg.mxu0
        %v510 = vmul.f32 %v507, 0.25
        %512 = vrot.lane.b32.xlu0 %v507, 96
        %v513 = vpop.permute.xlu0 %512
        %vm514 = vcmask 130048
        %v516 = vsel %vm514, %v510, 0
        %v518 = vsel %vm514, %v513, 0
        %520 = vmatprep.subr.mxu0 0.0
        %521 = vmatpush1.xpose.msra.mxu0 %v518
        %522 = vmatprep.subr.mxu0 0.0
        %523 = vmatpush1.xpose.msra.mxu0 0.0
        %524 = vmatprep.subr.mxu0 0.0
        %525 = vmatpush1.xpose.msra.mxu0 0.0
        %526 = vmatprep.subr.mxu0 0.0
        %527 = vmatpush1.xpose.msra.mxu0 0.0
        %528 = vmatprep.subr.mxu0 0.0
        %529 = vmatpush1.xpose.msra.mxu0 0.0
        %530 = vmatprep.subr.mxu0 0.0
        %531 = vmatpush1.xpose.msra.mxu0 0.0
        %532 = vmatprep.subr.mxu0 0.0
        %533 = vmatpush1.xpose.msra.mxu0 0.0
        %534 = vmatprep.subr.mxu0 0.0
        %535 = vmatpush1.xpose.msra.mxu0 0.0
        %536 = vmatprep.subr.mxu0 0.0
        %537 = vmatpush1.xpose.msra.mxu0 0.0
        %538 = vmatprep.subr.mxu0 0.0
        %539 = vmatpush1.xpose.msra.mxu0 0.0
        %540 = vmatprep.subr.mxu0 0.0
        %541 = vmatpush1.xpose.msra.mxu0 0.0
        %542 = vmatprep.subr.mxu0 0.0
        %543 = vmatpush1.xpose.msra.mxu0 0.0
        %544 = vmatprep.subr.mxu0 0.0
        %545 = vmatpush1.xpose.msra.mxu0 0.0
        %546 = vmatprep.subr.mxu0 0.0
        %547 = vmatpush1.xpose.msra.mxu0 0.0
        %548 = vmatprep.subr.mxu0 0.0
        %549 = vmatpush1.xpose.msra.mxu0 0.0
        %550 = vmatprep.subr.mxu0 0.0
        %551 = vmatpush1.xpose.msra.mxu0 0.0
        %552 = vmatprep.subr.mxu0 0.0
        %553 = vmatpush1.xpose.msra.mxu0 0.0
        %554 = vmatprep.subr.mxu0 0.0
        %555 = vmatpush1.xpose.msra.mxu0 0.0
        %556 = vmatprep.subr.mxu0 0.0
        %557 = vmatpush1.xpose.msra.mxu0 0.0
        %558 = vmatprep.subr.mxu0 0.0
        %559 = vmatpush1.xpose.msra.mxu0 0.0
        %560 = vmatprep.subr.mxu0 0.0
        %561 = vmatpush1.xpose.msra.mxu0 0.0
        %562 = vmatprep.subr.mxu0 0.0
        %563 = vmatpush1.xpose.msra.mxu0 0.0
        %564 = vmatprep.subr.mxu0 0.0
        %565 = vmatpush1.xpose.msra.mxu0 0.0
        %566 = vmatprep.subr.mxu0 0.0
        %567 = vmatpush1.xpose.msra.mxu0 0.0
        %568 = vmatprep.subr.mxu0 0.0
        %569 = vmatpush1.xpose.msra.mxu0 0.0
        %570 = vmatprep.subr.mxu0 0.0
        %571 = vmatpush1.xpose.msra.mxu0 0.0
        %572 = vmatprep.subr.mxu0 0.0
        %573 = vmatpush1.xpose.msra.mxu0 0.0
        %574 = vmatprep.subr.mxu0 0.0
        %575 = vmatpush1.xpose.msra.mxu0 0.0
        %576 = vmatprep.subr.mxu0 0.0
        %577 = vmatpush1.xpose.msra.mxu0 0.0
        %578 = vmatprep.subr.mxu0 0.0
        %579 = vmatpush1.xpose.msra.mxu0 0.0
        %580 = vmatprep.subr.mxu0 0.0
        %581 = vmatpush1.xpose.msra.mxu0 0.0
        %582 = vmatprep.subr.mxu0 0.0
        %583 = vmatpush1.xpose.msra.mxu0 0.0
        %584 = vmatprep.mubr.f32.mxu0 0.0
        %585 = vmatmul.mubr.f32.gmra.mrb[0].mxu0 %v516
        %v586 = vpop.f32.mrb[0].mxu0
        %v587 = vadd.f32 0.0, %v586
        %v588 = vpop.f32.mrb[0].mxu0
        %589 = vdwg.mxu0
        %vm590 = vcmask 64512
        %v591 = vsel %vm590, %v587, -inf
        %592 = vmax.xlane.f32.xlu0 %v591
        %v593 = vpop.xlane.xlu0 %592
        %v594 = vsub.f32 %v587, %v593
        %v595 = vmul.f32 %v594, 1.442695
        %v596 = vpow.pop %v595
        %v597 = vsel %vm590, %v596, 0.0
        %598 = vadd.xlane.f32.xlu0 %v597
        %v599 = vpop.xlane.xlu0 %598
        %v600 = vrcp.pop %v599
        %v601 = vmul.f32 %v596, %v600
        %602 = vrot.lane.b32.xlu0 %v507, 64
        %v603 = vpop.permute.xlu0 %602
        %v606 = vsel %vm590, %v601, 0
        %608 = vmatprep.subr.mxu0 0.0
        %609 = vmatpush1.msra.mxu0 %v603
        %610 = vmatprep.subr.mxu0 0.0
        %611 = vmatpush1.msra.mxu0 0.0
        %612 = vmatprep.subr.mxu0 0.0
        %613 = vmatpush1.msra.mxu0 0.0
        %614 = vmatprep.subr.mxu0 0.0
        %615 = vmatpush1.msra.mxu0 0.0
        %616 = vmatprep.subr.mxu0 0.0
        %617 = vmatpush1.msra.mxu0 0.0
        %618 = vmatprep.subr.mxu0 0.0
        %619 = vmatpush1.msra.mxu0 0.0
        %620 = vmatprep.subr.mxu0 0.0
        %621 = vmatpush1.msra.mxu0 0.0
        %622 = vmatprep.subr.mxu0 0.0
        %623 = vmatpush1.msra.mxu0 0.0
        %624 = vmatprep.subr.mxu0 0.0
        %625 = vmatpush1.msra.mxu0 0.0
        %626 = vmatprep.subr.mxu0 0.0
        %627 = vmatpush1.msra.mxu0 0.0
        %628 = vmatprep.subr.mxu0 0.0
        %629 = vmatpush1.msra.mxu0 0.0
        %630 = vmatprep.subr.mxu0 0.0
        %631 = vmatpush1.msra.mxu0 0.0
        %632 = vmatprep.subr.mxu0 0.0
        %633 = vmatpush1.msra.mxu0 0.0
        %634 = vmatprep.subr.mxu0 0.0
        %635 = vmatpush1.msra.mxu0 0.0
        %636 = vmatprep.subr.mxu0 0.0
        %637 = vmatpush1.msra.mxu0 0.0
        %638 = vmatprep.subr.mxu0 0.0
        %639 = vmatpush1.msra.mxu0 0.0
        %640 = vmatprep.subr.mxu0 0.0
        %641 = vmatpush1.msra.mxu0 0.0
        %642 = vmatprep.subr.mxu0 0.0
        %643 = vmatpush1.msra.mxu0 0.0
        %644 = vmatprep.subr.mxu0 0.0
        %645 = vmatpush1.msra.mxu0 0.0
        %646 = vmatprep.subr.mxu0 0.0
        %647 = vmatpush1.msra.mxu0 0.0
        %648 = vmatprep.subr.mxu0 0.0
        %649 = vmatpush1.msra.mxu0 0.0
        %650 = vmatprep.subr.mxu0 0.0
        %651 = vmatpush1.msra.mxu0 0.0
        %652 = vmatprep.subr.mxu0 0.0
        %653 = vmatpush1.msra.mxu0 0.0
        %654 = vmatprep.subr.mxu0 0.0
        %655 = vmatpush1.msra.mxu0 0.0
        %656 = vmatprep.subr.mxu0 0.0
        %657 = vmatpush1.msra.mxu0 0.0
        %658 = vmatprep.subr.mxu0 0.0
        %659 = vmatpush1.msra.mxu0 0.0
        %660 = vmatprep.subr.mxu0 0.0
        %661 = vmatpush1.msra.mxu0 0.0
        %662 = vmatprep.subr.mxu0 0.0
        %663 = vmatpush1.msra.mxu0 0.0
        %664 = vmatprep.subr.mxu0 0.0
        %665 = vmatpush1.msra.mxu0 0.0
        %666 = vmatprep.subr.mxu0 0.0
        %667 = vmatpush1.msra.mxu0 0.0
        %668 = vmatprep.subr.mxu0 0.0
        %669 = vmatpush1.msra.mxu0 0.0
        %670 = vmatprep.subr.mxu0 0.0
        %671 = vmatpush1.msra.mxu0 0.0
        %672 = vmatprep.mubr.f32.mxu0 0.0
        %673 = vmatmul.mubr.f32.gmra.mrb[0].mxu0 %v606
        %v674 = vpop.f32.mrb[0].mxu0
        %v675 = vadd.f32 0.0, %v674
        %v676 = vpop.f32.mrb[0].mxu0
        %677 = vdwg.mxu0
        %678 = vrot.lane.b32.xlu0 %v510, 112
        %v679 = vpop.permute.xlu0 %678
        %680 = vrot.lane.b32.xlu0 %v507, 80
        %v681 = vpop.permute.xlu0 %680
        %v682 = vsel %vm514, %v679, 0
        %v684 = vsel %vm514, %v681, 0
        %686 = vmatprep.subr.mxu0 0.0
        %687 = vmatpush1.xpose.msra.mxu0 %v684
        %688 = vmatprep.subr.mxu0 0.0
        %689 = vmatpush1.xpose.msra.mxu0 0.0
        %690 = vmatprep.subr.mxu0 0.0
        %691 = vmatpush1.xpose.msra.mxu0 0.0
        %692 = vmatprep.subr.mxu0 0.0
        %693 = vmatpush1.xpose.msra.mxu0 0.0
        %694 = vmatprep.subr.mxu0 0.0
        %695 = vmatpush1.xpose.msra.mxu0 0.0
        %696 = vmatprep.subr.mxu0 0.0
        %697 = vmatpush1.xpose.msra.mxu0 0.0
        %698 = vmatprep.subr.mxu0 0.0
        %699 = vmatpush1.xpose.msra.mxu0 0.0
        %700 = vmatprep.subr.mxu0 0.0
        %701 = vmatpush1.xpose.msra.mxu0 0.0
        %702 = vmatprep.subr.mxu0 0.0
        %703 = vmatpush1.xpose.msra.mxu0 0.0
        %704 = vmatprep.subr.mxu0 0.0
        %705 = vmatpush1.xpose.msra.mxu0 0.0
        %706 = vmatprep.subr.mxu0 0.0
        %707 = vmatpush1.xpose.msra.mxu0 0.0
        %708 = vmatprep.subr.mxu0 0.0
        %709 = vmatpush1.xpose.msra.mxu0 0.0
        %710 = vmatprep.subr.mxu0 0.0
        %711 = vmatpush1.xpose.msra.mxu0 0.0
        %712 = vmatprep.subr.mxu0 0.0
        %713 = vmatpush1.xpose.msra.mxu0 0.0
        %714 = vmatprep.subr.mxu0 0.0
        %715 = vmatpush1.xpose.msra.mxu0 0.0
        %716 = vmatprep.subr.mxu0 0.0
        %717 = vmatpush1.xpose.msra.mxu0 0.0
        %718 = vmatprep.subr.mxu0 0.0
        %719 = vmatpush1.xpose.msra.mxu0 0.0
        %720 = vmatprep.subr.mxu0 0.0
        %721 = vmatpush1.xpose.msra.mxu0 0.0
        %722 = vmatprep.subr.mxu0 0.0
        %723 = vmatpush1.xpose.msra.mxu0 0.0
        %724 = vmatprep.subr.mxu0 0.0
        %725 = vmatpush1.xpose.msra.mxu0 0.0
        %726 = vmatprep.subr.mxu0 0.0
        %727 = vmatpush1.xpose.msra.mxu0 0.0
        %728 = vmatprep.subr.mxu0 0.0
        %729 = vmatpush1.xpose.msra.mxu0 0.0
        %730 = vmatprep.subr.mxu0 0.0
        %731 = vmatpush1.xpose.msra.mxu0 0.0
        %732 = vmatprep.subr.mxu0 0.0
        %733 = vmatpush1.xpose.msra.mxu0 0.0
        %734 = vmatprep.subr.mxu0 0.0
        %735 = vmatpush1.xpose.msra.mxu0 0.0
        %736 = vmatprep.subr.mxu0 0.0
        %737 = vmatpush1.xpose.msra.mxu0 0.0
        %738 = vmatprep.subr.mxu0 0.0
        %739 = vmatpush1.xpose.msra.mxu0 0.0
        %740 = vmatprep.subr.mxu0 0.0
        %741 = vmatpush1.xpose.msra.mxu0 0.0
        %742 = vmatprep.subr.mxu0 0.0
        %743 = vmatpush1.xpose.msra.mxu0 0.0
        %744 = vmatprep.subr.mxu0 0.0
        %745 = vmatpush1.xpose.msra.mxu0 0.0
        %746 = vmatprep.subr.mxu0 0.0
        %747 = vmatpush1.xpose.msra.mxu0 0.0
        %748 = vmatprep.subr.mxu0 0.0
        %749 = vmatpush1.xpose.msra.mxu0 0.0
        %750 = vmatprep.mubr.f32.mxu0 0.0
        %751 = vmatmul.mubr.f32.gmra.mrb[0].mxu0 %v682
        %v752 = vpop.f32.mrb[0].mxu0
        %v753 = vadd.f32 0.0, %v752
        %v754 = vpop.f32.mrb[0].mxu0
        %755 = vdwg.mxu0
        %v756 = vsel %vm590, %v753, -inf
        %757 = vmax.xlane.f32.xlu0 %v756
        %v758 = vpop.xlane.xlu0 %757
        %v759 = vsub.f32 %v753, %v758
        %v760 = vmul.f32 %v759, 1.442695
        %v761 = vpow.pop %v760
        %v762 = vsel %vm590, %v761, 0.0
        %763 = vadd.xlane.f32.xlu0 %v762
        %v764 = vpop.xlane.xlu0 %763
        %v765 = vrcp.pop %v764
        %v766 = vmul.f32 %v761, %v765
        %767 = vrot.lane.b32.xlu0 %v507, 48
        %v768 = vpop.permute.xlu0 %767
        %v771 = vsel %vm590, %v766, 0
        %773 = vmatprep.subr.mxu0 0.0
        %774 = vmatpush1.msra.mxu0 %v768
        %775 = vmatprep.subr.mxu0 0.0
        %776 = vmatpush1.msra.mxu0 0.0
        %777 = vmatprep.subr.mxu0 0.0
        %778 = vmatpush1.msra.mxu0 0.0
        %779 = vmatprep.subr.mxu0 0.0
        %780 = vmatpush1.msra.mxu0 0.0
        %781 = vmatprep.subr.mxu0 0.0
        %782 = vmatpush1.msra.mxu0 0.0
        %783 = vmatprep.subr.mxu0 0.0
        %784 = vmatpush1.msra.mxu0 0.0
        %785 = vmatprep.subr.mxu0 0.0
        %786 = vmatpush1.msra.mxu0 0.0
        %787 = vmatprep.subr.mxu0 0.0
        %788 = vmatpush1.msra.mxu0 0.0
        %789 = vmatprep.subr.mxu0 0.0
        %790 = vmatpush1.msra.mxu0 0.0
        %791 = vmatprep.subr.mxu0 0.0
        %792 = vmatpush1.msra.mxu0 0.0
        %793 = vmatprep.subr.mxu0 0.0
        %794 = vmatpush1.msra.mxu0 0.0
        %795 = vmatprep.subr.mxu0 0.0
        %796 = vmatpush1.msra.mxu0 0.0
        %797 = vmatprep.subr.mxu0 0.0
        %798 = vmatpush1.msra.mxu0 0.0
        %799 = vmatprep.subr.mxu0 0.0
        %800 = vmatpush1.msra.mxu0 0.0
        %801 = vmatprep.subr.mxu0 0.0
        %802 = vmatpush1.msra.mxu0 0.0
        %803 = vmatprep.subr.mxu0 0.0
        %804 = vmatpush1.msra.mxu0 0.0
        %805 = vmatprep.subr.mxu0 0.0
        %806 = vmatpush1.msra.mxu0 0.0
        %807 = vmatprep.subr.mxu0 0.0
        %808 = vmatpush1.msra.mxu0 0.0
        %809 = vmatprep.subr.mxu0 0.0
        %810 = vmatpush1.msra.mxu0 0.0
        %811 = vmatprep.subr.mxu0 0.0
        %812 = vmatpush1.msra.mxu0 0.0
        %813 = vmatprep.subr.mxu0 0.0
        %814 = vmatpush1.msra.mxu0 0.0
        %815 = vmatprep.subr.mxu0 0.0
        %816 = vmatpush1.msra.mxu0 0.0
        %817 = vmatprep.subr.mxu0 0.0
        %818 = vmatpush1.msra.mxu0 0.0
        %819 = vmatprep.subr.mxu0 0.0
        %820 = vmatpush1.msra.mxu0 0.0
        %821 = vmatprep.subr.mxu0 0.0
        %822 = vmatpush1.msra.mxu0 0.0
        %823 = vmatprep.subr.mxu0 0.0
        %824 = vmatpush1.msra.mxu0 0.0
        %825 = vmatprep.subr.mxu0 0.0
        %826 = vmatpush1.msra.mxu0 0.0
        %827 = vmatprep.subr.mxu0 0.0
        %828 = vmatpush1.msra.mxu0 0.0
        %829 = vmatprep.subr.mxu0 0.0
        %830 = vmatpush1.msra.mxu0 0.0
        %831 = vmatprep.subr.mxu0 0.0
        %832 = vmatpush1.msra.mxu0 0.0
        %833 = vmatprep.subr.mxu0 0.0
        %834 = vmatpush1.msra.mxu0 0.0
        %835 = vmatprep.subr.mxu0 0.0
        %836 = vmatpush1.msra.mxu0 0.0
        %837 = vmatprep.mubr.f32.mxu0 0.0
        %838 = vmatmul.mubr.f32.gmra.mrb[0].mxu0 %v771
        %v839 = vpop.f32.mrb[0].mxu0
        %v840 = vadd.f32 0.0, %v839
        %v841 = vpop.f32.mrb[0].mxu0
        %842 = vdwg.mxu0
        %844 = vrot.lane.b32.xlu0 %v840, 16
        %v845 = vpop.permute.xlu0 %844
        %v847 = vsel %vm514, %v675, %v845
        %v848 = vld [vmem:[%s2] sm:$0xff]
        %v849 = vld [vmem:[%s2 + $0x8] sm:$0xff]
        %v850 = vld [vmem:[%s2 + $0x10] sm:$0xff]
        %v851 = vld [vmem:[%s2 + $0x18] sm:$0xff]
        %v852 = vlaneseq
        %v853 = vshrl.u32 %v852, 7
        %v854 = vsub.s32 0, %v853
        %v855 = vrot.slane %v424, %v854
        %v857 = vsel %vm436, %v847, 0
        %859 = vmatprep.subr.mxu0 0.0
        %860 = vmatpush1.msra.mxu0 %v848
        %861 = vmatprep.subr.mxu0 0.0
        %862 = vmatpush1.msra.mxu0 %v849
        %863 = vmatprep.subr.mxu0 0.0
        %864 = vmatpush1.msra.mxu0 %v850
        %865 = vmatprep.subr.mxu0 0.0
        %866 = vmatpush1.msra.mxu0 %v851
        %867 = vmatprep.subr.mxu0 0.0
        %868 = vmatpush1.msra.mxu0 0.0
        %869 = vmatprep.subr.mxu0 0.0
        %870 = vmatpush1.msra.mxu0 0.0
        %871 = vmatprep.subr.mxu0 0.0
        %872 = vmatpush1.msra.mxu0 0.0
        %873 = vmatprep.subr.mxu0 0.0
        %874 = vmatpush1.msra.mxu0 0.0
        %875 = vmatprep.subr.mxu0 0.0
        %876 = vmatpush1.msra.mxu0 0.0
        %877 = vmatprep.subr.mxu0 0.0
        %878 = vmatpush1.msra.mxu0 0.0
        %879 = vmatprep.subr.mxu0 0.0
        %880 = vmatpush1.msra.mxu0 0.0
        %881 = vmatprep.subr.mxu0 0.0
        %882 = vmatpush1.msra.mxu0 0.0
        %883 = vmatprep.subr.mxu0 0.0
        %884 = vmatpush1.msra.mxu0 0.0
        %885 = vmatprep.subr.mxu0 0.0
        %886 = vmatpush1.msra.mxu0 0.0
        %887 = vmatprep.subr.mxu0 0.0
        %888 = vmatpush1.msra.mxu0 0.0
        %889 = vmatprep.subr.mxu0 0.0
        %890 = vmatpush1.msra.mxu0 0.0
        %891 = vmatprep.subr.mxu0 0.0
        %892 = vmatpush1.msra.mxu0 0.0
        %893 = vmatprep.subr.mxu0 0.0
        %894 = vmatpush1.msra.mxu0 0.0
        %895 = vmatprep.subr.mxu0 0.0
        %896 = vmatpush1.msra.mxu0 0.0
        %897 = vmatprep.subr.mxu0 0.0
        %898 = vmatpush1.msra.mxu0 0.0
        %899 = vmatprep.subr.mxu0 0.0
        %900 = vmatpush1.msra.mxu0 0.0
        %901 = vmatprep.subr.mxu0 0.0
        %902 = vmatpush1.msra.mxu0 0.0
        %903 = vmatprep.subr.mxu0 0.0
        %904 = vmatpush1.msra.mxu0 0.0
        %905 = vmatprep.subr.mxu0 0.0
        %906 = vmatpush1.msra.mxu0 0.0
        %907 = vmatprep.subr.mxu0 0.0
        %908 = vmatpush1.msra.mxu0 0.0
        %909 = vmatprep.subr.mxu0 0.0
        %910 = vmatpush1.msra.mxu0 0.0
        %911 = vmatprep.subr.mxu0 0.0
        %912 = vmatpush1.msra.mxu0 0.0
        %913 = vmatprep.subr.mxu0 0.0
        %914 = vmatpush1.msra.mxu0 0.0
        %915 = vmatprep.subr.mxu0 0.0
        %916 = vmatpush1.msra.mxu0 0.0
        %917 = vmatprep.subr.mxu0 0.0
        %918 = vmatpush1.msra.mxu0 0.0
        %919 = vmatprep.subr.mxu0 0.0
        %920 = vmatpush1.msra.mxu0 0.0
        %921 = vmatprep.subr.mxu0 0.0
        %922 = vmatpush1.msra.mxu0 0.0
        %923 = vmatprep.mubr.f32.mxu0 0.0
        %924 = vmatmul.mubr.f32.gmra.mrb[0].mxu0 %v857
        %v925 = vpop.f32.mrb[0].mxu0
        %v926 = vadd.f32 %v855, %v925
        %v927 = vpop.f32.mrb[0].mxu0
        %928 = vdwg.mxu0
        %929 = vxpose.xlu0.b32.start [1/16] %v423, 128
        %930 = vxpose.xlu0.b32.cont [2/16] 0.0, 128
        %931 = vxpose.xlu0.b32.cont [3/16] 0.0, 128
        %932 = vxpose.xlu0.b32.cont [4/16] 0.0, 128
        %933 = vxpose.xlu0.b32.cont [5/16] 0.0, 128
        %934 = vxpose.xlu0.b32.cont [6/16] 0.0, 128
        %935 = vxpose.xlu0.b32.cont [7/16] 0.0, 128
        %936 = vxpose.xlu0.b32.cont [8/16] 0.0, 128
        %937 = vxpose.xlu0.b32.cont [9/16] 0.0, 128
        %938 = vxpose.xlu0.b32.cont [10/16] 0.0, 128
        %939 = vxpose.xlu0.b32.cont [11/16] 0.0, 128
        %940 = vxpose.xlu0.b32.cont [12/16] 0.0, 128
        %941 = vxpose.xlu0.b32.cont [13/16] 0.0, 128
        %942 = vxpose.xlu0.b32.cont [14/16] 0.0, 128
        %943 = vxpose.xlu0.b32.cont [15/16] 0.0, 128
        %944 = vxpose.xlu0.b32.end [16/16] 0.0, 128
        %v945 = vpop.trf.xlu0
        %v946 = vpop.trf.xlu0
        %v947 = vpop.trf.xlu0
        %v948 = vpop.trf.xlu0
        %v949 = vpop.trf.xlu0
        %v950 = vpop.trf.xlu0
        %v951 = vpop.trf.xlu0
        %v952 = vpop.trf.xlu0
        %v953 = vpop.trf.xlu0
        %v954 = vpop.trf.xlu0
        %v955 = vpop.trf.xlu0
        %v956 = vpop.trf.xlu0
        %v957 = vpop.trf.xlu0
        %v958 = vpop.trf.xlu0
        %v959 = vpop.trf.xlu0
        %v960 = vpop.trf.xlu0
        %v961 = vld [vmem:[%s4] sm:$0xff]
        %v962 = vld [vmem:[%s6] sm:$0x1]
        %v964 = vlaneseq
        %v965 = vshrl.u32 %v964, 7
        %v966 = vsub.s32 0, %v965
        %v967 = vrot.slane %v962, %v966
        %v970 = vsel %vm590, %v945, 0
        %v973 = vsel %vm590, %v946, 0
        %v976 = vsel %vm590, %v947, 0
        %v979 = vsel %vm590, %v948, 0
        %981 = vmatprep.subr.mxu0 0.0
        %982 = vmatpush1.msra.mxu0 %v961
        %983 = vmatprep.subr.mxu0 0.0
        %984 = vmatpush1.msra.mxu0 0.0
        %985 = vmatprep.subr.mxu0 0.0
        %986 = vmatpush1.msra.mxu0 0.0
        %987 = vmatprep.subr.mxu0 0.0
        %988 = vmatpush1.msra.mxu0 0.0
        %989 = vmatprep.subr.mxu0 0.0
        %990 = vmatpush1.msra.mxu0 0.0
        %991 = vmatprep.subr.mxu0 0.0
        %992 = vmatpush1.msra.mxu0 0.0
        %993 = vmatprep.subr.mxu0 0.0
        %994 = vmatpush1.msra.mxu0 0.0
        %995 = vmatprep.subr.mxu0 0.0
        %996 = vmatpush1.msra.mxu0 0.0
        %997 = vmatprep.subr.mxu0 0.0
        %998 = vmatpush1.msra.mxu0 0.0
        %999 = vmatprep.subr.mxu0 0.0
        %1000 = vmatpush1.msra.mxu0 0.0
        %1001 = vmatprep.subr.mxu0 0.0
        %1002 = vmatpush1.msra.mxu0 0.0
        %1003 = vmatprep.subr.mxu0 0.0
        %1004 = vmatpush1.msra.mxu0 0.0
        %1005 = vmatprep.subr.mxu0 0.0
        %1006 = vmatpush1.msra.mxu0 0.0
        %1007 = vmatprep.subr.mxu0 0.0
        %1008 = vmatpush1.msra.mxu0 0.0
        %1009 = vmatprep.subr.mxu0 0.0
        %1010 = vmatpush1.msra.mxu0 0.0
        %1011 = vmatprep.subr.mxu0 0.0
        %1012 = vmatpush1.msra.mxu0 0.0
        %1013 = vmatprep.subr.mxu0 0.0
        %1014 = vmatpush1.msra.mxu0 0.0
        %1015 = vmatprep.subr.mxu0 0.0
        %1016 = vmatpush1.msra.mxu0 0.0
        %1017 = vmatprep.subr.mxu0 0.0
        %1018 = vmatpush1.msra.mxu0 0.0
        %1019 = vmatprep.subr.mxu0 0.0
        %1020 = vmatpush1.msra.mxu0 0.0
        %1021 = vmatprep.subr.mxu0 0.0
        %1022 = vmatpush1.msra.mxu0 0.0
        %1023 = vmatprep.subr.mxu0 0.0
        %1024 = vmatpush1.msra.mxu0 0.0
        %1025 = vmatprep.subr.mxu0 0.0
        %1026 = vmatpush1.msra.mxu0 0.0
        %1027 = vmatprep.subr.mxu0 0.0
        %1028 = vmatpush1.msra.mxu0 0.0
        %1029 = vmatprep.subr.mxu0 0.0
        %1030 = vmatpush1.msra.mxu0 0.0
        %1031 = vmatprep.subr.mxu0 0.0
        %1032 = vmatpush1.msra.mxu0 0.0
        %1033 = vmatprep.subr.mxu0 0.0
        %1034 = vmatpush1.msra.mxu0 0.0
        %1035 = vmatprep.subr.mxu0 0.0
        %1036 = vmatpush1.msra.mxu0 0.0
        %1037 = vmatprep.subr.mxu0 0.0
        %1038 = vmatpush1.msra.mxu0 0.0
        %1039 = vmatprep.subr.mxu0 0.0
        %1040 = vmatpush1.msra.mxu0 0.0
        %1041 = vmatprep.subr.mxu0 0.0
        %1042 = vmatpush1.msra.mxu0 0.0
        %1043 = vmatprep.subr.mxu0 0.0
        %1044 = vmatpush1.msra.mxu0 0.0
        %1045 = vmatprep.mubr.f32.mxu0 0.0
        %1046 = vmatmul.mubr.f32.gmra.mrb[0].mxu0 %v970
        %v1047 = vpop.f32.mrb[0].mxu0
        %v1048 = vadd.f32 %v967, %v1047
        %v1049 = vpop.f32.mrb[0].mxu0
        %1050 = vmatprep.mubr.f32.mxu0 0.0
        %1051 = vmatmul.mubr.f32.gmra.mrb[0].mxu0 %v973
        %v1052 = vpop.f32.mrb[0].mxu0
        %v1053 = vadd.f32 %v967, %v1052
        %v1054 = vpop.f32.mrb[0].mxu0
        %1055 = vmatprep.mubr.f32.mxu0 0.0
        %1056 = vmatmul.mubr.f32.gmra.mrb[0].mxu0 %v976
        %v1057 = vpop.f32.mrb[0].mxu0
        %v1058 = vadd.f32 %v967, %v1057
        %v1059 = vpop.f32.mrb[0].mxu0
        %1060 = vmatprep.mubr.f32.mxu0 0.0
        %1061 = vmatmul.mubr.f32.gmra.mrb[0].mxu0 %v979
        %v1062 = vpop.f32.mrb[0].mxu0
        %v1063 = vadd.f32 %v967, %v1062
        %v1064 = vpop.f32.mrb[0].mxu0
        %1065 = vdwg.mxu0
        %v1066 = vmul.f32 %v1048, 0.5
        %v1067 = vmul.f32 %v1053, 0.5
        %v1068 = vmul.f32 %v1058, 0.5
        %v1069 = vmul.f32 %v1063, 0.5
        %1074 = vrot.lane.b32.xlu0 %v1048, 120
        %v1075 = vpop.permute.xlu0 %1074
        %1076 = vrot.lane.b32.xlu0 %v1053, 120
        %v1077 = vpop.permute.xlu0 %1076
        %1078 = vrot.lane.b32.xlu0 %v1058, 120
        %v1079 = vpop.permute.xlu0 %1078
        %1080 = vrot.lane.b32.xlu0 %v1063, 120
        %v1081 = vpop.permute.xlu0 %1080
        %vm1082 = vcmask 31744
        %v1084 = vsel %vm1082, %v1066, 0
        %v1087 = vsel %vm1082, %v1067, 0
        %v1090 = vsel %vm1082, %v1068, 0
        %v1093 = vsel %vm1082, %v1069, 0
        %v1095 = vsel %vm1082, %v1075, 0
        %v1097 = vsel %vm1082, %v1077, 0
        %v1099 = vsel %vm1082, %v1079, 0
        %v1101 = vsel %vm1082, %v1081, 0
        %1103 = vmatprep.subr.mxu0 0.0
        %1104 = vmatpush1.xpose.msra.mxu0 %v1095
        %1105 = vmatprep.subr.mxu0 0.0
        %1106 = vmatpush1.xpose.msra.mxu0 %v1097
        %1107 = vmatprep.subr.mxu0 0.0
        %1108 = vmatpush1.xpose.msra.mxu0 %v1099
        %1109 = vmatprep.subr.mxu0 0.0
        %1110 = vmatpush1.xpose.msra.mxu0 %v1101
        %1111 = vmatprep.subr.mxu0 0.0
        %1112 = vmatpush1.xpose.msra.mxu0 0.0
        %1113 = vmatprep.subr.mxu0 0.0
        %1114 = vmatpush1.xpose.msra.mxu0 0.0
        %1115 = vmatprep.subr.mxu0 0.0
        %1116 = vmatpush1.xpose.msra.mxu0 0.0
        %1117 = vmatprep.subr.mxu0 0.0
        %1118 = vmatpush1.xpose.msra.mxu0 0.0
        %1119 = vmatprep.subr.mxu0 0.0
        %1120 = vmatpush1.xpose.msra.mxu0 0.0
        %1121 = vmatprep.subr.mxu0 0.0
        %1122 = vmatpush1.xpose.msra.mxu0 0.0
        %1123 = vmatprep.subr.mxu0 0.0
        %1124 = vmatpush1.xpose.msra.mxu0 0.0
        %1125 = vmatprep.subr.mxu0 0.0
        %1126 = vmatpush1.xpose.msra.mxu0 0.0
        %1127 = vmatprep.subr.mxu0 0.0
        %1128 = vmatpush1.xpose.msra.mxu0 0.0
        %1129 = vmatprep.subr.mxu0 0.0
        %1130 = vmatpush1.xpose.msra.mxu0 0.0
        %1131 = vmatprep.subr.mxu0 0.0
        %1132 = vmatpush1.xpose.msra.mxu0 0.0
        %1133 = vmatprep.subr.mxu0 0.0
        %1134 = vmatpush1.xpose.msra.mxu0 0.0
        %1135 = vmatprep.subr.mxu0 0.0
        %1136 = vmatpush1.xpose.msra.mxu0 0.0
        %1137 = vmatprep.subr.mxu0 0.0
        %1138 = vmatpush1.xpose.msra.mxu0 0.0
        %1139 = vmatprep.subr.mxu0 0.0
        %1140 = vmatpush1.xpose.msra.mxu0 0.0
        %1141 = vmatprep.subr.mxu0 0.0
        %1142 = vmatpush1.xpose.msra.mxu0 0.0
        %1143 = vmatprep.subr.mxu0 0.0
        %1144 = vmatpush1.xpose.msra.mxu0 0.0
        %1145 = vmatprep.subr.mxu0 0.0
        %1146 = vmatpush1.xpose.msra.mxu0 0.0
        %1147 = vmatprep.subr.mxu0 0.0
        %1148 = vmatpush1.xpose.msra.mxu0 0.0
        %1149 = vmatprep.subr.mxu0 0.0
        %1150 = vmatpush1.xpose.msra.mxu0 0.0
        %1151 = vmatprep.subr.mxu0 0.0
        %1152 = vmatpush1.xpose.msra.mxu0 0.0
        %1153 = vmatprep.subr.mxu0 0.0
        %1154 = vmatpush1.xpose.msra.mxu0 0.0
        %1155 = vmatprep.subr.mxu0 0.0
        %1156 = vmatpush1.xpose.msra.mxu0 0.0
        %1157 = vmatprep.subr.mxu0 0.0
        %1158 = vmatpush1.xpose.msra.mxu0 0.0
        %1159 = vmatprep.subr.mxu0 0.0
        %1160 = vmatpush1.xpose.msra.mxu0 0.0
        %1161 = vmatprep.subr.mxu0 0.0
        %1162 = vmatpush1.xpose.msra.mxu0 0.0
        %1163 = vmatprep.subr.mxu0 0.0
        %1164 = vmatpush1.xpose.msra.mxu0 0.0
        %1165 = vmatprep.subr.mxu0 0.0
        %1166 = vmatpush1.xpose.msra.mxu0 0.0
        %1167 = vmatprep.mubr.f32.mxu0 0.0
        %1168 = vmatmul.mubr.f32.gmra.mrb[0].mxu0 %v1084
        %v1169 = vpop.f32.mrb[0].mxu0
        %v1170 = vadd.f32 0.0, %v1169
        %v1171 = vpop.f32.mrb[0].mxu0
        %1172 = vmatprep.mubr.f32.mxu0 0.0
        %1173 = vmatmul.mubr.f32.gmra.mrb[0].mxu0 %v1087
        %v1174 = vpop.f32.mrb[0].mxu0
        %v1175 = vadd.f32 0.0, %v1174
        %v1176 = vpop.f32.mrb[0].mxu0
        %1177 = vmatprep.mubr.f32.mxu0 0.0
        %1178 = vmatmul.mubr.f32.gmra.mrb[0].mxu0 %v1090
        %v1179 = vpop.f32.mrb[0].mxu0
        %v1180 = vadd.f32 0.0, %v1179
        %v1181 = vpop.f32.mrb[0].mxu0
        %1182 = vmatprep.mubr.f32.mxu0 0.0
        %1183 = vmatmul.mubr.f32.gmra.mrb[0].mxu0 %v1093
        %v1184 = vpop.f32.mrb[0].mxu0
        %v1185 = vadd.f32 0.0, %v1184
        %v1186 = vpop.f32.mrb[0].mxu0
        %1187 = vdwg.mxu0
        %v1188 = vsel %vm436, %v1170, -inf
        %1189 = vmax.xlane.f32.xlu0 %v1188
        %v1190 = vpop.xlane.xlu0 %1189
        %v1191 = vsel %vm436, %v1175, -inf
        %1192 = vmax.xlane.f32.xlu0 %v1191
        %v1193 = vpop.xlane.xlu0 %1192
        %v1194 = vsel %vm436, %v1180, -inf
        %1195 = vmax.xlane.f32.xlu0 %v1194
        %v1196 = vpop.xlane.xlu0 %1195
        %v1197 = vsel %vm436, %v1185, -inf
        %1198 = vmax.xlane.f32.xlu0 %v1197
        %v1199 = vpop.xlane.xlu0 %1198
        %v1200 = vsub.f32 %v1170, %v1190
        %v1201 = vsub.f32 %v1175, %v1193
        %v1202 = vsub.f32 %v1180, %v1196
        %v1203 = vsub.f32 %v1185, %v1199
        %v1204 = vmul.f32 %v1200, 1.442695
        %v1205 = vpow.pop %v1204
        %v1206 = vmul.f32 %v1201, 1.442695
        %v1207 = vpow.pop %v1206
        %v1208 = vmul.f32 %v1202, 1.442695
        %v1209 = vpow.pop %v1208
        %v1210 = vmul.f32 %v1203, 1.442695
        %v1211 = vpow.pop %v1210
        %v1212 = vsel %vm436, %v1205, 0.0
        %1213 = vadd.xlane.f32.xlu0 %v1212
        %v1214 = vpop.xlane.xlu0 %1213
        %v1215 = vsel %vm436, %v1207, 0.0
        %1216 = vadd.xlane.f32.xlu0 %v1215
        %v1217 = vpop.xlane.xlu0 %1216
        %v1218 = vsel %vm436, %v1209, 0.0
        %1219 = vadd.xlane.f32.xlu0 %v1218
        %v1220 = vpop.xlane.xlu0 %1219
        %v1221 = vsel %vm436, %v1211, 0.0
        %1222 = vadd.xlane.f32.xlu0 %v1221
        %v1223 = vpop.xlane.xlu0 %1222
        %v1224 = vrcp.pop %v1214
        %v1225 = vrcp.pop %v1217
        %v1226 = vrcp.pop %v1220
        %v1227 = vrcp.pop %v1223
        %v1228 = vmul.f32 %v1205, %v1224
        %v1229 = vmul.f32 %v1207, %v1225
        %v1230 = vmul.f32 %v1209, %v1226
        %v1231 = vmul.f32 %v1211, %v1227
        %1232 = vrot.lane.b32.xlu0 %v1048, 112
        %v1233 = vpop.permute.xlu0 %1232
        %1234 = vrot.lane.b32.xlu0 %v1053, 112
        %v1235 = vpop.permute.xlu0 %1234
        %1236 = vrot.lane.b32.xlu0 %v1058, 112
        %v1237 = vpop.permute.xlu0 %1236
        %1238 = vrot.lane.b32.xlu0 %v1063, 112
        %v1239 = vpop.permute.xlu0 %1238
        %v1245 = vsel %vm436, %v1228, 0
        %v1248 = vsel %vm436, %v1229, 0
        %v1251 = vsel %vm436, %v1230, 0
        %v1254 = vsel %vm436, %v1231, 0
        %1256 = vmatprep.subr.mxu0 0.0
        %1257 = vmatpush1.msra.mxu0 %v1233
        %1258 = vmatprep.subr.mxu0 0.0
        %1259 = vmatpush1.msra.mxu0 %v1235
        %1260 = vmatprep.subr.mxu0 0.0
        %1261 = vmatpush1.msra.mxu0 %v1237
        %1262 = vmatprep.subr.mxu0 0.0
        %1263 = vmatpush1.msra.mxu0 %v1239
        %1264 = vmatprep.subr.mxu0 0.0
        %1265 = vmatpush1.msra.mxu0 0.0
        %1266 = vmatprep.subr.mxu0 0.0
        %1267 = vmatpush1.msra.mxu0 0.0
        %1268 = vmatprep.subr.mxu0 0.0
        %1269 = vmatpush1.msra.mxu0 0.0
        %1270 = vmatprep.subr.mxu0 0.0
        %1271 = vmatpush1.msra.mxu0 0.0
        %1272 = vmatprep.subr.mxu0 0.0
        %1273 = vmatpush1.msra.mxu0 0.0
        %1274 = vmatprep.subr.mxu0 0.0
        %1275 = vmatpush1.msra.mxu0 0.0
        %1276 = vmatprep.subr.mxu0 0.0
        %1277 = vmatpush1.msra.mxu0 0.0
        %1278 = vmatprep.subr.mxu0 0.0
        %1279 = vmatpush1.msra.mxu0 0.0
        %1280 = vmatprep.subr.mxu0 0.0
        %1281 = vmatpush1.msra.mxu0 0.0
        %1282 = vmatprep.subr.mxu0 0.0
        %1283 = vmatpush1.msra.mxu0 0.0
        %1284 = vmatprep.subr.mxu0 0.0
        %1285 = vmatpush1.msra.mxu0 0.0
        %1286 = vmatprep.subr.mxu0 0.0
        %1287 = vmatpush1.msra.mxu0 0.0
        %1288 = vmatprep.subr.mxu0 0.0
        %1289 = vmatpush1.msra.mxu0 0.0
        %1290 = vmatprep.subr.mxu0 0.0
        %1291 = vmatpush1.msra.mxu0 0.0
        %1292 = vmatprep.subr.mxu0 0.0
        %1293 = vmatpush1.msra.mxu0 0.0
        %1294 = vmatprep.subr.mxu0 0.0
        %1295 = vmatpush1.msra.mxu0 0.0
        %1296 = vmatprep.subr.mxu0 0.0
        %1297 = vmatpush1.msra.mxu0 0.0
        %1298 = vmatprep.subr.mxu0 0.0
        %1299 = vmatpush1.msra.mxu0 0.0
        %1300 = vmatprep.subr.mxu0 0.0
        %1301 = vmatpush1.msra.mxu0 0.0
        %1302 = vmatprep.subr.mxu0 0.0
        %1303 = vmatpush1.msra.mxu0 0.0
        %1304 = vmatprep.subr.mxu0 0.0
        %1305 = vmatpush1.msra.mxu0 0.0
        %1306 = vmatprep.subr.mxu0 0.0
        %1307 = vmatpush1.msra.mxu0 0.0
        %1308 = vmatprep.subr.mxu0 0.0
        %1309 = vmatpush1.msra.mxu0 0.0
        %1310 = vmatprep.subr.mxu0 0.0
        %1311 = vmatpush1.msra.mxu0 0.0
        %1312 = vmatprep.subr.mxu0 0.0
        %1313 = vmatpush1.msra.mxu0 0.0
        %1314 = vmatprep.subr.mxu0 0.0
        %1315 = vmatpush1.msra.mxu0 0.0
        %1316 = vmatprep.subr.mxu0 0.0
        %1317 = vmatpush1.msra.mxu0 0.0
        %1318 = vmatprep.subr.mxu0 0.0
        %1319 = vmatpush1.msra.mxu0 0.0
        %1320 = vmatprep.mubr.f32.mxu0 0.0
        %1321 = vmatmul.mubr.f32.gmra.mrb[0].mxu0 %v1245
        %v1322 = vpop.f32.mrb[0].mxu0
        %v1323 = vadd.f32 0.0, %v1322
        %v1324 = vpop.f32.mrb[0].mxu0
        %1325 = vmatprep.mubr.f32.mxu0 0.0
        %1326 = vmatmul.mubr.f32.gmra.mrb[0].mxu0 %v1248
        %v1327 = vpop.f32.mrb[0].mxu0
        %v1328 = vadd.f32 0.0, %v1327
        %v1329 = vpop.f32.mrb[0].mxu0
        %1330 = vmatprep.mubr.f32.mxu0 0.0
        %1331 = vmatmul.mubr.f32.gmra.mrb[0].mxu0 %v1251
        %v1332 = vpop.f32.mrb[0].mxu0
        %v1333 = vadd.f32 0.0, %v1332
        %v1334 = vpop.f32.mrb[0].mxu0
        %1335 = vmatprep.mubr.f32.mxu0 0.0
        %1336 = vmatmul.mubr.f32.gmra.mrb[0].mxu0 %v1254
        %v1337 = vpop.f32.mrb[0].mxu0
        %v1338 = vadd.f32 0.0, %v1337
        %v1339 = vpop.f32.mrb[0].mxu0
        %1340 = vdwg.mxu0
        %1341 = vrot.lane.b32.xlu0 %v1066, 124
        %v1342 = vpop.permute.xlu0 %1341
        %1343 = vrot.lane.b32.xlu0 %v1067, 124
        %v1344 = vpop.permute.xlu0 %1343
        %1345 = vrot.lane.b32.xlu0 %v1068, 124
        %v1346 = vpop.permute.xlu0 %1345
        %1347 = vrot.lane.b32.xlu0 %v1069, 124
        %v1348 = vpop.permute.xlu0 %1347
        %1349 = vrot.lane.b32.xlu0 %v1048, 116
        %v1350 = vpop.permute.xlu0 %1349
        %1351 = vrot.lane.b32.xlu0 %v1053, 116
        %v1352 = vpop.permute.xlu0 %1351
        %1353 = vrot.lane.b32.xlu0 %v1058, 116
        %v1354 = vpop.permute.xlu0 %1353
        %1355 = vrot.lane.b32.xlu0 %v1063, 116
        %v1356 = vpop.permute.xlu0 %1355
        %v1357 = vsel %vm1082, %v1342, 0
        %v1359 = vsel %vm1082, %v1344, 0
        %v1361 = vsel %vm1082, %v1346, 0
        %v1363 = vsel %vm1082, %v1348, 0
        %v1365 = vsel %vm1082, %v1350, 0
        %v1367 = vsel %vm1082, %v1352, 0
        %v1369 = vsel %vm1082, %v1354, 0
        %v1371 = vsel %vm1082, %v1356, 0
        %1373 = vmatprep.subr.mxu0 0.0
        %1374 = vmatpush1.xpose.msra.mxu0 %v1365
        %1375 = vmatprep.subr.mxu0 0.0
        %1376 = vmatpush1.xpose.msra.mxu0 %v1367
        %1377 = vmatprep.subr.mxu0 0.0
        %1378 = vmatpush1.xpose.msra.mxu0 %v1369
        %1379 = vmatprep.subr.mxu0 0.0
        %1380 = vmatpush1.xpose.msra.mxu0 %v1371
        %1381 = vmatprep.subr.mxu0 0.0
        %1382 = vmatpush1.xpose.msra.mxu0 0.0
        %1383 = vmatprep.subr.mxu0 0.0
        %1384 = vmatpush1.xpose.msra.mxu0 0.0
        %1385 = vmatprep.subr.mxu0 0.0
        %1386 = vmatpush1.xpose.msra.mxu0 0.0
        %1387 = vmatprep.subr.mxu0 0.0
        %1388 = vmatpush1.xpose.msra.mxu0 0.0
        %1389 = vmatprep.subr.mxu0 0.0
        %1390 = vmatpush1.xpose.msra.mxu0 0.0
        %1391 = vmatprep.subr.mxu0 0.0
        %1392 = vmatpush1.xpose.msra.mxu0 0.0
        %1393 = vmatprep.subr.mxu0 0.0
        %1394 = vmatpush1.xpose.msra.mxu0 0.0
        %1395 = vmatprep.subr.mxu0 0.0
        %1396 = vmatpush1.xpose.msra.mxu0 0.0
        %1397 = vmatprep.subr.mxu0 0.0
        %1398 = vmatpush1.xpose.msra.mxu0 0.0
        %1399 = vmatprep.subr.mxu0 0.0
        %1400 = vmatpush1.xpose.msra.mxu0 0.0
        %1401 = vmatprep.subr.mxu0 0.0
        %1402 = vmatpush1.xpose.msra.mxu0 0.0
        %1403 = vmatprep.subr.mxu0 0.0
        %1404 = vmatpush1.xpose.msra.mxu0 0.0
        %1405 = vmatprep.subr.mxu0 0.0
        %1406 = vmatpush1.xpose.msra.mxu0 0.0
        %1407 = vmatprep.subr.mxu0 0.0
        %1408 = vmatpush1.xpose.msra.mxu0 0.0
        %1409 = vmatprep.subr.mxu0 0.0
        %1410 = vmatpush1.xpose.msra.mxu0 0.0
        %1411 = vmatprep.subr.mxu0 0.0
        %1412 = vmatpush1.xpose.msra.mxu0 0.0
        %1413 = vmatprep.subr.mxu0 0.0
        %1414 = vmatpush1.xpose.msra.mxu0 0.0
        %1415 = vmatprep.subr.mxu0 0.0
        %1416 = vmatpush1.xpose.msra.mxu0 0.0
        %1417 = vmatprep.subr.mxu0 0.0
        %1418 = vmatpush1.xpose.msra.mxu0 0.0
        %1419 = vmatprep.subr.mxu0 0.0
        %1420 = vmatpush1.xpose.msra.mxu0 0.0
        %1421 = vmatprep.subr.mxu0 0.0
        %1422 = vmatpush1.xpose.msra.mxu0 0.0
        %1423 = vmatprep.subr.mxu0 0.0
        %1424 = vmatpush1.xpose.msra.mxu0 0.0
        %1425 = vmatprep.subr.mxu0 0.0
        %1426 = vmatpush1.xpose.msra.mxu0 0.0
        %1427 = vmatprep.subr.mxu0 0.0
        %1428 = vmatpush1.xpose.msra.mxu0 0.0
        %1429 = vmatprep.subr.mxu0 0.0
        %1430 = vmatpush1.xpose.msra.mxu0 0.0
        %1431 = vmatprep.subr.mxu0 0.0
        %1432 = vmatpush1.xpose.msra.mxu0 0.0
        %1433 = vmatprep.subr.mxu0 0.0
        %1434 = vmatpush1.xpose.msra.mxu0 0.0
        %1435 = vmatprep.subr.mxu0 0.0
        %1436 = vmatpush1.xpose.msra.mxu0 0.0
        %1437 = vmatprep.mubr.f32.mxu0 0.0
        %1438 = vmatmul.mubr.f32.gmra.mrb[0].mxu0 %v1357
        %v1439 = vpop.f32.mrb[0].mxu0
        %v1440 = vadd.f32 0.0, %v1439
        %v1441 = vpop.f32.mrb[0].mxu0
        %1442 = vmatprep.mubr.f32.mxu0 0.0
        %1443 = vmatmul.mubr.f32.gmra.mrb[0].mxu0 %v1359
        %v1444 = vpop.f32.mrb[0].mxu0
        %v1445 = vadd.f32 0.0, %v1444
        %v1446 = vpop.f32.mrb[0].mxu0
        %1447 = vmatprep.mubr.f32.mxu0 0.0
        %1448 = vmatmul.mubr.f32.gmra.mrb[0].mxu0 %v1361
        %v1449 = vpop.f32.mrb[0].mxu0
        %v1450 = vadd.f32 0.0, %v1449
        %v1451 = vpop.f32.mrb[0].mxu0
        %1452 = vmatprep.mubr.f32.mxu0 0.0
        %1453 = vmatmul.mubr.f32.gmra.mrb[0].mxu0 %v1363
        %v1454 = vpop.f32.mrb[0].mxu0
        %v1455 = vadd.f32 0.0, %v1454
        %v1456 = vpop.f32.mrb[0].mxu0
        %1457 = vdwg.mxu0
        %v1458 = vsel %vm436, %v1440, -inf
        %1459 = vmax.xlane.f32.xlu0 %v1458
        %v1460 = vpop.xlane.xlu0 %1459
        %v1461 = vsel %vm436, %v1445, -inf
        %1462 = vmax.xlane.f32.xlu0 %v1461
        %v1463 = vpop.xlane.xlu0 %1462
        %v1464 = vsel %vm436, %v1450, -inf
        %1465 = vmax.xlane.f32.xlu0 %v1464
        %v1466 = vpop.xlane.xlu0 %1465
        %v1467 = vsel %vm436, %v1455, -inf
        %1468 = vmax.xlane.f32.xlu0 %v1467
        %v1469 = vpop.xlane.xlu0 %1468
        %v1470 = vsub.f32 %v1440, %v1460
        %v1471 = vsub.f32 %v1445, %v1463
        %v1472 = vsub.f32 %v1450, %v1466
        %v1473 = vsub.f32 %v1455, %v1469
        %v1474 = vmul.f32 %v1470, 1.442695
        %v1475 = vpow.pop %v1474
        %v1476 = vmul.f32 %v1471, 1.442695
        %v1477 = vpow.pop %v1476
        %v1478 = vmul.f32 %v1472, 1.442695
        %v1479 = vpow.pop %v1478
        %v1480 = vmul.f32 %v1473, 1.442695
        %v1481 = vpow.pop %v1480
        %v1482 = vsel %vm436, %v1475, 0.0
        %1483 = vadd.xlane.f32.xlu0 %v1482
        %v1484 = vpop.xlane.xlu0 %1483
        %v1485 = vsel %vm436, %v1477, 0.0
        %1486 = vadd.xlane.f32.xlu0 %v1485
        %v1487 = vpop.xlane.xlu0 %1486
        %v1488 = vsel %vm436, %v1479, 0.0
        %1489 = vadd.xlane.f32.xlu0 %v1488
        %v1490 = vpop.xlane.xlu0 %1489
        %v1491 = vsel %vm436, %v1481, 0.0
        %1492 = vadd.xlane.f32.xlu0 %v1491
        %v1493 = vpop.xlane.xlu0 %1492
        %v1494 = vrcp.pop %v1484
        %v1495 = vrcp.pop %v1487
        %v1496 = vrcp.pop %v1490
        %v1497 = vrcp.pop %v1493
        %v1498 = vmul.f32 %v1475, %v1494
        %v1499 = vmul.f32 %v1477, %v1495
        %v1500 = vmul.f32 %v1479, %v1496
        %v1501 = vmul.f32 %v1481, %v1497
        %1502 = vrot.lane.b32.xlu0 %v1048, 108
        %v1503 = vpop.permute.xlu0 %1502
        %1504 = vrot.lane.b32.xlu0 %v1053, 108
        %v1505 = vpop.permute.xlu0 %1504
        %1506 = vrot.lane.b32.xlu0 %v1058, 108
        %v1507 = vpop.permute.xlu0 %1506
        %1508 = vrot.lane.b32.xlu0 %v1063, 108
        %v1509 = vpop.permute.xlu0 %1508
        %v1515 = vsel %vm436, %v1498, 0
        %v1518 = vsel %vm436, %v1499, 0
        %v1521 = vsel %vm436, %v1500, 0
        %v1524 = vsel %vm436, %v1501, 0
        %1526 = vmatprep.subr.mxu0 0.0
        %1527 = vmatpush1.msra.mxu0 %v1503
        %1528 = vmatprep.subr.mxu0 0.0
        %1529 = vmatpush1.msra.mxu0 %v1505
        %1530 = vmatprep.subr.mxu0 0.0
        %1531 = vmatpush1.msra.mxu0 %v1507
        %1532 = vmatprep.subr.mxu0 0.0
        %1533 = vmatpush1.msra.mxu0 %v1509
        %1534 = vmatprep.subr.mxu0 0.0
        %1535 = vmatpush1.msra.mxu0 0.0
        %1536 = vmatprep.subr.mxu0 0.0
        %1537 = vmatpush1.msra.mxu0 0.0
        %1538 = vmatprep.subr.mxu0 0.0
        %1539 = vmatpush1.msra.mxu0 0.0
        %1540 = vmatprep.subr.mxu0 0.0
        %1541 = vmatpush1.msra.mxu0 0.0
        %1542 = vmatprep.subr.mxu0 0.0
        %1543 = vmatpush1.msra.mxu0 0.0
        %1544 = vmatprep.subr.mxu0 0.0
        %1545 = vmatpush1.msra.mxu0 0.0
        %1546 = vmatprep.subr.mxu0 0.0
        %1547 = vmatpush1.msra.mxu0 0.0
        %1548 = vmatprep.subr.mxu0 0.0
        %1549 = vmatpush1.msra.mxu0 0.0
        %1550 = vmatprep.subr.mxu0 0.0
        %1551 = vmatpush1.msra.mxu0 0.0
        %1552 = vmatprep.subr.mxu0 0.0
        %1553 = vmatpush1.msra.mxu0 0.0
        %1554 = vmatprep.subr.mxu0 0.0
        %1555 = vmatpush1.msra.mxu0 0.0
        %1556 = vmatprep.subr.mxu0 0.0
        %1557 = vmatpush1.msra.mxu0 0.0
        %1558 = vmatprep.subr.mxu0 0.0
        %1559 = vmatpush1.msra.mxu0 0.0
        %1560 = vmatprep.subr.mxu0 0.0
        %1561 = vmatpush1.msra.mxu0 0.0
        %1562 = vmatprep.subr.mxu0 0.0
        %1563 = vmatpush1.msra.mxu0 0.0
        %1564 = vmatprep.subr.mxu0 0.0
        %1565 = vmatpush1.msra.mxu0 0.0
        %1566 = vmatprep.subr.mxu0 0.0
        %1567 = vmatpush1.msra.mxu0 0.0
        %1568 = vmatprep.subr.mxu0 0.0
        %1569 = vmatpush1.msra.mxu0 0.0
        %1570 = vmatprep.subr.mxu0 0.0
        %1571 = vmatpush1.msra.mxu0 0.0
        %1572 = vmatprep.subr.mxu0 0.0
        %1573 = vmatpush1.msra.mxu0 0.0
        %1574 = vmatprep.subr.mxu0 0.0
        %1575 = vmatpush1.msra.mxu0 0.0
        %1576 = vmatprep.subr.mxu0 0.0
        %1577 = vmatpush1.msra.mxu0 0.0
        %1578 = vmatprep.subr.mxu0 0.0
        %1579 = vmatpush1.msra.mxu0 0.0
        %1580 = vmatprep.subr.mxu0 0.0
        %1581 = vmatpush1.msra.mxu0 0.0
        %1582 = vmatprep.subr.mxu0 0.0
        %1583 = vmatpush1.msra.mxu0 0.0
        %1584 = vmatprep.subr.mxu0 0.0
        %1585 = vmatpush1.msra.mxu0 0.0
        %1586 = vmatprep.subr.mxu0 0.0
        %1587 = vmatpush1.msra.mxu0 0.0
        %1588 = vmatprep.subr.mxu0 0.0
        %1589 = vmatpush1.msra.mxu0 0.0
        %1590 = vmatprep.mubr.f32.mxu0 0.0
        %1591 = vmatmul.mubr.f32.gmra.mrb[0].mxu0 %v1515
        %v1592 = vpop.f32.mrb[0].mxu0
        %v1593 = vadd.f32 0.0, %v1592
        %v1594 = vpop.f32.mrb[0].mxu0
        %1595 = vmatprep.mubr.f32.mxu0 0.0
        %1596 = vmatmul.mubr.f32.gmra.mrb[0].mxu0 %v1518
        %v1597 = vpop.f32.mrb[0].mxu0
        %v1598 = vadd.f32 0.0, %v1597
        %v1599 = vpop.f32.mrb[0].mxu0
        %1600 = vmatprep.mubr.f32.mxu0 0.0
        %1601 = vmatmul.mubr.f32.gmra.mrb[0].mxu0 %v1521
        %v1602 = vpop.f32.mrb[0].mxu0
        %v1603 = vadd.f32 0.0, %v1602
        %v1604 = vpop.f32.mrb[0].mxu0
        %1605 = vmatprep.mubr.f32.mxu0 0.0
        %1606 = vmatmul.mubr.f32.gmra.mrb[0].mxu0 %v1524
        %v1607 = vpop.f32.mrb[0].mxu0
        %v1608 = vadd.f32 0.0, %v1607
        %v1609 = vpop.f32.mrb[0].mxu0
        %1610 = vdwg.mxu0
        %1615 = vrot.lane.b32.xlu0 %v1593, 4
        %v1616 = vpop.permute.xlu0 %1615
        %1617 = vrot.lane.b32.xlu0 %v1598, 4
        %v1618 = vpop.permute.xlu0 %1617
        %1619 = vrot.lane.b32.xlu0 %v1603, 4
        %v1620 = vpop.permute.xlu0 %1619
        %1621 = vrot.lane.b32.xlu0 %v1608, 4
        %v1622 = vpop.permute.xlu0 %1621
        %v1627 = vsel %vm1082, %v1323, %v1616
        %v1628 = vsel %vm1082, %v1328, %v1618
        %v1629 = vsel %vm1082, %v1333, %v1620
        %v1630 = vsel %vm1082, %v1338, %v1622
        %v1631 = vld [vmem:[%s5] sm:$0xff]
        %v1633 = vsel %vm590, %v1627, 0
        %v1636 = vsel %vm590, %v1628, 0
        %v1639 = vsel %vm590, %v1629, 0
        %v1642 = vsel %vm590, %v1630, 0
        %1644 = vmatprep.subr.mxu0 0.0
        %1645 = vmatpush1.msra.mxu0 %v1631
        %1646 = vmatprep.subr.mxu0 0.0
        %1647 = vmatpush1.msra.mxu0 0.0
        %1648 = vmatprep.subr.mxu0 0.0
        %1649 = vmatpush1.msra.mxu0 0.0
        %1650 = vmatprep.subr.mxu0 0.0
        %1651 = vmatpush1.msra.mxu0 0.0
        %1652 = vmatprep.subr.mxu0 0.0
        %1653 = vmatpush1.msra.mxu0 0.0
        %1654 = vmatprep.subr.mxu0 0.0
        %1655 = vmatpush1.msra.mxu0 0.0
        %1656 = vmatprep.subr.mxu0 0.0
        %1657 = vmatpush1.msra.mxu0 0.0
        %1658 = vmatprep.subr.mxu0 0.0
        %1659 = vmatpush1.msra.mxu0 0.0
        %1660 = vmatprep.subr.mxu0 0.0
        %1661 = vmatpush1.msra.mxu0 0.0
        %1662 = vmatprep.subr.mxu0 0.0
        %1663 = vmatpush1.msra.mxu0 0.0
        %1664 = vmatprep.subr.mxu0 0.0
        %1665 = vmatpush1.msra.mxu0 0.0
        %1666 = vmatprep.subr.mxu0 0.0
        %1667 = vmatpush1.msra.mxu0 0.0
        %1668 = vmatprep.subr.mxu0 0.0
        %1669 = vmatpush1.msra.mxu0 0.0
        %1670 = vmatprep.subr.mxu0 0.0
        %1671 = vmatpush1.msra.mxu0 0.0
        %1672 = vmatprep.subr.mxu0 0.0
        %1673 = vmatpush1.msra.mxu0 0.0
        %1674 = vmatprep.subr.mxu0 0.0
        %1675 = vmatpush1.msra.mxu0 0.0
        %1676 = vmatprep.subr.mxu0 0.0
        %1677 = vmatpush1.msra.mxu0 0.0
        %1678 = vmatprep.subr.mxu0 0.0
        %1679 = vmatpush1.msra.mxu0 0.0
        %1680 = vmatprep.subr.mxu0 0.0
        %1681 = vmatpush1.msra.mxu0 0.0
        %1682 = vmatprep.subr.mxu0 0.0
        %1683 = vmatpush1.msra.mxu0 0.0
        %1684 = vmatprep.subr.mxu0 0.0
        %1685 = vmatpush1.msra.mxu0 0.0
        %1686 = vmatprep.subr.mxu0 0.0
        %1687 = vmatpush1.msra.mxu0 0.0
        %1688 = vmatprep.subr.mxu0 0.0
        %1689 = vmatpush1.msra.mxu0 0.0
        %1690 = vmatprep.subr.mxu0 0.0
        %1691 = vmatpush1.msra.mxu0 0.0
        %1692 = vmatprep.subr.mxu0 0.0
        %1693 = vmatpush1.msra.mxu0 0.0
        %1694 = vmatprep.subr.mxu0 0.0
        %1695 = vmatpush1.msra.mxu0 0.0
        %1696 = vmatprep.subr.mxu0 0.0
        %1697 = vmatpush1.msra.mxu0 0.0
        %1698 = vmatprep.subr.mxu0 0.0
        %1699 = vmatpush1.msra.mxu0 0.0
        %1700 = vmatprep.subr.mxu0 0.0
        %1701 = vmatpush1.msra.mxu0 0.0
        %1702 = vmatprep.subr.mxu0 0.0
        %1703 = vmatpush1.msra.mxu0 0.0
        %1704 = vmatprep.subr.mxu0 0.0
        %1705 = vmatpush1.msra.mxu0 0.0
        %1706 = vmatprep.subr.mxu0 0.0
        %1707 = vmatpush1.msra.mxu0 0.0
        %1708 = vmatprep.mubr.f32.mxu0 0.0
        %1709 = vmatmul.mubr.f32.gmra.mrb[0].mxu0 %v1633
        %v1710 = vpop.f32.mrb[0].mxu0
        %v1711 = vadd.f32 0.0, %v1710
        %v1712 = vpop.f32.mrb[0].mxu0
        %1713 = vmatprep.mubr.f32.mxu0 0.0
        %1714 = vmatmul.mubr.f32.gmra.mrb[0].mxu0 %v1636
        %v1715 = vpop.f32.mrb[0].mxu0
        %v1716 = vadd.f32 0.0, %v1715
        %v1717 = vpop.f32.mrb[0].mxu0
        %1718 = vmatprep.mubr.f32.mxu0 0.0
        %1719 = vmatmul.mubr.f32.gmra.mrb[0].mxu0 %v1639
        %v1720 = vpop.f32.mrb[0].mxu0
        %v1721 = vadd.f32 0.0, %v1720
        %v1722 = vpop.f32.mrb[0].mxu0
        %1723 = vmatprep.mubr.f32.mxu0 0.0
        %1724 = vmatmul.mubr.f32.gmra.mrb[0].mxu0 %v1642
        %v1725 = vpop.f32.mrb[0].mxu0
        %v1726 = vadd.f32 0.0, %v1725
        %v1727 = vpop.f32.mrb[0].mxu0
        %1728 = vdwg.mxu0
        %1729 = vxpose.xlu0.b32.start [1/16] %v1711, 128
        %1730 = vxpose.xlu0.b32.cont [2/16] %v1716, 128
        %1731 = vxpose.xlu0.b32.cont [3/16] %v1721, 128
        %1732 = vxpose.xlu0.b32.cont [4/16] %v1726, 128
        %1733 = vxpose.xlu0.b32.cont [5/16] 0.0, 128
        %1734 = vxpose.xlu0.b32.cont [6/16] 0.0, 128
        %1735 = vxpose.xlu0.b32.cont [7/16] 0.0, 128
        %1736 = vxpose.xlu0.b32.cont [8/16] 0.0, 128
        %1737 = vxpose.xlu0.b32.cont [9/16] 0.0, 128
        %1738 = vxpose.xlu0.b32.cont [10/16] 0.0, 128
        %1739 = vxpose.xlu0.b32.cont [11/16] 0.0, 128
        %1740 = vxpose.xlu0.b32.cont [12/16] 0.0, 128
        %1741 = vxpose.xlu0.b32.cont [13/16] 0.0, 128
        %1742 = vxpose.xlu0.b32.cont [14/16] 0.0, 128
        %1743 = vxpose.xlu0.b32.cont [15/16] 0.0, 128
        %1744 = vxpose.xlu0.b32.end [16/16] 0.0, 128
        %v1745 = vpop.trf.xlu0
        %v1746 = vpop.trf.xlu0
        %v1747 = vpop.trf.xlu0
        %v1748 = vpop.trf.xlu0
        %v1749 = vpop.trf.xlu0
        %v1750 = vpop.trf.xlu0
        %v1751 = vpop.trf.xlu0
        %v1752 = vpop.trf.xlu0
        %v1753 = vpop.trf.xlu0
        %v1754 = vpop.trf.xlu0
        %v1755 = vpop.trf.xlu0
        %v1756 = vpop.trf.xlu0
        %v1757 = vpop.trf.xlu0
        %v1758 = vpop.trf.xlu0
        %v1759 = vpop.trf.xlu0
        %v1760 = vpop.trf.xlu0
        %v1761 = vld [vmem:[%s7] sm:$0xff]
        %1763 = vset.pattern.permute.xlu0 0
        %1764 = vperm.xlu0 %1763, %v1761
        %v1765 = vpop.permute.xlu0 %1764
        %v1767 = vadd.f32 %v1745, %v1765
        %v1768 = vadd.f32 %v423, %v926
        %v1769 = vadd.f32 %v1768, %v1767
        %v1770 = vsel %vm436, %v1769, 0.0
        %1771 = vadd.xlane.f32.xlu0 %v1770
        %v1772 = vpop.xlane.xlu0 %1771
        %v1773 = vrcp.pop 32.0
        %v1774 = vmul.f32 %v1772, %v1773
        %v1775 = vsub.f32 %v1769, %v1774
        %v1776 = vmul.f32 %v1775, %v1775
        %v1777 = vsel %vm436, %v1776, 0.0
        %1778 = vadd.xlane.f32.xlu0 %v1777
        %v1779 = vpop.xlane.xlu0 %1778
        %v1780 = vmul.f32 %v1779, %v1773
        %v1781 = vadd.f32 %v1780, 1e-05
        %v1782 = vrsqrt.pop %v1781
        %v1783 = vmul.f32 %v1775, %v1782
        %v1784 = vlaneseq
        %v1785 = vshrl.u32 %v1784, 7
        %v1786 = vsub.s32 1, %v1785
        %v1787 = vrot.slane %v424, %v1786
        %v1788 = vmul.f32 %v1783, %v1787
        %v1789 = vlaneseq
        %v1790 = vshrl.u32 %v1789, 7
        %v1791 = vsub.s32 2, %v1790
        %v1792 = vrot.slane %v424, %v1791
        %v1793 = vadd.f32 %v1788, %v1792
        %s1794 = sld [smem:[#allocation2]]
        %s1795 = sld [smem:[#allocation2 + $0x1]]
        %s1796 = sld [smem:[#allocation2 + $0x2]]
        %s1797 = sld [smem:[#allocation2 + $0x3]]
        %v1798 = vstv %s1794
        %v1799 = vmul.f32 %v1793, %v1798
        %v1800 = vstv %s1795
        %v1801 = vadd.f32 %v1799, %v1800
        %v1802 = vmax.f32 %v1801, 0.0
        %v1804 = vrot.slane %v1802, 6
        %vm1806 = vcmask 1041408
        %v1807 = vsel %vm1806, 0.0, %v1804
        %v1808 = vsel %vm1806, %v1804, 0.0
        %vm1811 = vcmask 1046528
        %v1812 = vrot.slane %v1807, 1
        %v1813 = vrot.slane %v1808, 1
        %v1814 = vsel %vm1811, %v1812, %v1813
        %1815 = vrot.lane.b32.xlu0 %v1814, 32
        %v1816 = vpop.permute.xlu0 %1815
        %1817 = vrot.lane.b32.xlu0 %v1813, 32
        %v1818 = vpop.permute.xlu0 %1817
        %vm1821 = vcmask 1045504
        %v1822 = vrot.slane %v1807, 2
        %v1823 = vrot.slane %v1808, 2
        %v1824 = vsel %vm1821, %v1822, %v1823
        %1825 = vrot.lane.b32.xlu0 %v1824, 64
        %v1826 = vpop.permute.xlu0 %1825
        %1827 = vrot.lane.b32.xlu0 %v1823, 64
        %v1828 = vpop.permute.xlu0 %1827
        %v1831 = vsel %vm436, %v1807, %v1816
        %v1832 = vsel %vm436, %v1808, %v1818
        %vm1833 = vcmask 523264
        %v1834 = vsel %vm1833, %v1831, %v1826
        %v1835 = vsel %vm1833, %v1832, %v1828
        %v1836 = vld [vmem:[%s9] sm:$0xff]
        %v1837 = vld [vmem:[%s9 + $0x8] sm:$0xff]
        %v1838 = vld [vmem:[%s9 + $0x10] sm:$0xff]
        %v1839 = vld [vmem:[%s9 + $0x18] sm:$0xff]
        %v1840 = vld [vmem:[%s9 + $0x20] sm:$0xff]
        %v1841 = vld [vmem:[%s9 + $0x28] sm:$0xff]
        %v1842 = vld [vmem:[%s9 + $0x30] sm:$0xff]
        %v1843 = vld [vmem:[%s9 + $0x38] sm:$0xff]
        %v1844 = vld [vmem:[%s9 + $0x40] sm:$0xff]
        %v1845 = vld [vmem:[%s9 + $0x48] sm:$0xff]
        %v1846 = vld [vmem:[%s9 + $0x50] sm:$0xff]
        %v1847 = vld [vmem:[%s9 + $0x58] sm:$0xff]
        %v1848 = vstv %s1796
        %v1851 = vrot.slane %v1834, 1
        %v1852 = vrot.slane %v1835, 1
        %v1853 = vsel %vm1811, %v1851, %v1852
        %vm1854 = vcmask 785408
        %v1855 = vsel %vm1854, %v1853, 0
        %1857 = vmatprep.subr.mxu0 0.0
        %1858 = vmatpush1.msra.mxu0 %v1836
        %1859 = vmatprep.subr.mxu0 0.0
        %1860 = vmatpush1.msra.mxu0 %v1837
        %1861 = vmatprep.subr.mxu0 0.0
        %1862 = vmatpush1.msra.mxu0 %v1838
        %1863 = vmatprep.subr.mxu0 0.0
        %1864 = vmatpush1.msra.mxu0 %v1839
        %1865 = vmatprep.subr.mxu0 0.0
        %1866 = vmatpush1.msra.mxu0 %v1840
        %1867 = vmatprep.subr.mxu0 0.0
        %1868 = vmatpush1.msra.mxu0 %v1841
        %1869 = vmatprep.subr.mxu0 0.0
        %1870 = vmatpush1.msra.mxu0 %v1842
        %1871 = vmatprep.subr.mxu0 0.0
        %1872 = vmatpush1.msra.mxu0 %v1843
        %1873 = vmatprep.subr.mxu0 0.0
        %1874 = vmatpush1.msra.mxu0 %v1844
        %1875 = vmatprep.subr.mxu0 0.0
        %1876 = vmatpush1.msra.mxu0 %v1845
        %1877 = vmatprep.subr.mxu0 0.0
        %1878 = vmatpush1.msra.mxu0 %v1846
        %1879 = vmatprep.subr.mxu0 0.0
        %1880 = vmatpush1.msra.mxu0 %v1847
        %1881 = vmatprep.subr.mxu0 0.0
        %1882 = vmatpush1.msra.mxu0 0.0
        %1883 = vmatprep.subr.mxu0 0.0
        %1884 = vmatpush1.msra.mxu0 0.0
        %1885 = vmatprep.subr.mxu0 0.0
        %1886 = vmatpush1.msra.mxu0 0.0
        %1887 = vmatprep.subr.mxu0 0.0
        %1888 = vmatpush1.msra.mxu0 0.0
        %1889 = vmatprep.subr.mxu0 0.0
        %1890 = vmatpush1.msra.mxu0 0.0
        %1891 = vmatprep.subr.mxu0 0.0
        %1892 = vmatpush1.msra.mxu0 0.0
        %1893 = vmatprep.subr.mxu0 0.0
        %1894 = vmatpush1.msra.mxu0 0.0
        %1895 = vmatprep.subr.mxu0 0.0
        %1896 = vmatpush1.msra.mxu0 0.0
        %1897 = vmatprep.subr.mxu0 0.0
        %1898 = vmatpush1.msra.mxu0 0.0
        %1899 = vmatprep.subr.mxu0 0.0
        %1900 = vmatpush1.msra.mxu0 0.0
        %1901 = vmatprep.subr.mxu0 0.0
        %1902 = vmatpush1.msra.mxu0 0.0
        %1903 = vmatprep.subr.mxu0 0.0
        %1904 = vmatpush1.msra.mxu0 0.0
        %1905 = vmatprep.subr.mxu0 0.0
        %1906 = vmatpush1.msra.mxu0 0.0
        %1907 = vmatprep.subr.mxu0 0.0
        %1908 = vmatpush1.msra.mxu0 0.0
        %1909 = vmatprep.subr.mxu0 0.0
        %1910 = vmatpush1.msra.mxu0 0.0
        %1911 = vmatprep.subr.mxu0 0.0
        %1912 = vmatpush1.msra.mxu0 0.0
        %1913 = vmatprep.subr.mxu0 0.0
        %1914 = vmatpush1.msra.mxu0 0.0
        %1915 = vmatprep.subr.mxu0 0.0
        %1916 = vmatpush1.msra.mxu0 0.0
        %1917 = vmatprep.subr.mxu0 0.0
        %1918 = vmatpush1.msra.mxu0 0.0
        %1919 = vmatprep.subr.mxu0 0.0
        %1920 = vmatpush1.msra.mxu0 0.0
        %1921 = vmatprep.mubr.f32.mxu0 0.0
        %1922 = vmatmul.mubr.f32.gmra.mrb[0].mxu0 %v1855
        %v1923 = vpop.f32.mrb[0].mxu0
        %v1924 = vadd.f32 %v1848, %v1923
        %v1925 = vpop.f32.mrb[0].mxu0
        %1926 = vdwg.mxu0
        %v1927 = vmax.f32 %v1924, 0.0
        %v1929 = vrot.slane %v1927, 6
        %v1931 = vsel %vm1806, 0.0, %v1929
        %v1932 = vsel %vm1806, %v1929, 0.0
        %v1935 = vrot.slane %v1931, 1
        %v1936 = vrot.slane %v1932, 1
        %v1937 = vsel %vm1811, %v1935, %v1936
        %1938 = vrot.lane.b32.xlu0 %v1937, 32
        %v1939 = vpop.permute.xlu0 %1938
        %v1941 = vrot.slane %v1931, 2
        %v1942 = vrot.slane %v1932, 2
        %v1943 = vsel %vm1821, %v1941, %v1942
        %1944 = vrot.lane.b32.xlu0 %v1943, 64
        %v1945 = vpop.permute.xlu0 %1944
        %vm1947 = vcmask 1044480
        %v1948 = vrot.slane %v1931, 3
        %v1949 = vrot.slane %v1932, 3
        %v1950 = vsel %vm1947, %v1948, %v1949
        %1951 = vrot.lane.b32.xlu0 %v1950, 96
        %v1952 = vpop.permute.xlu0 %1951
        %vm1954 = vcmask 1043456
        %v1955 = vrot.slane %v1931, 4
        %v1956 = vrot.slane %v1932, 4
        %v1957 = vsel %vm1954, %v1955, %v1956
        %v1958 = vsel %vm436, %v1931, %v1939
        %v1959 = vsel %vm1833, %v1958, %v1945
        %v1960 = vsel %vm1854, %v1959, %v1952
        %v1961 = vld [vmem:[%s10] sm:$0xff]
        %v1962 = vld [vmem:[%s10 + $0x8] sm:$0xff]
        %v1963 = vld [vmem:[%s10 + $0x10] sm:$0xff]
        %v1964 = vld [vmem:[%s10 + $0x18] sm:$0xff]
        %v1965 = vld [vmem:[%s10 + $0x20] sm:$0xff]
        %v1966 = vld [vmem:[%s10 + $0x28] sm:$0xff]
        %v1967 = vld [vmem:[%s10 + $0x30] sm:$0xff]
        %v1968 = vld [vmem:[%s10 + $0x38] sm:$0xff]
        %v1969 = vld [vmem:[%s10 + $0x40] sm:$0xff]
        %v1970 = vld [vmem:[%s10 + $0x48] sm:$0xff]
        %v1971 = vld [vmem:[%s10 + $0x50] sm:$0xff]
        %v1972 = vld [vmem:[%s10 + $0x58] sm:$0xff]
        %v1973 = vld [vmem:[%s10 + $0x60] sm:$0xff]
        %v1974 = vld [vmem:[%s10 + $0x68] sm:$0xff]
        %v1975 = vld [vmem:[%s10 + $0x70] sm:$0xff]
        %v1976 = vld [vmem:[%s10 + $0x78] sm:$0xff]
        %v1977 = vld [vmem:[%s10 + $0x80] sm:$0xff]
        %v1978 = vld [vmem:[%s10 + $0x88] sm:$0xff]
        %v1979 = vld [vmem:[%s10 + $0x90] sm:$0xff]
        %v1980 = vld [vmem:[%s10 + $0x98] sm:$0xff]
        %v1981 = vstv %s1797
        %v1982 = vsel %vm436, %v1957, 0
        %1984 = vmatprep.subr.mxu0 0.0
        %1985 = vmatpush1.msra.mxu0 %v1961
        %1986 = vmatprep.subr.mxu0 0.0
        %1987 = vmatpush1.msra.mxu0 %v1962
        %1988 = vmatprep.subr.mxu0 0.0
        %1989 = vmatpush1.msra.mxu0 %v1963
        %1990 = vmatprep.subr.mxu0 0.0
        %1991 = vmatpush1.msra.mxu0 %v1964
        %1992 = vmatprep.subr.mxu0 0.0
        %1993 = vmatpush1.msra.mxu0 %v1965
        %1994 = vmatprep.subr.mxu0 0.0
        %1995 = vmatpush1.msra.mxu0 %v1966
        %1996 = vmatprep.subr.mxu0 0.0
        %1997 = vmatpush1.msra.mxu0 %v1967
        %1998 = vmatprep.subr.mxu0 0.0
        %1999 = vmatpush1.msra.mxu0 %v1968
        %2000 = vmatprep.subr.mxu0 0.0
        %2001 = vmatpush1.msra.mxu0 %v1969
        %2002 = vmatprep.subr.mxu0 0.0
        %2003 = vmatpush1.msra.mxu0 %v1970
        %2004 = vmatprep.subr.mxu0 0.0
        %2005 = vmatpush1.msra.mxu0 %v1971
        %2006 = vmatprep.subr.mxu0 0.0
        %2007 = vmatpush1.msra.mxu0 %v1972
        %2008 = vmatprep.subr.mxu0 0.0
        %2009 = vmatpush1.msra.mxu0 %v1973
        %2010 = vmatprep.subr.mxu0 0.0
        %2011 = vmatpush1.msra.mxu0 %v1974
        %2012 = vmatprep.subr.mxu0 0.0
        %2013 = vmatpush1.msra.mxu0 %v1975
        %2014 = vmatprep.subr.mxu0 0.0
        %2015 = vmatpush1.msra.mxu0 %v1976
        %2016 = vmatprep.subr.mxu0 0.0
        %2017 = vmatpush1.msra.mxu0 %v1977
        %2018 = vmatprep.subr.mxu0 0.0
        %2019 = vmatpush1.msra.mxu0 %v1978
        %2020 = vmatprep.subr.mxu0 0.0
        %2021 = vmatpush1.msra.mxu0 %v1979
        %2022 = vmatprep.subr.mxu0 0.0
        %2023 = vmatpush1.msra.mxu0 %v1980
        %2024 = vmatprep.subr.mxu0 0.0
        %2025 = vmatpush1.msra.mxu0 0.0
        %2026 = vmatprep.subr.mxu0 0.0
        %2027 = vmatpush1.msra.mxu0 0.0
        %2028 = vmatprep.subr.mxu0 0.0
        %2029 = vmatpush1.msra.mxu0 0.0
        %2030 = vmatprep.subr.mxu0 0.0
        %2031 = vmatpush1.msra.mxu0 0.0
        %2032 = vmatprep.subr.mxu0 0.0
        %2033 = vmatpush1.msra.mxu0 0.0
        %2034 = vmatprep.subr.mxu0 0.0
        %2035 = vmatpush1.msra.mxu0 0.0
        %2036 = vmatprep.subr.mxu0 0.0
        %2037 = vmatpush1.msra.mxu0 0.0
        %2038 = vmatprep.subr.mxu0 0.0
        %2039 = vmatpush1.msra.mxu0 0.0
        %2040 = vmatprep.subr.mxu0 0.0
        %2041 = vmatpush1.msra.mxu0 0.0
        %2042 = vmatprep.subr.mxu0 0.0
        %2043 = vmatpush1.msra.mxu0 0.0
        %2044 = vmatprep.subr.mxu0 0.0
        %2045 = vmatpush1.msra.mxu0 0.0
        %2046 = vmatprep.subr.mxu0 0.0
        %2047 = vmatpush1.msra.mxu0 0.0
        %2048 = vmatprep.mubr.f32.mxu0 %v1982
        %2049 = vmatmul.mubr.f32.gmra.mrb[0].mxu0 %v1960
        %v2050 = vpop.f32.mrb[0].mxu0
        %v2051 = vadd.f32 %v1981, %v2050
        %v2052 = vpop.f32.mrb[0].mxu0
        %2053 = vdwg.mxu0
        %v2054 = vmax.f32 %v2051, 0.0
        %v2055 = vadd.f32 %v1793, %v2054
        %v2056 = vsel %vm436, %v2055, 0.0
        %2057 = vadd.xlane.f32.xlu0 %v2056
        %v2058 = vpop.xlane.xlu0 %2057
        %v2059 = vmul.f32 %v2058, %v1773
        %v2060 = vsub.f32 %v2055, %v2059
        %v2061 = vmul.f32 %v2060, %v2060
        %v2062 = vsel %vm436, %v2061, 0.0
        %2063 = vadd.xlane.f32.xlu0 %v2062
        %v2064 = vpop.xlane.xlu0 %2063
        %v2065 = vmul.f32 %v2064, %v1773
        %v2066 = vadd.f32 %v2065, 1e-05
        %v2067 = vrsqrt.pop %v2066
        %v2068 = vmul.f32 %v2060, %v2067
        %v2069 = vlaneseq
        %v2070 = vshrl.u32 %v2069, 7
        %v2071 = vsub.s32 3, %v2070
        %v2072 = vrot.slane %v424, %v2071
        %v2073 = vmul.f32 %v2068, %v2072
        %v2074 = vlaneseq
        %v2075 = vshrl.u32 %v2074, 7
        %v2076 = vsub.s32 4, %v2075
        %v2077 = vrot.slane %v424, %v2076
        %v2078 = vadd.f32 %v2073, %v2077
        %s2079 = scalar_lea.vmem %s8, 8
        %v2080 = vld [vmem:[%s2079] sm:$0x1f]
        %s2081 = scalar_lea.vmem %s1, 32
        %v2082 = vld [vmem:[%s2081] sm:$0xff]
        %v2083 = vld [vmem:[%s2081 + $0x8] sm:$0xff]
        %v2084 = vld [vmem:[%s2081 + $0x10] sm:$0xff]
        %v2085 = vld [vmem:[%s2081 + $0x18] sm:$0xff]
        %s2086 = scalar_lea.vmem %s3, 1
        %v2087 = vld [vmem:[%s2086] sm:$0x1]
        %v2089 = vlaneseq
        %v2090 = vshrl.u32 %v2089, 7
        %v2091 = vsub.s32 0, %v2090
        %v2092 = vrot.slane %v2087, %v2091
        %v2095 = vsel %vm436, %v2078, 0
        %2097 = vmatprep.subr.mxu0 0.0
        %2098 = vmatpush1.msra.mxu0 %v2082
        %2099 = vmatprep.subr.mxu0 0.0
        %2100 = vmatpush1.msra.mxu0 %v2083
        %2101 = vmatprep.subr.mxu0 0.0
        %2102 = vmatpush1.msra.mxu0 %v2084
        %2103 = vmatprep.subr.mxu0 0.0
        %2104 = vmatpush1.msra.mxu0 %v2085
        %2105 = vmatprep.subr.mxu0 0.0
        %2106 = vmatpush1.msra.mxu0 0.0
        %2107 = vmatprep.subr.mxu0 0.0
        %2108 = vmatpush1.msra.mxu0 0.0
        %2109 = vmatprep.subr.mxu0 0.0
        %2110 = vmatpush1.msra.mxu0 0.0
        %2111 = vmatprep.subr.mxu0 0.0
        %2112 = vmatpush1.msra.mxu0 0.0
        %2113 = vmatprep.subr.mxu0 0.0
        %2114 = vmatpush1.msra.mxu0 0.0
        %2115 = vmatprep.subr.mxu0 0.0
        %2116 = vmatpush1.msra.mxu0 0.0
        %2117 = vmatprep.subr.mxu0 0.0
        %2118 = vmatpush1.msra.mxu0 0.0
        %2119 = vmatprep.subr.mxu0 0.0
        %2120 = vmatpush1.msra.mxu0 0.0
        %2121 = vmatprep.subr.mxu0 0.0
        %2122 = vmatpush1.msra.mxu0 0.0
        %2123 = vmatprep.subr.mxu0 0.0
        %2124 = vmatpush1.msra.mxu0 0.0
        %2125 = vmatprep.subr.mxu0 0.0
        %2126 = vmatpush1.msra.mxu0 0.0
        %2127 = vmatprep.subr.mxu0 0.0
        %2128 = vmatpush1.msra.mxu0 0.0
        %2129 = vmatprep.subr.mxu0 0.0
        %2130 = vmatpush1.msra.mxu0 0.0
        %2131 = vmatprep.subr.mxu0 0.0
        %2132 = vmatpush1.msra.mxu0 0.0
        %2133 = vmatprep.subr.mxu0 0.0
        %2134 = vmatpush1.msra.mxu0 0.0
        %2135 = vmatprep.subr.mxu0 0.0
        %2136 = vmatpush1.msra.mxu0 0.0
        %2137 = vmatprep.subr.mxu0 0.0
        %2138 = vmatpush1.msra.mxu0 0.0
        %2139 = vmatprep.subr.mxu0 0.0
        %2140 = vmatpush1.msra.mxu0 0.0
        %2141 = vmatprep.subr.mxu0 0.0
        %2142 = vmatpush1.msra.mxu0 0.0
        %2143 = vmatprep.subr.mxu0 0.0
        %2144 = vmatpush1.msra.mxu0 0.0
        %2145 = vmatprep.subr.mxu0 0.0
        %2146 = vmatpush1.msra.mxu0 0.0
        %2147 = vmatprep.subr.mxu0 0.0
        %2148 = vmatpush1.msra.mxu0 0.0
        %2149 = vmatprep.subr.mxu0 0.0
        %2150 = vmatpush1.msra.mxu0 0.0
        %2151 = vmatprep.subr.mxu0 0.0
        %2152 = vmatpush1.msra.mxu0 0.0
        %2153 = vmatprep.subr.mxu0 0.0
        %2154 = vmatpush1.msra.mxu0 0.0
        %2155 = vmatprep.subr.mxu0 0.0
        %2156 = vmatpush1.msra.mxu0 0.0
        %2157 = vmatprep.subr.mxu0 0.0
        %2158 = vmatpush1.msra.mxu0 0.0
        %2159 = vmatprep.subr.mxu0 0.0
        %2160 = vmatpush1.msra.mxu0 0.0
        %2161 = vmatprep.mubr.f32.mxu0 0.0
        %2162 = vmatmul.mubr.f32.gmra.mrb[0].mxu0 %v2095
        %v2163 = vpop.f32.mrb[0].mxu0
        %v2164 = vadd.f32 %v2092, %v2163
        %v2165 = vpop.f32.mrb[0].mxu0
        %2166 = vdwg.mxu0
        %v2167 = vmul.f32 %v2164, 0.25
        %2169 = vrot.lane.b32.xlu0 %v2164, 96
        %v2170 = vpop.permute.xlu0 %2169
        %v2172 = vsel %vm514, %v2167, 0
        %v2174 = vsel %vm514, %v2170, 0
        %2176 = vmatprep.subr.mxu0 0.0
        %2177 = vmatpush1.xpose.msra.mxu0 %v2174
        %2178 = vmatprep.subr.mxu0 0.0
        %2179 = vmatpush1.xpose.msra.mxu0 0.0
        %2180 = vmatprep.subr.mxu0 0.0
        %2181 = vmatpush1.xpose.msra.mxu0 0.0
        %2182 = vmatprep.subr.mxu0 0.0
        %2183 = vmatpush1.xpose.msra.mxu0 0.0
        %2184 = vmatprep.subr.mxu0 0.0
        %2185 = vmatpush1.xpose.msra.mxu0 0.0
        %2186 = vmatprep.subr.mxu0 0.0
        %2187 = vmatpush1.xpose.msra.mxu0 0.0
        %2188 = vmatprep.subr.mxu0 0.0
        %2189 = vmatpush1.xpose.msra.mxu0 0.0
        %2190 = vmatprep.subr.mxu0 0.0
        %2191 = vmatpush1.xpose.msra.mxu0 0.0
        %2192 = vmatprep.subr.mxu0 0.0
        %2193 = vmatpush1.xpose.msra.mxu0 0.0
        %2194 = vmatprep.subr.mxu0 0.0
        %2195 = vmatpush1.xpose.msra.mxu0 0.0
        %2196 = vmatprep.subr.mxu0 0.0
        %2197 = vmatpush1.xpose.msra.mxu0 0.0
        %2198 = vmatprep.subr.mxu0 0.0
        %2199 = vmatpush1.xpose.msra.mxu0 0.0
        %2200 = vmatprep.subr.mxu0 0.0
        %2201 = vmatpush1.xpose.msra.mxu0 0.0
        %2202 = vmatprep.subr.mxu0 0.0
        %2203 = vmatpush1.xpose.msra.mxu0 0.0
        %2204 = vmatprep.subr.mxu0 0.0
        %2205 = vmatpush1.xpose.msra.mxu0 0.0
        %2206 = vmatprep.subr.mxu0 0.0
        %2207 = vmatpush1.xpose.msra.mxu0 0.0
        %2208 = vmatprep.subr.mxu0 0.0
        %2209 = vmatpush1.xpose.msra.mxu0 0.0
        %2210 = vmatprep.subr.mxu0 0.0
        %2211 = vmatpush1.xpose.msra.mxu0 0.0
        %2212 = vmatprep.subr.mxu0 0.0
        %2213 = vmatpush1.xpose.msra.mxu0 0.0
        %2214 = vmatprep.subr.mxu0 0.0
        %2215 = vmatpush1.xpose.msra.mxu0 0.0
        %2216 = vmatprep.subr.mxu0 0.0
        %2217 = vmatpush1.xpose.msra.mxu0 0.0
        %2218 = vmatprep.subr.mxu0 0.0
        %2219 = vmatpush1.xpose.msra.mxu0 0.0
        %2220 = vmatprep.subr.mxu0 0.0
        %2221 = vmatpush1.xpose.msra.mxu0 0.0
        %2222 = vmatprep.subr.mxu0 0.0
        %2223 = vmatpush1.xpose.msra.mxu0 0.0
        %2224 = vmatprep.subr.mxu0 0.0
        %2225 = vmatpush1.xpose.msra.mxu0 0.0
        %2226 = vmatprep.subr.mxu0 0.0
        %2227 = vmatpush1.xpose.msra.mxu0 0.0
        %2228 = vmatprep.subr.mxu0 0.0
        %2229 = vmatpush1.xpose.msra.mxu0 0.0
        %2230 = vmatprep.subr.mxu0 0.0
        %2231 = vmatpush1.xpose.msra.mxu0 0.0
        %2232 = vmatprep.subr.mxu0 0.0
        %2233 = vmatpush1.xpose.msra.mxu0 0.0
        %2234 = vmatprep.subr.mxu0 0.0
        %2235 = vmatpush1.xpose.msra.mxu0 0.0
        %2236 = vmatprep.subr.mxu0 0.0
        %2237 = vmatpush1.xpose.msra.mxu0 0.0
        %2238 = vmatprep.subr.mxu0 0.0
        %2239 = vmatpush1.xpose.msra.mxu0 0.0
        %2240 = vmatprep.mubr.f32.mxu0 0.0
        %2241 = vmatmul.mubr.f32.gmra.mrb[0].mxu0 %v2172
        %v2242 = vpop.f32.mrb[0].mxu0
        %v2243 = vadd.f32 0.0, %v2242
        %v2244 = vpop.f32.mrb[0].mxu0
        %2245 = vdwg.mxu0
        %v2246 = vsel %vm590, %v2243, -inf
        %2247 = vmax.xlane.f32.xlu0 %v2246
        %v2248 = vpop.xlane.xlu0 %2247
        %v2249 = vsub.f32 %v2243, %v2248
        %v2250 = vmul.f32 %v2249, 1.442695
        %v2251 = vpow.pop %v2250
        %v2252 = vsel %vm590, %v2251, 0.0
        %2253 = vadd.xlane.f32.xlu0 %v2252
        %v2254 = vpop.xlane.xlu0 %2253
        %v2255 = vrcp.pop %v2254
        %v2256 = vmul.f32 %v2251, %v2255
        %2257 = vrot.lane.b32.xlu0 %v2164, 64
        %v2258 = vpop.permute.xlu0 %2257
        %v2261 = vsel %vm590, %v2256, 0
        %2263 = vmatprep.subr.mxu0 0.0
        %2264 = vmatpush1.msra.mxu0 %v2258
        %2265 = vmatprep.subr.mxu0 0.0
        %2266 = vmatpush1.msra.mxu0 0.0
        %2267 = vmatprep.subr.mxu0 0.0
        %2268 = vmatpush1.msra.mxu0 0.0
        %2269 = vmatprep.subr.mxu0 0.0
        %2270 = vmatpush1.msra.mxu0 0.0
        %2271 = vmatprep.subr.mxu0 0.0
        %2272 = vmatpush1.msra.mxu0 0.0
        %2273 = vmatprep.subr.mxu0 0.0
        %2274 = vmatpush1.msra.mxu0 0.0
        %2275 = vmatprep.subr.mxu0 0.0
        %2276 = vmatpush1.msra.mxu0 0.0
        %2277 = vmatprep.subr.mxu0 0.0
        %2278 = vmatpush1.msra.mxu0 0.0
        %2279 = vmatprep.subr.mxu0 0.0
        %2280 = vmatpush1.msra.mxu0 0.0
        %2281 = vmatprep.subr.mxu0 0.0
        %2282 = vmatpush1.msra.mxu0 0.0
        %2283 = vmatprep.subr.mxu0 0.0
        %2284 = vmatpush1.msra.mxu0 0.0
        %2285 = vmatprep.subr.mxu0 0.0
        %2286 = vmatpush1.msra.mxu0 0.0
        %2287 = vmatprep.subr.mxu0 0.0
        %2288 = vmatpush1.msra.mxu0 0.0
        %2289 = vmatprep.subr.mxu0 0.0
        %2290 = vmatpush1.msra.mxu0 0.0
        %2291 = vmatprep.subr.mxu0 0.0
        %2292 = vmatpush1.msra.mxu0 0.0
        %2293 = vmatprep.subr.mxu0 0.0
        %2294 = vmatpush1.msra.mxu0 0.0
        %2295 = vmatprep.subr.mxu0 0.0
        %2296 = vmatpush1.msra.mxu0 0.0
        %2297 = vmatprep.subr.mxu0 0.0
        %2298 = vmatpush1.msra.mxu0 0.0
        %2299 = vmatprep.subr.mxu0 0.0
        %2300 = vmatpush1.msra.mxu0 0.0
        %2301 = vmatprep.subr.mxu0 0.0
        %2302 = vmatpush1.msra.mxu0 0.0
        %2303 = vmatprep.subr.mxu0 0.0
        %2304 = vmatpush1.msra.mxu0 0.0
        %2305 = vmatprep.subr.mxu0 0.0
        %2306 = vmatpush1.msra.mxu0 0.0
        %2307 = vmatprep.subr.mxu0 0.0
        %2308 = vmatpush1.msra.mxu0 0.0
        %2309 = vmatprep.subr.mxu0 0.0
        %2310 = vmatpush1.msra.mxu0 0.0
        %2311 = vmatprep.subr.mxu0 0.0
        %2312 = vmatpush1.msra.mxu0 0.0
        %2313 = vmatprep.subr.mxu0 0.0
        %2314 = vmatpush1.msra.mxu0 0.0
        %2315 = vmatprep.subr.mxu0 0.0
        %2316 = vmatpush1.msra.mxu0 0.0
        %2317 = vmatprep.subr.mxu0 0.0
        %2318 = vmatpush1.msra.mxu0 0.0
        %2319 = vmatprep.subr.mxu0 0.0
        %2320 = vmatpush1.msra.mxu0 0.0
        %2321 = vmatprep.subr.mxu0 0.0
        %2322 = vmatpush1.msra.mxu0 0.0
        %2323 = vmatprep.subr.mxu0 0.0
        %2324 = vmatpush1.msra.mxu0 0.0
        %2325 = vmatprep.subr.mxu0 0.0
        %2326 = vmatpush1.msra.mxu0 0.0
        %2327 = vmatprep.mubr.f32.mxu0 0.0
        %2328 = vmatmul.mubr.f32.gmra.mrb[0].mxu0 %v2261
        %v2329 = vpop.f32.mrb[0].mxu0
        %v2330 = vadd.f32 0.0, %v2329
        %v2331 = vpop.f32.mrb[0].mxu0
        %2332 = vdwg.mxu0
        %2333 = vrot.lane.b32.xlu0 %v2167, 112
        %v2334 = vpop.permute.xlu0 %2333
        %2335 = vrot.lane.b32.xlu0 %v2164, 80
        %v2336 = vpop.permute.xlu0 %2335
        %v2337 = vsel %vm514, %v2334, 0
        %v2339 = vsel %vm514, %v2336, 0
        %2341 = vmatprep.subr.mxu0 0.0
        %2342 = vmatpush1.xpose.msra.mxu0 %v2339
        %2343 = vmatprep.subr.mxu0 0.0
        %2344 = vmatpush1.xpose.msra.mxu0 0.0
        %2345 = vmatprep.subr.mxu0 0.0
        %2346 = vmatpush1.xpose.msra.mxu0 0.0
        %2347 = vmatprep.subr.mxu0 0.0
        %2348 = vmatpush1.xpose.msra.mxu0 0.0
        %2349 = vmatprep.subr.mxu0 0.0
        %2350 = vmatpush1.xpose.msra.mxu0 0.0
        %2351 = vmatprep.subr.mxu0 0.0
        %2352 = vmatpush1.xpose.msra.mxu0 0.0
        %2353 = vmatprep.subr.mxu0 0.0
        %2354 = vmatpush1.xpose.msra.mxu0 0.0
        %2355 = vmatprep.subr.mxu0 0.0
        %2356 = vmatpush1.xpose.msra.mxu0 0.0
        %2357 = vmatprep.subr.mxu0 0.0
        %2358 = vmatpush1.xpose.msra.mxu0 0.0
        %2359 = vmatprep.subr.mxu0 0.0
        %2360 = vmatpush1.xpose.msra.mxu0 0.0
        %2361 = vmatprep.subr.mxu0 0.0
        %2362 = vmatpush1.xpose.msra.mxu0 0.0
        %2363 = vmatprep.subr.mxu0 0.0
        %2364 = vmatpush1.xpose.msra.mxu0 0.0
        %2365 = vmatprep.subr.mxu0 0.0
        %2366 = vmatpush1.xpose.msra.mxu0 0.0
        %2367 = vmatprep.subr.mxu0 0.0
        %2368 = vmatpush1.xpose.msra.mxu0 0.0
        %2369 = vmatprep.subr.mxu0 0.0
        %2370 = vmatpush1.xpose.msra.mxu0 0.0
        %2371 = vmatprep.subr.mxu0 0.0
        %2372 = vmatpush1.xpose.msra.mxu0 0.0
        %2373 = vmatprep.subr.mxu0 0.0
        %2374 = vmatpush1.xpose.msra.mxu0 0.0
        %2375 = vmatprep.subr.mxu0 0.0
        %2376 = vmatpush1.xpose.msra.mxu0 0.0
        %2377 = vmatprep.subr.mxu0 0.0
        %2378 = vmatpush1.xpose.msra.mxu0 0.0
        %2379 = vmatprep.subr.mxu0 0.0
        %2380 = vmatpush1.xpose.msra.mxu0 0.0
        %2381 = vmatprep.subr.mxu0 0.0
        %2382 = vmatpush1.xpose.msra.mxu0 0.0
        %2383 = vmatprep.subr.mxu0 0.0
        %2384 = vmatpush1.xpose.msra.mxu0 0.0
        %2385 = vmatprep.subr.mxu0 0.0
        %2386 = vmatpush1.xpose.msra.mxu0 0.0
        %2387 = vmatprep.subr.mxu0 0.0
        %2388 = vmatpush1.xpose.msra.mxu0 0.0
        %2389 = vmatprep.subr.mxu0 0.0
        %2390 = vmatpush1.xpose.msra.mxu0 0.0
        %2391 = vmatprep.subr.mxu0 0.0
        %2392 = vmatpush1.xpose.msra.mxu0 0.0
        %2393 = vmatprep.subr.mxu0 0.0
        %2394 = vmatpush1.xpose.msra.mxu0 0.0
        %2395 = vmatprep.subr.mxu0 0.0
        %2396 = vmatpush1.xpose.msra.mxu0 0.0
        %2397 = vmatprep.subr.mxu0 0.0
        %2398 = vmatpush1.xpose.msra.mxu0 0.0
        %2399 = vmatprep.subr.mxu0 0.0
        %2400 = vmatpush1.xpose.msra.mxu0 0.0
        %2401 = vmatprep.subr.mxu0 0.0
        %2402 = vmatpush1.xpose.msra.mxu0 0.0
        %2403 = vmatprep.subr.mxu0 0.0
        %2404 = vmatpush1.xpose.msra.mxu0 0.0
        %2405 = vmatprep.mubr.f32.mxu0 0.0
        %2406 = vmatmul.mubr.f32.gmra.mrb[0].mxu0 %v2337
        %v2407 = vpop.f32.mrb[0].mxu0
        %v2408 = vadd.f32 0.0, %v2407
        %v2409 = vpop.f32.mrb[0].mxu0
        %2410 = vdwg.mxu0
        %v2411 = vsel %vm590, %v2408, -inf
        %2412 = vmax.xlane.f32.xlu0 %v2411
        %v2413 = vpop.xlane.xlu0 %2412
        %v2414 = vsub.f32 %v2408, %v2413
        %v2415 = vmul.f32 %v2414, 1.442695
        %v2416 = vpow.pop %v2415
        %v2417 = vsel %vm590, %v2416, 0.0
        %2418 = vadd.xlane.f32.xlu0 %v2417
        %v2419 = vpop.xlane.xlu0 %2418
        %v2420 = vrcp.pop %v2419
        %v2421 = vmul.f32 %v2416, %v2420
        %2422 = vrot.lane.b32.xlu0 %v2164, 48
        %v2423 = vpop.permute.xlu0 %2422
        %v2426 = vsel %vm590, %v2421, 0
        %2428 = vmatprep.subr.mxu0 0.0
        %2429 = vmatpush1.msra.mxu0 %v2423
        %2430 = vmatprep.subr.mxu0 0.0
        %2431 = vmatpush1.msra.mxu0 0.0
        %2432 = vmatprep.subr.mxu0 0.0
        %2433 = vmatpush1.msra.mxu0 0.0
        %2434 = vmatprep.subr.mxu0 0.0
        %2435 = vmatpush1.msra.mxu0 0.0
        %2436 = vmatprep.subr.mxu0 0.0
        %2437 = vmatpush1.msra.mxu0 0.0
        %2438 = vmatprep.subr.mxu0 0.0
        %2439 = vmatpush1.msra.mxu0 0.0
        %2440 = vmatprep.subr.mxu0 0.0
        %2441 = vmatpush1.msra.mxu0 0.0
        %2442 = vmatprep.subr.mxu0 0.0
        %2443 = vmatpush1.msra.mxu0 0.0
        %2444 = vmatprep.subr.mxu0 0.0
        %2445 = vmatpush1.msra.mxu0 0.0
        %2446 = vmatprep.subr.mxu0 0.0
        %2447 = vmatpush1.msra.mxu0 0.0
        %2448 = vmatprep.subr.mxu0 0.0
        %2449 = vmatpush1.msra.mxu0 0.0
        %2450 = vmatprep.subr.mxu0 0.0
        %2451 = vmatpush1.msra.mxu0 0.0
        %2452 = vmatprep.subr.mxu0 0.0
        %2453 = vmatpush1.msra.mxu0 0.0
        %2454 = vmatprep.subr.mxu0 0.0
        %2455 = vmatpush1.msra.mxu0 0.0
        %2456 = vmatprep.subr.mxu0 0.0
        %2457 = vmatpush1.msra.mxu0 0.0
        %2458 = vmatprep.subr.mxu0 0.0
        %2459 = vmatpush1.msra.mxu0 0.0
        %2460 = vmatprep.subr.mxu0 0.0
        %2461 = vmatpush1.msra.mxu0 0.0
        %2462 = vmatprep.subr.mxu0 0.0
        %2463 = vmatpush1.msra.mxu0 0.0
        %2464 = vmatprep.subr.mxu0 0.0
        %2465 = vmatpush1.msra.mxu0 0.0
        %2466 = vmatprep.subr.mxu0 0.0
        %2467 = vmatpush1.msra.mxu0 0.0
        %2468 = vmatprep.subr.mxu0 0.0
        %2469 = vmatpush1.msra.mxu0 0.0
        %2470 = vmatprep.subr.mxu0 0.0
        %2471 = vmatpush1.msra.mxu0 0.0
        %2472 = vmatprep.subr.mxu0 0.0
        %2473 = vmatpush1.msra.mxu0 0.0
        %2474 = vmatprep.subr.mxu0 0.0
        %2475 = vmatpush1.msra.mxu0 0.0
        %2476 = vmatprep.subr.mxu0 0.0
        %2477 = vmatpush1.msra.mxu0 0.0
        %2478 = vmatprep.subr.mxu0 0.0
        %2479 = vmatpush1.msra.mxu0 0.0
        %2480 = vmatprep.subr.mxu0 0.0
        %2481 = vmatpush1.msra.mxu0 0.0
        %2482 = vmatprep.subr.mxu0 0.0
        %2483 = vmatpush1.msra.mxu0 0.0
        %2484 = vmatprep.subr.mxu0 0.0
        %2485 = vmatpush1.msra.mxu0 0.0
        %2486 = vmatprep.subr.mxu0 0.0
        %2487 = vmatpush1.msra.mxu0 0.0
        %2488 = vmatprep.subr.mxu0 0.0
        %2489 = vmatpush1.msra.mxu0 0.0
        %2490 = vmatprep.subr.mxu0 0.0
        %2491 = vmatpush1.msra.mxu0 0.0
        %2492 = vmatprep.mubr.f32.mxu0 0.0
        %2493 = vmatmul.mubr.f32.gmra.mrb[0].mxu0 %v2426
        %v2494 = vpop.f32.mrb[0].mxu0
        %v2495 = vadd.f32 0.0, %v2494
        %v2496 = vpop.f32.mrb[0].mxu0
        %2497 = vdwg.mxu0
        %2499 = vrot.lane.b32.xlu0 %v2495, 16
        %v2500 = vpop.permute.xlu0 %2499
        %v2502 = vsel %vm514, %v2330, %v2500
        %s2503 = scalar_lea.vmem %s2, 32
        %v2504 = vld [vmem:[%s2503] sm:$0xff]
        %v2505 = vld [vmem:[%s2503 + $0x8] sm:$0xff]
        %v2506 = vld [vmem:[%s2503 + $0x10] sm:$0xff]
        %v2507 = vld [vmem:[%s2503 + $0x18] sm:$0xff]
        %v2508 = vlaneseq
        %v2509 = vshrl.u32 %v2508, 7
        %v2510 = vsub.s32 0, %v2509
        %v2511 = vrot.slane %v2080, %v2510
        %v2513 = vsel %vm436, %v2502, 0
        %2515 = vmatprep.subr.mxu0 0.0
        %2516 = vmatpush1.msra.mxu0 %v2504
        %2517 = vmatprep.subr.mxu0 0.0
        %2518 = vmatpush1.msra.mxu0 %v2505
        %2519 = vmatprep.subr.mxu0 0.0
        %2520 = vmatpush1.msra.mxu0 %v2506
        %2521 = vmatprep.subr.mxu0 0.0
        %2522 = vmatpush1.msra.mxu0 %v2507
        %2523 = vmatprep.subr.mxu0 0.0
        %2524 = vmatpush1.msra.mxu0 0.0
        %2525 = vmatprep.subr.mxu0 0.0
        %2526 = vmatpush1.msra.mxu0 0.0
        %2527 = vmatprep.subr.mxu0 0.0
        %2528 = vmatpush1.msra.mxu0 0.0
        %2529 = vmatprep.subr.mxu0 0.0
        %2530 = vmatpush1.msra.mxu0 0.0
        %2531 = vmatprep.subr.mxu0 0.0
        %2532 = vmatpush1.msra.mxu0 0.0
        %2533 = vmatprep.subr.mxu0 0.0
        %2534 = vmatpush1.msra.mxu0 0.0
        %2535 = vmatprep.subr.mxu0 0.0
        %2536 = vmatpush1.msra.mxu0 0.0
        %2537 = vmatprep.subr.mxu0 0.0
        %2538 = vmatpush1.msra.mxu0 0.0
        %2539 = vmatprep.subr.mxu0 0.0
        %2540 = vmatpush1.msra.mxu0 0.0
        %2541 = vmatprep.subr.mxu0 0.0
        %2542 = vmatpush1.msra.mxu0 0.0
        %2543 = vmatprep.subr.mxu0 0.0
        %2544 = vmatpush1.msra.mxu0 0.0
        %2545 = vmatprep.subr.mxu0 0.0
        %2546 = vmatpush1.msra.mxu0 0.0
        %2547 = vmatprep.subr.mxu0 0.0
        %2548 = vmatpush1.msra.mxu0 0.0
        %2549 = vmatprep.subr.mxu0 0.0
        %2550 = vmatpush1.msra.mxu0 0.0
        %2551 = vmatprep.subr.mxu0 0.0
        %2552 = vmatpush1.msra.mxu0 0.0
        %2553 = vmatprep.subr.mxu0 0.0
        %2554 = vmatpush1.msra.mxu0 0.0
        %2555 = vmatprep.subr.mxu0 0.0
        %2556 = vmatpush1.msra.mxu0 0.0
        %2557 = vmatprep.subr.mxu0 0.0
        %2558 = vmatpush1.msra.mxu0 0.0
        %2559 = vmatprep.subr.mxu0 0.0
        %2560 = vmatpush1.msra.mxu0 0.0
        %2561 = vmatprep.subr.mxu0 0.0
        %2562 = vmatpush1.msra.mxu0 0.0
        %2563 = vmatprep.subr.mxu0 0.0
        %2564 = vmatpush1.msra.mxu0 0.0
        %2565 = vmatprep.subr.mxu0 0.0
        %2566 = vmatpush1.msra.mxu0 0.0
        %2567 = vmatprep.subr.mxu0 0.0
        %2568 = vmatpush1.msra.mxu0 0.0
        %2569 = vmatprep.subr.mxu0 0.0
        %2570 = vmatpush1.msra.mxu0 0.0
        %2571 = vmatprep.subr.mxu0 0.0
        %2572 = vmatpush1.msra.mxu0 0.0
        %2573 = vmatprep.subr.mxu0 0.0
        %2574 = vmatpush1.msra.mxu0 0.0
        %2575 = vmatprep.subr.mxu0 0.0
        %2576 = vmatpush1.msra.mxu0 0.0
        %2577 = vmatprep.subr.mxu0 0.0
        %2578 = vmatpush1.msra.mxu0 0.0
        %2579 = vmatprep.mubr.f32.mxu0 0.0
        %2580 = vmatmul.mubr.f32.gmra.mrb[0].mxu0 %v2513
        %v2581 = vpop.f32.mrb[0].mxu0
        %v2582 = vadd.f32 %v2511, %v2581
        %v2583 = vpop.f32.mrb[0].mxu0
        %2584 = vdwg.mxu0
        %2585 = vxpose.xlu0.b32.start [1/16] %v2078, 128
        %2586 = vxpose.xlu0.b32.cont [2/16] 0.0, 128
        %2587 = vxpose.xlu0.b32.cont [3/16] 0.0, 128
        %2588 = vxpose.xlu0.b32.cont [4/16] 0.0, 128
        %2589 = vxpose.xlu0.b32.cont [5/16] 0.0, 128
        %2590 = vxpose.xlu0.b32.cont [6/16] 0.0, 128
        %2591 = vxpose.xlu0.b32.cont [7/16] 0.0, 128
        %2592 = vxpose.xlu0.b32.cont [8/16] 0.0, 128
        %2593 = vxpose.xlu0.b32.cont [9/16] 0.0, 128
        %2594 = vxpose.xlu0.b32.cont [10/16] 0.0, 128
        %2595 = vxpose.xlu0.b32.cont [11/16] 0.0, 128
        %2596 = vxpose.xlu0.b32.cont [12/16] 0.0, 128
        %2597 = vxpose.xlu0.b32.cont [13/16] 0.0, 128
        %2598 = vxpose.xlu0.b32.cont [14/16] 0.0, 128
        %2599 = vxpose.xlu0.b32.cont [15/16] 0.0, 128
        %2600 = vxpose.xlu0.b32.end [16/16] 0.0, 128
        %v2601 = vpop.trf.xlu0
        %v2602 = vpop.trf.xlu0
        %v2603 = vpop.trf.xlu0
        %v2604 = vpop.trf.xlu0
        %v2605 = vpop.trf.xlu0
        %v2606 = vpop.trf.xlu0
        %v2607 = vpop.trf.xlu0
        %v2608 = vpop.trf.xlu0
        %v2609 = vpop.trf.xlu0
        %v2610 = vpop.trf.xlu0
        %v2611 = vpop.trf.xlu0
        %v2612 = vpop.trf.xlu0
        %v2613 = vpop.trf.xlu0
        %v2614 = vpop.trf.xlu0
        %v2615 = vpop.trf.xlu0
        %v2616 = vpop.trf.xlu0
        %s2617 = scalar_lea.vmem %s4, 8
        %v2618 = vld [vmem:[%s2617] sm:$0xff]
        %s2619 = scalar_lea.vmem %s6, 1
        %v2620 = vld [vmem:[%s2619] sm:$0x1]
        %v2622 = vlaneseq
        %v2623 = vshrl.u32 %v2622, 7
        %v2624 = vsub.s32 0, %v2623
        %v2625 = vrot.slane %v2620, %v2624
        %v2628 = vsel %vm590, %v2601, 0
        %v2631 = vsel %vm590, %v2602, 0
        %v2634 = vsel %vm590, %v2603, 0
        %v2637 = vsel %vm590, %v2604, 0
        %2639 = vmatprep.subr.mxu0 0.0
        %2640 = vmatpush1.msra.mxu0 %v2618
        %2641 = vmatprep.subr.mxu0 0.0
        %2642 = vmatpush1.msra.mxu0 0.0
        %2643 = vmatprep.subr.mxu0 0.0
        %2644 = vmatpush1.msra.mxu0 0.0
        %2645 = vmatprep.subr.mxu0 0.0
        %2646 = vmatpush1.msra.mxu0 0.0
        %2647 = vmatprep.subr.mxu0 0.0
        %2648 = vmatpush1.msra.mxu0 0.0
        %2649 = vmatprep.subr.mxu0 0.0
        %2650 = vmatpush1.msra.mxu0 0.0
        %2651 = vmatprep.subr.mxu0 0.0
        %2652 = vmatpush1.msra.mxu0 0.0
        %2653 = vmatprep.subr.mxu0 0.0
        %2654 = vmatpush1.msra.mxu0 0.0
        %2655 = vmatprep.subr.mxu0 0.0
        %2656 = vmatpush1.msra.mxu0 0.0
        %2657 = vmatprep.subr.mxu0 0.0
        %2658 = vmatpush1.msra.mxu0 0.0
        %2659 = vmatprep.subr.mxu0 0.0
        %2660 = vmatpush1.msra.mxu0 0.0
        %2661 = vmatprep.subr.mxu0 0.0
        %2662 = vmatpush1.msra.mxu0 0.0
        %2663 = vmatprep.subr.mxu0 0.0
        %2664 = vmatpush1.msra.mxu0 0.0
        %2665 = vmatprep.subr.mxu0 0.0
        %2666 = vmatpush1.msra.mxu0 0.0
        %2667 = vmatprep.subr.mxu0 0.0
        %2668 = vmatpush1.msra.mxu0 0.0
        %2669 = vmatprep.subr.mxu0 0.0
        %2670 = vmatpush1.msra.mxu0 0.0
        %2671 = vmatprep.subr.mxu0 0.0
        %2672 = vmatpush1.msra.mxu0 0.0
        %2673 = vmatprep.subr.mxu0 0.0
        %2674 = vmatpush1.msra.mxu0 0.0
        %2675 = vmatprep.subr.mxu0 0.0
        %2676 = vmatpush1.msra.mxu0 0.0
        %2677 = vmatprep.subr.mxu0 0.0
        %2678 = vmatpush1.msra.mxu0 0.0
        %2679 = vmatprep.subr.mxu0 0.0
        %2680 = vmatpush1.msra.mxu0 0.0
        %2681 = vmatprep.subr.mxu0 0.0
        %2682 = vmatpush1.msra.mxu0 0.0
        %2683 = vmatprep.subr.mxu0 0.0
        %2684 = vmatpush1.msra.mxu0 0.0
        %2685 = vmatprep.subr.mxu0 0.0
        %2686 = vmatpush1.msra.mxu0 0.0
        %2687 = vmatprep.subr.mxu0 0.0
        %2688 = vmatpush1.msra.mxu0 0.0
        %2689 = vmatprep.subr.mxu0 0.0
        %2690 = vmatpush1.msra.mxu0 0.0
        %2691 = vmatprep.subr.mxu0 0.0
        %2692 = vmatpush1.msra.mxu0 0.0
        %2693 = vmatprep.subr.mxu0 0.0
        %2694 = vmatpush1.msra.mxu0 0.0
        %2695 = vmatprep.subr.mxu0 0.0
        %2696 = vmatpush1.msra.mxu0 0.0
        %2697 = vmatprep.subr.mxu0 0.0
        %2698 = vmatpush1.msra.mxu0 0.0
        %2699 = vmatprep.subr.mxu0 0.0
        %2700 = vmatpush1.msra.mxu0 0.0
        %2701 = vmatprep.subr.mxu0 0.0
        %2702 = vmatpush1.msra.mxu0 0.0
        %2703 = vmatprep.mubr.f32.mxu0 0.0
        %2704 = vmatmul.mubr.f32.gmra.mrb[0].mxu0 %v2628
        %v2705 = vpop.f32.mrb[0].mxu0
        %v2706 = vadd.f32 %v2625, %v2705
        %v2707 = vpop.f32.mrb[0].mxu0
        %2708 = vmatprep.mubr.f32.mxu0 0.0
        %2709 = vmatmul.mubr.f32.gmra.mrb[0].mxu0 %v2631
        %v2710 = vpop.f32.mrb[0].mxu0
        %v2711 = vadd.f32 %v2625, %v2710
        %v2712 = vpop.f32.mrb[0].mxu0
        %2713 = vmatprep.mubr.f32.mxu0 0.0
        %2714 = vmatmul.mubr.f32.gmra.mrb[0].mxu0 %v2634
        %v2715 = vpop.f32.mrb[0].mxu0
        %v2716 = vadd.f32 %v2625, %v2715
        %v2717 = vpop.f32.mrb[0].mxu0
        %2718 = vmatprep.mubr.f32.mxu0 0.0
        %2719 = vmatmul.mubr.f32.gmra.mrb[0].mxu0 %v2637
        %v2720 = vpop.f32.mrb[0].mxu0
        %v2721 = vadd.f32 %v2625, %v2720
        %v2722 = vpop.f32.mrb[0].mxu0
        %2723 = vdwg.mxu0
        %v2724 = vmul.f32 %v2706, 0.5
        %v2725 = vmul.f32 %v2711, 0.5
        %v2726 = vmul.f32 %v2716, 0.5
        %v2727 = vmul.f32 %v2721, 0.5
        %2732 = vrot.lane.b32.xlu0 %v2706, 120
        %v2733 = vpop.permute.xlu0 %2732
        %2734 = vrot.lane.b32.xlu0 %v2711, 120
        %v2735 = vpop.permute.xlu0 %2734
        %2736 = vrot.lane.b32.xlu0 %v2716, 120
        %v2737 = vpop.permute.xlu0 %2736
        %2738 = vrot.lane.b32.xlu0 %v2721, 120
        %v2739 = vpop.permute.xlu0 %2738
        %v2741 = vsel %vm1082, %v2724, 0
        %v2744 = vsel %vm1082, %v2725, 0
        %v2747 = vsel %vm1082, %v2726, 0
        %v2750 = vsel %vm1082, %v2727, 0
        %v2752 = vsel %vm1082, %v2733, 0
        %v2754 = vsel %vm1082, %v2735, 0
        %v2756 = vsel %vm1082, %v2737, 0
        %v2758 = vsel %vm1082, %v2739, 0
        %2760 = vmatprep.subr.mxu0 0.0
        %2761 = vmatpush1.xpose.msra.mxu0 %v2752
        %2762 = vmatprep.subr.mxu0 0.0
        %2763 = vmatpush1.xpose.msra.mxu0 %v2754
        %2764 = vmatprep.subr.mxu0 0.0
        %2765 = vmatpush1.xpose.msra.mxu0 %v2756
        %2766 = vmatprep.subr.mxu0 0.0
        %2767 = vmatpush1.xpose.msra.mxu0 %v2758
        %2768 = vmatprep.subr.mxu0 0.0
        %2769 = vmatpush1.xpose.msra.mxu0 0.0
        %2770 = vmatprep.subr.mxu0 0.0
        %2771 = vmatpush1.xpose.msra.mxu0 0.0
        %2772 = vmatprep.subr.mxu0 0.0
        %2773 = vmatpush1.xpose.msra.mxu0 0.0
        %2774 = vmatprep.subr.mxu0 0.0
        %2775 = vmatpush1.xpose.msra.mxu0 0.0
        %2776 = vmatprep.subr.mxu0 0.0
        %2777 = vmatpush1.xpose.msra.mxu0 0.0
        %2778 = vmatprep.subr.mxu0 0.0
        %2779 = vmatpush1.xpose.msra.mxu0 0.0
        %2780 = vmatprep.subr.mxu0 0.0
        %2781 = vmatpush1.xpose.msra.mxu0 0.0
        %2782 = vmatprep.subr.mxu0 0.0
        %2783 = vmatpush1.xpose.msra.mxu0 0.0
        %2784 = vmatprep.subr.mxu0 0.0
        %2785 = vmatpush1.xpose.msra.mxu0 0.0
        %2786 = vmatprep.subr.mxu0 0.0
        %2787 = vmatpush1.xpose.msra.mxu0 0.0
        %2788 = vmatprep.subr.mxu0 0.0
        %2789 = vmatpush1.xpose.msra.mxu0 0.0
        %2790 = vmatprep.subr.mxu0 0.0
        %2791 = vmatpush1.xpose.msra.mxu0 0.0
        %2792 = vmatprep.subr.mxu0 0.0
        %2793 = vmatpush1.xpose.msra.mxu0 0.0
        %2794 = vmatprep.subr.mxu0 0.0
        %2795 = vmatpush1.xpose.msra.mxu0 0.0
        %2796 = vmatprep.subr.mxu0 0.0
        %2797 = vmatpush1.xpose.msra.mxu0 0.0
        %2798 = vmatprep.subr.mxu0 0.0
        %2799 = vmatpush1.xpose.msra.mxu0 0.0
        %2800 = vmatprep.subr.mxu0 0.0
        %2801 = vmatpush1.xpose.msra.mxu0 0.0
        %2802 = vmatprep.subr.mxu0 0.0
        %2803 = vmatpush1.xpose.msra.mxu0 0.0
        %2804 = vmatprep.subr.mxu0 0.0
        %2805 = vmatpush1.xpose.msra.mxu0 0.0
        %2806 = vmatprep.subr.mxu0 0.0
        %2807 = vmatpush1.xpose.msra.mxu0 0.0
        %2808 = vmatprep.subr.mxu0 0.0
        %2809 = vmatpush1.xpose.msra.mxu0 0.0
        %2810 = vmatprep.subr.mxu0 0.0
        %2811 = vmatpush1.xpose.msra.mxu0 0.0
        %2812 = vmatprep.subr.mxu0 0.0
        %2813 = vmatpush1.xpose.msra.mxu0 0.0
        %2814 = vmatprep.subr.mxu0 0.0
        %2815 = vmatpush1.xpose.msra.mxu0 0.0
        %2816 = vmatprep.subr.mxu0 0.0
        %2817 = vmatpush1.xpose.msra.mxu0 0.0
        %2818 = vmatprep.subr.mxu0 0.0
        %2819 = vmatpush1.xpose.msra.mxu0 0.0
        %2820 = vmatprep.subr.mxu0 0.0
        %2821 = vmatpush1.xpose.msra.mxu0 0.0
        %2822 = vmatprep.subr.mxu0 0.0
        %2823 = vmatpush1.xpose.msra.mxu0 0.0
        %2824 = vmatprep.mubr.f32.mxu0 0.0
        %2825 = vmatmul.mubr.f32.gmra.mrb[0].mxu0 %v2741
        %v2826 = vpop.f32.mrb[0].mxu0
        %v2827 = vadd.f32 0.0, %v2826
        %v2828 = vpop.f32.mrb[0].mxu0
        %2829 = vmatprep.mubr.f32.mxu0 0.0
        %2830 = vmatmul.mubr.f32.gmra.mrb[0].mxu0 %v2744
        %v2831 = vpop.f32.mrb[0].mxu0
        %v2832 = vadd.f32 0.0, %v2831
        %v2833 = vpop.f32.mrb[0].mxu0
        %2834 = vmatprep.mubr.f32.mxu0 0.0
        %2835 = vmatmul.mubr.f32.gmra.mrb[0].mxu0 %v2747
        %v2836 = vpop.f32.mrb[0].mxu0
        %v2837 = vadd.f32 0.0, %v2836
        %v2838 = vpop.f32.mrb[0].mxu0
        %2839 = vmatprep.mubr.f32.mxu0 0.0
        %2840 = vmatmul.mubr.f32.gmra.mrb[0].mxu0 %v2750
        %v2841 = vpop.f32.mrb[0].mxu0
        %v2842 = vadd.f32 0.0, %v2841
        %v2843 = vpop.f32.mrb[0].mxu0
        %2844 = vdwg.mxu0
        %v2845 = vsel %vm436, %v2827, -inf
        %2846 = vmax.xlane.f32.xlu0 %v2845
        %v2847 = vpop.xlane.xlu0 %2846
        %v2848 = vsel %vm436, %v2832, -inf
        %2849 = vmax.xlane.f32.xlu0 %v2848
        %v2850 = vpop.xlane.xlu0 %2849
        %v2851 = vsel %vm436, %v2837, -inf
        %2852 = vmax.xlane.f32.xlu0 %v2851
        %v2853 = vpop.xlane.xlu0 %2852
        %v2854 = vsel %vm436, %v2842, -inf
        %2855 = vmax.xlane.f32.xlu0 %v2854
        %v2856 = vpop.xlane.xlu0 %2855
        %v2857 = vsub.f32 %v2827, %v2847
        %v2858 = vsub.f32 %v2832, %v2850
        %v2859 = vsub.f32 %v2837, %v2853
        %v2860 = vsub.f32 %v2842, %v2856
        %v2861 = vmul.f32 %v2857, 1.442695
        %v2862 = vpow.pop %v2861
        %v2863 = vmul.f32 %v2858, 1.442695
        %v2864 = vpow.pop %v2863
        %v2865 = vmul.f32 %v2859, 1.442695
        %v2866 = vpow.pop %v2865
        %v2867 = vmul.f32 %v2860, 1.442695
        %v2868 = vpow.pop %v2867
        %v2869 = vsel %vm436, %v2862, 0.0
        %2870 = vadd.xlane.f32.xlu0 %v2869
        %v2871 = vpop.xlane.xlu0 %2870
        %v2872 = vsel %vm436, %v2864, 0.0
        %2873 = vadd.xlane.f32.xlu0 %v2872
        %v2874 = vpop.xlane.xlu0 %2873
        %v2875 = vsel %vm436, %v2866, 0.0
        %2876 = vadd.xlane.f32.xlu0 %v2875
        %v2877 = vpop.xlane.xlu0 %2876
        %v2878 = vsel %vm436, %v2868, 0.0
        %2879 = vadd.xlane.f32.xlu0 %v2878
        %v2880 = vpop.xlane.xlu0 %2879
        %v2881 = vrcp.pop %v2871
        %v2882 = vrcp.pop %v2874
        %v2883 = vrcp.pop %v2877
        %v2884 = vrcp.pop %v2880
        %v2885 = vmul.f32 %v2862, %v2881
        %v2886 = vmul.f32 %v2864, %v2882
        %v2887 = vmul.f32 %v2866, %v2883
        %v2888 = vmul.f32 %v2868, %v2884
        %2889 = vrot.lane.b32.xlu0 %v2706, 112
        %v2890 = vpop.permute.xlu0 %2889
        %2891 = vrot.lane.b32.xlu0 %v2711, 112
        %v2892 = vpop.permute.xlu0 %2891
        %2893 = vrot.lane.b32.xlu0 %v2716, 112
        %v2894 = vpop.permute.xlu0 %2893
        %2895 = vrot.lane.b32.xlu0 %v2721, 112
        %v2896 = vpop.permute.xlu0 %2895
        %v2902 = vsel %vm436, %v2885, 0
        %v2905 = vsel %vm436, %v2886, 0
        %v2908 = vsel %vm436, %v2887, 0
        %v2911 = vsel %vm436, %v2888, 0
        %2913 = vmatprep.subr.mxu0 0.0
        %2914 = vmatpush1.msra.mxu0 %v2890
        %2915 = vmatprep.subr.mxu0 0.0
        %2916 = vmatpush1.msra.mxu0 %v2892
        %2917 = vmatprep.subr.mxu0 0.0
        %2918 = vmatpush1.msra.mxu0 %v2894
        %2919 = vmatprep.subr.mxu0 0.0
        %2920 = vmatpush1.msra.mxu0 %v2896
        %2921 = vmatprep.subr.mxu0 0.0
        %2922 = vmatpush1.msra.mxu0 0.0
        %2923 = vmatprep.subr.mxu0 0.0
        %2924 = vmatpush1.msra.mxu0 0.0
        %2925 = vmatprep.subr.mxu0 0.0
        %2926 = vmatpush1.msra.mxu0 0.0
        %2927 = vmatprep.subr.mxu0 0.0
        %2928 = vmatpush1.msra.mxu0 0.0
        %2929 = vmatprep.subr.mxu0 0.0
        %2930 = vmatpush1.msra.mxu0 0.0
        %2931 = vmatprep.subr.mxu0 0.0
        %2932 = vmatpush1.msra.mxu0 0.0
        %2933 = vmatprep.subr.mxu0 0.0
        %2934 = vmatpush1.msra.mxu0 0.0
        %2935 = vmatprep.subr.mxu0 0.0
        %2936 = vmatpush1.msra.mxu0 0.0
        %2937 = vmatprep.subr.mxu0 0.0
        %2938 = vmatpush1.msra.mxu0 0.0
        %2939 = vmatprep.subr.mxu0 0.0
        %2940 = vmatpush1.msra.mxu0 0.0
        %2941 = vmatprep.subr.mxu0 0.0
        %2942 = vmatpush1.msra.mxu0 0.0
        %2943 = vmatprep.subr.mxu0 0.0
        %2944 = vmatpush1.msra.mxu0 0.0
        %2945 = vmatprep.subr.mxu0 0.0
        %2946 = vmatpush1.msra.mxu0 0.0
        %2947 = vmatprep.subr.mxu0 0.0
        %2948 = vmatpush1.msra.mxu0 0.0
        %2949 = vmatprep.subr.mxu0 0.0
        %2950 = vmatpush1.msra.mxu0 0.0
        %2951 = vmatprep.subr.mxu0 0.0
        %2952 = vmatpush1.msra.mxu0 0.0
        %2953 = vmatprep.subr.mxu0 0.0
        %2954 = vmatpush1.msra.mxu0 0.0
        %2955 = vmatprep.subr.mxu0 0.0
        %2956 = vmatpush1.msra.mxu0 0.0
        %2957 = vmatprep.subr.mxu0 0.0
        %2958 = vmatpush1.msra.mxu0 0.0
        %2959 = vmatprep.subr.mxu0 0.0
        %2960 = vmatpush1.msra.mxu0 0.0
        %2961 = vmatprep.subr.mxu0 0.0
        %2962 = vmatpush1.msra.mxu0 0.0
        %2963 = vmatprep.subr.mxu0 0.0
        %2964 = vmatpush1.msra.mxu0 0.0
        %2965 = vmatprep.subr.mxu0 0.0
        %2966 = vmatpush1.msra.mxu0 0.0
        %2967 = vmatprep.subr.mxu0 0.0
        %2968 = vmatpush1.msra.mxu0 0.0
        %2969 = vmatprep.subr.mxu0 0.0
        %2970 = vmatpush1.msra.mxu0 0.0
        %2971 = vmatprep.subr.mxu0 0.0
        %2972 = vmatpush1.msra.mxu0 0.0
        %2973 = vmatprep.subr.mxu0 0.0
        %2974 = vmatpush1.msra.mxu0 0.0
        %2975 = vmatprep.subr.mxu0 0.0
        %2976 = vmatpush1.msra.mxu0 0.0
        %2977 = vmatprep.mubr.f32.mxu0 0.0
        %2978 = vmatmul.mubr.f32.gmra.mrb[0].mxu0 %v2902
        %v2979 = vpop.f32.mrb[0].mxu0
        %v2980 = vadd.f32 0.0, %v2979
        %v2981 = vpop.f32.mrb[0].mxu0
        %2982 = vmatprep.mubr.f32.mxu0 0.0
        %2983 = vmatmul.mubr.f32.gmra.mrb[0].mxu0 %v2905
        %v2984 = vpop.f32.mrb[0].mxu0
        %v2985 = vadd.f32 0.0, %v2984
        %v2986 = vpop.f32.mrb[0].mxu0
        %2987 = vmatprep.mubr.f32.mxu0 0.0
        %2988 = vmatmul.mubr.f32.gmra.mrb[0].mxu0 %v2908
        %v2989 = vpop.f32.mrb[0].mxu0
        %v2990 = vadd.f32 0.0, %v2989
        %v2991 = vpop.f32.mrb[0].mxu0
        %2992 = vmatprep.mubr.f32.mxu0 0.0
        %2993 = vmatmul.mubr.f32.gmra.mrb[0].mxu0 %v2911
        %v2994 = vpop.f32.mrb[0].mxu0
        %v2995 = vadd.f32 0.0, %v2994
        %v2996 = vpop.f32.mrb[0].mxu0
        %2997 = vdwg.mxu0
        %2998 = vrot.lane.b32.xlu0 %v2724, 124
        %v2999 = vpop.permute.xlu0 %2998
        %3000 = vrot.lane.b32.xlu0 %v2725, 124
        %v3001 = vpop.permute.xlu0 %3000
        %3002 = vrot.lane.b32.xlu0 %v2726, 124
        %v3003 = vpop.permute.xlu0 %3002
        %3004 = vrot.lane.b32.xlu0 %v2727, 124
        %v3005 = vpop.permute.xlu0 %3004
        %3006 = vrot.lane.b32.xlu0 %v2706, 116
        %v3007 = vpop.permute.xlu0 %3006
        %3008 = vrot.lane.b32.xlu0 %v2711, 116
        %v3009 = vpop.permute.xlu0 %3008
        %3010 = vrot.lane.b32.xlu0 %v2716, 116
        %v3011 = vpop.permute.xlu0 %3010
        %3012 = vrot.lane.b32.xlu0 %v2721, 116
        %v3013 = vpop.permute.xlu0 %3012
        %v3014 = vsel %vm1082, %v2999, 0
        %v3016 = vsel %vm1082, %v3001, 0
        %v3018 = vsel %vm1082, %v3003, 0
        %v3020 = vsel %vm1082, %v3005, 0
        %v3022 = vsel %vm1082, %v3007, 0
        %v3024 = vsel %vm1082, %v3009, 0
        %v3026 = vsel %vm1082, %v3011, 0
        %v3028 = vsel %vm1082, %v3013, 0
        %3030 = vmatprep.subr.mxu0 0.0
        %3031 = vmatpush1.xpose.msra.mxu0 %v3022
        %3032 = vmatprep.subr.mxu0 0.0
        %3033 = vmatpush1.xpose.msra.mxu0 %v3024
        %3034 = vmatprep.subr.mxu0 0.0
        %3035 = vmatpush1.xpose.msra.mxu0 %v3026
        %3036 = vmatprep.subr.mxu0 0.0
        %3037 = vmatpush1.xpose.msra.mxu0 %v3028
        %3038 = vmatprep.subr.mxu0 0.0
        %3039 = vmatpush1.xpose.msra.mxu0 0.0
        %3040 = vmatprep.subr.mxu0 0.0
        %3041 = vmatpush1.xpose.msra.mxu0 0.0
        %3042 = vmatprep.subr.mxu0 0.0
        %3043 = vmatpush1.xpose.msra.mxu0 0.0
        %3044 = vmatprep.subr.mxu0 0.0
        %3045 = vmatpush1.xpose.msra.mxu0 0.0
        %3046 = vmatprep.subr.mxu0 0.0
        %3047 = vmatpush1.xpose.msra.mxu0 0.0
        %3048 = vmatprep.subr.mxu0 0.0
        %3049 = vmatpush1.xpose.msra.mxu0 0.0
        %3050 = vmatprep.subr.mxu0 0.0
        %3051 = vmatpush1.xpose.msra.mxu0 0.0
        %3052 = vmatprep.subr.mxu0 0.0
        %3053 = vmatpush1.xpose.msra.mxu0 0.0
        %3054 = vmatprep.subr.mxu0 0.0
        %3055 = vmatpush1.xpose.msra.mxu0 0.0
        %3056 = vmatprep.subr.mxu0 0.0
        %3057 = vmatpush1.xpose.msra.mxu0 0.0
        %3058 = vmatprep.subr.mxu0 0.0
        %3059 = vmatpush1.xpose.msra.mxu0 0.0
        %3060 = vmatprep.subr.mxu0 0.0
        %3061 = vmatpush1.xpose.msra.mxu0 0.0
        %3062 = vmatprep.subr.mxu0 0.0
        %3063 = vmatpush1.xpose.msra.mxu0 0.0
        %3064 = vmatprep.subr.mxu0 0.0
        %3065 = vmatpush1.xpose.msra.mxu0 0.0
        %3066 = vmatprep.subr.mxu0 0.0
        %3067 = vmatpush1.xpose.msra.mxu0 0.0
        %3068 = vmatprep.subr.mxu0 0.0
        %3069 = vmatpush1.xpose.msra.mxu0 0.0
        %3070 = vmatprep.subr.mxu0 0.0
        %3071 = vmatpush1.xpose.msra.mxu0 0.0
        %3072 = vmatprep.subr.mxu0 0.0
        %3073 = vmatpush1.xpose.msra.mxu0 0.0
        %3074 = vmatprep.subr.mxu0 0.0
        %3075 = vmatpush1.xpose.msra.mxu0 0.0
        %3076 = vmatprep.subr.mxu0 0.0
        %3077 = vmatpush1.xpose.msra.mxu0 0.0
        %3078 = vmatprep.subr.mxu0 0.0
        %3079 = vmatpush1.xpose.msra.mxu0 0.0
        %3080 = vmatprep.subr.mxu0 0.0
        %3081 = vmatpush1.xpose.msra.mxu0 0.0
        %3082 = vmatprep.subr.mxu0 0.0
        %3083 = vmatpush1.xpose.msra.mxu0 0.0
        %3084 = vmatprep.subr.mxu0 0.0
        %3085 = vmatpush1.xpose.msra.mxu0 0.0
        %3086 = vmatprep.subr.mxu0 0.0
        %3087 = vmatpush1.xpose.msra.mxu0 0.0
        %3088 = vmatprep.subr.mxu0 0.0
        %3089 = vmatpush1.xpose.msra.mxu0 0.0
        %3090 = vmatprep.subr.mxu0 0.0
        %3091 = vmatpush1.xpose.msra.mxu0 0.0
        %3092 = vmatprep.subr.mxu0 0.0
        %3093 = vmatpush1.xpose.msra.mxu0 0.0
        %3094 = vmatprep.mubr.f32.mxu0 0.0
        %3095 = vmatmul.mubr.f32.gmra.mrb[0].mxu0 %v3014
        %v3096 = vpop.f32.mrb[0].mxu0
        %v3097 = vadd.f32 0.0, %v3096
        %v3098 = vpop.f32.mrb[0].mxu0
        %3099 = vmatprep.mubr.f32.mxu0 0.0
        %3100 = vmatmul.mubr.f32.gmra.mrb[0].mxu0 %v3016
        %v3101 = vpop.f32.mrb[0].mxu0
        %v3102 = vadd.f32 0.0, %v3101
        %v3103 = vpop.f32.mrb[0].mxu0
        %3104 = vmatprep.mubr.f32.mxu0 0.0
        %3105 = vmatmul.mubr.f32.gmra.mrb[0].mxu0 %v3018
        %v3106 = vpop.f32.mrb[0].mxu0
        %v3107 = vadd.f32 0.0, %v3106
        %v3108 = vpop.f32.mrb[0].mxu0
        %3109 = vmatprep.mubr.f32.mxu0 0.0
        %3110 = vmatmul.mubr.f32.gmra.mrb[0].mxu0 %v3020
        %v3111 = vpop.f32.mrb[0].mxu0
        %v3112 = vadd.f32 0.0, %v3111
        %v3113 = vpop.f32.mrb[0].mxu0
        %3114 = vdwg.mxu0
        %v3115 = vsel %vm436, %v3097, -inf
        %3116 = vmax.xlane.f32.xlu0 %v3115
        %v3117 = vpop.xlane.xlu0 %3116
        %v3118 = vsel %vm436, %v3102, -inf
        %3119 = vmax.xlane.f32.xlu0 %v3118
        %v3120 = vpop.xlane.xlu0 %3119
        %v3121 = vsel %vm436, %v3107, -inf
        %3122 = vmax.xlane.f32.xlu0 %v3121
        %v3123 = vpop.xlane.xlu0 %3122
        %v3124 = vsel %vm436, %v3112, -inf
        %3125 = vmax.xlane.f32.xlu0 %v3124
        %v3126 = vpop.xlane.xlu0 %3125
        %v3127 = vsub.f32 %v3097, %v3117
        %v3128 = vsub.f32 %v3102, %v3120
        %v3129 = vsub.f32 %v3107, %v3123
        %v3130 = vsub.f32 %v3112, %v3126
        %v3131 = vmul.f32 %v3127, 1.442695
        %v3132 = vpow.pop %v3131
        %v3133 = vmul.f32 %v3128, 1.442695
        %v3134 = vpow.pop %v3133
        %v3135 = vmul.f32 %v3129, 1.442695
        %v3136 = vpow.pop %v3135
        %v3137 = vmul.f32 %v3130, 1.442695
        %v3138 = vpow.pop %v3137
        %v3139 = vsel %vm436, %v3132, 0.0
        %3140 = vadd.xlane.f32.xlu0 %v3139
        %v3141 = vpop.xlane.xlu0 %3140
        %v3142 = vsel %vm436, %v3134, 0.0
        %3143 = vadd.xlane.f32.xlu0 %v3142
        %v3144 = vpop.xlane.xlu0 %3143
        %v3145 = vsel %vm436, %v3136, 0.0
        %3146 = vadd.xlane.f32.xlu0 %v3145
        %v3147 = vpop.xlane.xlu0 %3146
        %v3148 = vsel %vm436, %v3138, 0.0
        %3149 = vadd.xlane.f32.xlu0 %v3148
        %v3150 = vpop.xlane.xlu0 %3149
        %v3151 = vrcp.pop %v3141
        %v3152 = vrcp.pop %v3144
        %v3153 = vrcp.pop %v3147
        %v3154 = vrcp.pop %v3150
        %v3155 = vmul.f32 %v3132, %v3151
        %v3156 = vmul.f32 %v3134, %v3152
        %v3157 = vmul.f32 %v3136, %v3153
        %v3158 = vmul.f32 %v3138, %v3154
        %3159 = vrot.lane.b32.xlu0 %v2706, 108
        %v3160 = vpop.permute.xlu0 %3159
        %3161 = vrot.lane.b32.xlu0 %v2711, 108
        %v3162 = vpop.permute.xlu0 %3161
        %3163 = vrot.lane.b32.xlu0 %v2716, 108
        %v3164 = vpop.permute.xlu0 %3163
        %3165 = vrot.lane.b32.xlu0 %v2721, 108
        %v3166 = vpop.permute.xlu0 %3165
        %v3172 = vsel %vm436, %v3155, 0
        %v3175 = vsel %vm436, %v3156, 0
        %v3178 = vsel %vm436, %v3157, 0
        %v3181 = vsel %vm436, %v3158, 0
        %3183 = vmatprep.subr.mxu0 0.0
        %3184 = vmatpush1.msra.mxu0 %v3160
        %3185 = vmatprep.subr.mxu0 0.0
        %3186 = vmatpush1.msra.mxu0 %v3162
        %3187 = vmatprep.subr.mxu0 0.0
        %3188 = vmatpush1.msra.mxu0 %v3164
        %3189 = vmatprep.subr.mxu0 0.0
        %3190 = vmatpush1.msra.mxu0 %v3166
        %3191 = vmatprep.subr.mxu0 0.0
        %3192 = vmatpush1.msra.mxu0 0.0
        %3193 = vmatprep.subr.mxu0 0.0
        %3194 = vmatpush1.msra.mxu0 0.0
        %3195 = vmatprep.subr.mxu0 0.0
        %3196 = vmatpush1.msra.mxu0 0.0
        %3197 = vmatprep.subr.mxu0 0.0
        %3198 = vmatpush1.msra.mxu0 0.0
        %3199 = vmatprep.subr.mxu0 0.0
        %3200 = vmatpush1.msra.mxu0 0.0
        %3201 = vmatprep.subr.mxu0 0.0
        %3202 = vmatpush1.msra.mxu0 0.0
        %3203 = vmatprep.subr.mxu0 0.0
        %3204 = vmatpush1.msra.mxu0 0.0
        %3205 = vmatprep.subr.mxu0 0.0
        %3206 = vmatpush1.msra.mxu0 0.0
        %3207 = vmatprep.subr.mxu0 0.0
        %3208 = vmatpush1.msra.mxu0 0.0
        %3209 = vmatprep.subr.mxu0 0.0
        %3210 = vmatpush1.msra.mxu0 0.0
        %3211 = vmatprep.subr.mxu0 0.0
        %3212 = vmatpush1.msra.mxu0 0.0
        %3213 = vmatprep.subr.mxu0 0.0
        %3214 = vmatpush1.msra.mxu0 0.0
        %3215 = vmatprep.subr.mxu0 0.0
        %3216 = vmatpush1.msra.mxu0 0.0
        %3217 = vmatprep.subr.mxu0 0.0
        %3218 = vmatpush1.msra.mxu0 0.0
        %3219 = vmatprep.subr.mxu0 0.0
        %3220 = vmatpush1.msra.mxu0 0.0
        %3221 = vmatprep.subr.mxu0 0.0
        %3222 = vmatpush1.msra.mxu0 0.0
        %3223 = vmatprep.subr.mxu0 0.0
        %3224 = vmatpush1.msra.mxu0 0.0
        %3225 = vmatprep.subr.mxu0 0.0
        %3226 = vmatpush1.msra.mxu0 0.0
        %3227 = vmatprep.subr.mxu0 0.0
        %3228 = vmatpush1.msra.mxu0 0.0
        %3229 = vmatprep.subr.mxu0 0.0
        %3230 = vmatpush1.msra.mxu0 0.0
        %3231 = vmatprep.subr.mxu0 0.0
        %3232 = vmatpush1.msra.mxu0 0.0
        %3233 = vmatprep.subr.mxu0 0.0
        %3234 = vmatpush1.msra.mxu0 0.0
        %3235 = vmatprep.subr.mxu0 0.0
        %3236 = vmatpush1.msra.mxu0 0.0
        %3237 = vmatprep.subr.mxu0 0.0
        %3238 = vmatpush1.msra.mxu0 0.0
        %3239 = vmatprep.subr.mxu0 0.0
        %3240 = vmatpush1.msra.mxu0 0.0
        %3241 = vmatprep.subr.mxu0 0.0
        %3242 = vmatpush1.msra.mxu0 0.0
        %3243 = vmatprep.subr.mxu0 0.0
        %3244 = vmatpush1.msra.mxu0 0.0
        %3245 = vmatprep.subr.mxu0 0.0
        %3246 = vmatpush1.msra.mxu0 0.0
        %3247 = vmatprep.mubr.f32.mxu0 0.0
        %3248 = vmatmul.mubr.f32.gmra.mrb[0].mxu0 %v3172
        %v3249 = vpop.f32.mrb[0].mxu0
        %v3250 = vadd.f32 0.0, %v3249
        %v3251 = vpop.f32.mrb[0].mxu0
        %3252 = vmatprep.mubr.f32.mxu0 0.0
        %3253 = vmatmul.mubr.f32.gmra.mrb[0].mxu0 %v3175
        %v3254 = vpop.f32.mrb[0].mxu0
        %v3255 = vadd.f32 0.0, %v3254
        %v3256 = vpop.f32.mrb[0].mxu0
        %3257 = vmatprep.mubr.f32.mxu0 0.0
        %3258 = vmatmul.mubr.f32.gmra.mrb[0].mxu0 %v3178
        %v3259 = vpop.f32.mrb[0].mxu0
        %v3260 = vadd.f32 0.0, %v3259
        %v3261 = vpop.f32.mrb[0].mxu0
        %3262 = vmatprep.mubr.f32.mxu0 0.0
        %3263 = vmatmul.mubr.f32.gmra.mrb[0].mxu0 %v3181
        %v3264 = vpop.f32.mrb[0].mxu0
        %v3265 = vadd.f32 0.0, %v3264
        %v3266 = vpop.f32.mrb[0].mxu0
        %3267 = vdwg.mxu0
        %3272 = vrot.lane.b32.xlu0 %v3250, 4
        %v3273 = vpop.permute.xlu0 %3272
        %3274 = vrot.lane.b32.xlu0 %v3255, 4
        %v3275 = vpop.permute.xlu0 %3274
        %3276 = vrot.lane.b32.xlu0 %v3260, 4
        %v3277 = vpop.permute.xlu0 %3276
        %3278 = vrot.lane.b32.xlu0 %v3265, 4
        %v3279 = vpop.permute.xlu0 %3278
        %v3284 = vsel %vm1082, %v2980, %v3273
        %v3285 = vsel %vm1082, %v2985, %v3275
        %v3286 = vsel %vm1082, %v2990, %v3277
        %v3287 = vsel %vm1082, %v2995, %v3279
        %s3288 = scalar_lea.vmem %s5, 8
        %v3289 = vld [vmem:[%s3288] sm:$0xff]
        %v3291 = vsel %vm590, %v3284, 0
        %v3294 = vsel %vm590, %v3285, 0
        %v3297 = vsel %vm590, %v3286, 0
        %v3300 = vsel %vm590, %v3287, 0
        %3302 = vmatprep.subr.mxu0 0.0
        %3303 = vmatpush1.msra.mxu0 %v3289
        %3304 = vmatprep.subr.mxu0 0.0
        %3305 = vmatpush1.msra.mxu0 0.0
        %3306 = vmatprep.subr.mxu0 0.0
        %3307 = vmatpush1.msra.mxu0 0.0
        %3308 = vmatprep.subr.mxu0 0.0
        %3309 = vmatpush1.msra.mxu0 0.0
        %3310 = vmatprep.subr.mxu0 0.0
        %3311 = vmatpush1.msra.mxu0 0.0
        %3312 = vmatprep.subr.mxu0 0.0
        %3313 = vmatpush1.msra.mxu0 0.0
        %3314 = vmatprep.subr.mxu0 0.0
        %3315 = vmatpush1.msra.mxu0 0.0
        %3316 = vmatprep.subr.mxu0 0.0
        %3317 = vmatpush1.msra.mxu0 0.0
        %3318 = vmatprep.subr.mxu0 0.0
        %3319 = vmatpush1.msra.mxu0 0.0
        %3320 = vmatprep.subr.mxu0 0.0
        %3321 = vmatpush1.msra.mxu0 0.0
        %3322 = vmatprep.subr.mxu0 0.0
        %3323 = vmatpush1.msra.mxu0 0.0
        %3324 = vmatprep.subr.mxu0 0.0
        %3325 = vmatpush1.msra.mxu0 0.0
        %3326 = vmatprep.subr.mxu0 0.0
        %3327 = vmatpush1.msra.mxu0 0.0
        %3328 = vmatprep.subr.mxu0 0.0
        %3329 = vmatpush1.msra.mxu0 0.0
        %3330 = vmatprep.subr.mxu0 0.0
        %3331 = vmatpush1.msra.mxu0 0.0
        %3332 = vmatprep.subr.mxu0 0.0
        %3333 = vmatpush1.msra.mxu0 0.0
        %3334 = vmatprep.subr.mxu0 0.0
        %3335 = vmatpush1.msra.mxu0 0.0
        %3336 = vmatprep.subr.mxu0 0.0
        %3337 = vmatpush1.msra.mxu0 0.0
        %3338 = vmatprep.subr.mxu0 0.0
        %3339 = vmatpush1.msra.mxu0 0.0
        %3340 = vmatprep.subr.mxu0 0.0
        %3341 = vmatpush1.msra.mxu0 0.0
        %3342 = vmatprep.subr.mxu0 0.0
        %3343 = vmatpush1.msra.mxu0 0.0
        %3344 = vmatprep.subr.mxu0 0.0
        %3345 = vmatpush1.msra.mxu0 0.0
        %3346 = vmatprep.subr.mxu0 0.0
        %3347 = vmatpush1.msra.mxu0 0.0
        %3348 = vmatprep.subr.mxu0 0.0
        %3349 = vmatpush1.msra.mxu0 0.0
        %3350 = vmatprep.subr.mxu0 0.0
        %3351 = vmatpush1.msra.mxu0 0.0
        %3352 = vmatprep.subr.mxu0 0.0
        %3353 = vmatpush1.msra.mxu0 0.0
        %3354 = vmatprep.subr.mxu0 0.0
        %3355 = vmatpush1.msra.mxu0 0.0
        %3356 = vmatprep.subr.mxu0 0.0
        %3357 = vmatpush1.msra.mxu0 0.0
        %3358 = vmatprep.subr.mxu0 0.0
        %3359 = vmatpush1.msra.mxu0 0.0
        %3360 = vmatprep.subr.mxu0 0.0
        %3361 = vmatpush1.msra.mxu0 0.0
        %3362 = vmatprep.subr.mxu0 0.0
        %3363 = vmatpush1.msra.mxu0 0.0
        %3364 = vmatprep.subr.mxu0 0.0
        %3365 = vmatpush1.msra.mxu0 0.0
        %3366 = vmatprep.mubr.f32.mxu0 0.0
        %3367 = vmatmul.mubr.f32.gmra.mrb[0].mxu0 %v3291
        %v3368 = vpop.f32.mrb[0].mxu0
        %v3369 = vadd.f32 0.0, %v3368
        %v3370 = vpop.f32.mrb[0].mxu0
        %3371 = vmatprep.mubr.f32.mxu0 0.0
        %3372 = vmatmul.mubr.f32.gmra.mrb[0].mxu0 %v3294
        %v3373 = vpop.f32.mrb[0].mxu0
        %v3374 = vadd.f32 0.0, %v3373
        %v3375 = vpop.f32.mrb[0].mxu0
        %3376 = vmatprep.mubr.f32.mxu0 0.0
        %3377 = vmatmul.mubr.f32.gmra.mrb[0].mxu0 %v3297
        %v3378 = vpop.f32.mrb[0].mxu0
        %v3379 = vadd.f32 0.0, %v3378
        %v3380 = vpop.f32.mrb[0].mxu0
        %3381 = vmatprep.mubr.f32.mxu0 0.0
        %3382 = vmatmul.mubr.f32.gmra.mrb[0].mxu0 %v3300
        %v3383 = vpop.f32.mrb[0].mxu0
        %v3384 = vadd.f32 0.0, %v3383
        %v3385 = vpop.f32.mrb[0].mxu0
        %3386 = vdwg.mxu0
        %3387 = vxpose.xlu0.b32.start [1/16] %v3369, 128
        %3388 = vxpose.xlu0.b32.cont [2/16] %v3374, 128
        %3389 = vxpose.xlu0.b32.cont [3/16] %v3379, 128
        %3390 = vxpose.xlu0.b32.cont [4/16] %v3384, 128
        %3391 = vxpose.xlu0.b32.cont [5/16] 0.0, 128
        %3392 = vxpose.xlu0.b32.cont [6/16] 0.0, 128
        %3393 = vxpose.xlu0.b32.cont [7/16] 0.0, 128
        %3394 = vxpose.xlu0.b32.cont [8/16] 0.0, 128
        %3395 = vxpose.xlu0.b32.cont [9/16] 0.0, 128
        %3396 = vxpose.xlu0.b32.cont [10/16] 0.0, 128
        %3397 = vxpose.xlu0.b32.cont [11/16] 0.0, 128
        %3398 = vxpose.xlu0.b32.cont [12/16] 0.0, 128
        %3399 = vxpose.xlu0.b32.cont [13/16] 0.0, 128
        %3400 = vxpose.xlu0.b32.cont [14/16] 0.0, 128
        %3401 = vxpose.xlu0.b32.cont [15/16] 0.0, 128
        %3402 = vxpose.xlu0.b32.end [16/16] 0.0, 128
        %v3403 = vpop.trf.xlu0
        %v3404 = vpop.trf.xlu0
        %v3405 = vpop.trf.xlu0
        %v3406 = vpop.trf.xlu0
        %v3407 = vpop.trf.xlu0
        %v3408 = vpop.trf.xlu0
        %v3409 = vpop.trf.xlu0
        %v3410 = vpop.trf.xlu0
        %v3411 = vpop.trf.xlu0
        %v3412 = vpop.trf.xlu0
        %v3413 = vpop.trf.xlu0
        %v3414 = vpop.trf.xlu0
        %v3415 = vpop.trf.xlu0
        %v3416 = vpop.trf.xlu0
        %v3417 = vpop.trf.xlu0
        %v3418 = vpop.trf.xlu0
        %s3419 = scalar_lea.vmem %s7, 8
        %v3420 = vld [vmem:[%s3419] sm:$0xff]
        %3422 = vset.pattern.permute.xlu0 0
        %3423 = vperm.xlu0 %3422, %v3420
        %v3424 = vpop.permute.xlu0 %3423
        %v3426 = vadd.f32 %v3403, %v3424
        %v3427 = vadd.f32 %v2078, %v2582
        %v3428 = vadd.f32 %v3427, %v3426
        %v3429 = vsel %vm436, %v3428, 0.0
        %3430 = vadd.xlane.f32.xlu0 %v3429
        %v3431 = vpop.xlane.xlu0 %3430
        %v3432 = vmul.f32 %v3431, %v1773
        %v3433 = vsub.f32 %v3428, %v3432
        %v3434 = vmul.f32 %v3433, %v3433
        %v3435 = vsel %vm436, %v3434, 0.0
        %3436 = vadd.xlane.f32.xlu0 %v3435
        %v3437 = vpop.xlane.xlu0 %3436
        %v3438 = vmul.f32 %v3437, %v1773
        %v3439 = vadd.f32 %v3438, 1e-05
        %v3440 = vrsqrt.pop %v3439
        %v3441 = vmul.f32 %v3433, %v3440
        %v3442 = vlaneseq
        %v3443 = vshrl.u32 %v3442, 7
        %v3444 = vsub.s32 1, %v3443
        %v3445 = vrot.slane %v2080, %v3444
        %v3446 = vmul.f32 %v3441, %v3445
        %v3447 = vlaneseq
        %v3448 = vshrl.u32 %v3447, 7
        %v3449 = vsub.s32 2, %v3448
        %v3450 = vrot.slane %v2080, %v3449
        %v3451 = vadd.f32 %v3446, %v3450
        %s3452 = sld [smem:[#allocation2 + $0x80]]
        %s3453 = sld [smem:[#allocation2 + $0x81]]
        %s3454 = sld [smem:[#allocation2 + $0x82]]
        %s3455 = sld [smem:[#allocation2 + $0x83]]
        %v3456 = vstv %s3452
        %v3457 = vmul.f32 %v3451, %v3456
        %v3458 = vstv %s3453
        %v3459 = vadd.f32 %v3457, %v3458
        %v3460 = vmax.f32 %v3459, 0.0
        %v3462 = vrot.slane %v3460, 6
        %v3464 = vsel %vm1806, 0.0, %v3462
        %v3465 = vsel %vm1806, %v3462, 0.0
        %v3468 = vrot.slane %v3464, 1
        %v3469 = vrot.slane %v3465, 1
        %v3470 = vsel %vm1811, %v3468, %v3469
        %3471 = vrot.lane.b32.xlu0 %v3470, 32
        %v3472 = vpop.permute.xlu0 %3471
        %3473 = vrot.lane.b32.xlu0 %v3469, 32
        %v3474 = vpop.permute.xlu0 %3473
        %v3477 = vrot.slane %v3464, 2
        %v3478 = vrot.slane %v3465, 2
        %v3479 = vsel %vm1821, %v3477, %v3478
        %3480 = vrot.lane.b32.xlu0 %v3479, 64
        %v3481 = vpop.permute.xlu0 %3480
        %3482 = vrot.lane.b32.xlu0 %v3478, 64
        %v3483 = vpop.permute.xlu0 %3482
        %v3486 = vsel %vm436, %v3464, %v3472
        %v3487 = vsel %vm436, %v3465, %v3474
        %v3488 = vsel %vm1833, %v3486, %v3481
        %v3489 = vsel %vm1833, %v3487, %v3483
        %s3490 = scalar_lea.vmem %s9, 96
        %v3491 = vld [vmem:[%s3490] sm:$0xff]
        %v3492 = vld [vmem:[%s3490 + $0x8] sm:$0xff]
        %v3493 = vld [vmem:[%s3490 + $0x10] sm:$0xff]
        %v3494 = vld [vmem:[%s3490 + $0x18] sm:$0xff]
        %v3495 = vld [vmem:[%s3490 + $0x20] sm:$0xff]
        %v3496 = vld [vmem:[%s3490 + $0x28] sm:$0xff]
        %v3497 = vld [vmem:[%s3490 + $0x30] sm:$0xff]
        %v3498 = vld [vmem:[%s3490 + $0x38] sm:$0xff]
        %v3499 = vld [vmem:[%s3490 + $0x40] sm:$0xff]
        %v3500 = vld [vmem:[%s3490 + $0x48] sm:$0xff]
        %v3501 = vld [vmem:[%s3490 + $0x50] sm:$0xff]
        %v3502 = vld [vmem:[%s3490 + $0x58] sm:$0xff]
        %v3503 = vstv %s3454
        %v3506 = vrot.slane %v3488, 1
        %v3507 = vrot.slane %v3489, 1
        %v3508 = vsel %vm1811, %v3506, %v3507
        %v3509 = vsel %vm1854, %v3508, 0
        %3511 = vmatprep.subr.mxu0 0.0
        %3512 = vmatpush1.msra.mxu0 %v3491
        %3513 = vmatprep.subr.mxu0 0.0
        %3514 = vmatpush1.msra.mxu0 %v3492
        %3515 = vmatprep.subr.mxu0 0.0
        %3516 = vmatpush1.msra.mxu0 %v3493
        %3517 = vmatprep.subr.mxu0 0.0
        %3518 = vmatpush1.msra.mxu0 %v3494
        %3519 = vmatprep.subr.mxu0 0.0
        %3520 = vmatpush1.msra.mxu0 %v3495
        %3521 = vmatprep.subr.mxu0 0.0
        %3522 = vmatpush1.msra.mxu0 %v3496
        %3523 = vmatprep.subr.mxu0 0.0
        %3524 = vmatpush1.msra.mxu0 %v3497
        %3525 = vmatprep.subr.mxu0 0.0
        %3526 = vmatpush1.msra.mxu0 %v3498
        %3527 = vmatprep.subr.mxu0 0.0
        %3528 = vmatpush1.msra.mxu0 %v3499
        %3529 = vmatprep.subr.mxu0 0.0
        %3530 = vmatpush1.msra.mxu0 %v3500
        %3531 = vmatprep.subr.mxu0 0.0
        %3532 = vmatpush1.msra.mxu0 %v3501
        %3533 = vmatprep.subr.mxu0 0.0
        %3534 = vmatpush1.msra.mxu0 %v3502
        %3535 = vmatprep.subr.mxu0 0.0
        %3536 = vmatpush1.msra.mxu0 0.0
        %3537 = vmatprep.subr.mxu0 0.0
        %3538 = vmatpush1.msra.mxu0 0.0
        %3539 = vmatprep.subr.mxu0 0.0
        %3540 = vmatpush1.msra.mxu0 0.0
        %3541 = vmatprep.subr.mxu0 0.0
        %3542 = vmatpush1.msra.mxu0 0.0
        %3543 = vmatprep.subr.mxu0 0.0
        %3544 = vmatpush1.msra.mxu0 0.0
        %3545 = vmatprep.subr.mxu0 0.0
        %3546 = vmatpush1.msra.mxu0 0.0
        %3547 = vmatprep.subr.mxu0 0.0
        %3548 = vmatpush1.msra.mxu0 0.0
        %3549 = vmatprep.subr.mxu0 0.0
        %3550 = vmatpush1.msra.mxu0 0.0
        %3551 = vmatprep.subr.mxu0 0.0
        %3552 = vmatpush1.msra.mxu0 0.0
        %3553 = vmatprep.subr.mxu0 0.0
        %3554 = vmatpush1.msra.mxu0 0.0
        %3555 = vmatprep.subr.mxu0 0.0
        %3556 = vmatpush1.msra.mxu0 0.0
        %3557 = vmatprep.subr.mxu0 0.0
        %3558 = vmatpush1.msra.mxu0 0.0
        %3559 = vmatprep.subr.mxu0 0.0
        %3560 = vmatpush1.msra.mxu0 0.0
        %3561 = vmatprep.subr.mxu0 0.0
        %3562 = vmatpush1.msra.mxu0 0.0
        %3563 = vmatprep.subr.mxu0 0.0
        %3564 = vmatpush1.msra.mxu0 0.0
        %3565 = vmatprep.subr.mxu0 0.0
        %3566 = vmatpush1.msra.mxu0 0.0
        %3567 = vmatprep.subr.mxu0 0.0
        %3568 = vmatpush1.msra.mxu0 0.0
        %3569 = vmatprep.subr.mxu0 0.0
        %3570 = vmatpush1.msra.mxu0 0.0
        %3571 = vmatprep.subr.mxu0 0.0
        %3572 = vmatpush1.msra.mxu0 0.0
        %3573 = vmatprep.subr.mxu0 0.0
        %3574 = vmatpush1.msra.mxu0 0.0
        %3575 = vmatprep.mubr.f32.mxu0 0.0
        %3576 = vmatmul.mubr.f32.gmra.mrb[0].mxu0 %v3509
        %v3577 = vpop.f32.mrb[0].mxu0
        %v3578 = vadd.f32 %v3503, %v3577
        %v3579 = vpop.f32.mrb[0].mxu0
        %3580 = vdwg.mxu0
        %v3581 = vmax.f32 %v3578, 0.0
        %v3583 = vrot.slane %v3581, 6
        %v3585 = vsel %vm1806, 0.0, %v3583
        %v3586 = vsel %vm1806, %v3583, 0.0
        %v3589 = vrot.slane %v3585, 1
        %v3590 = vrot.slane %v3586, 1
        %v3591 = vsel %vm1811, %v3589, %v3590
        %3592 = vrot.lane.b32.xlu0 %v3591, 32
        %v3593 = vpop.permute.xlu0 %3592
        %v3595 = vrot.slane %v3585, 2
        %v3596 = vrot.slane %v3586, 2
        %v3597 = vsel %vm1821, %v3595, %v3596
        %3598 = vrot.lane.b32.xlu0 %v3597, 64
        %v3599 = vpop.permute.xlu0 %3598
        %v3601 = vrot.slane %v3585, 3
        %v3602 = vrot.slane %v3586, 3
        %v3603 = vsel %vm1947, %v3601, %v3602
        %3604 = vrot.lane.b32.xlu0 %v3603, 96
        %v3605 = vpop.permute.xlu0 %3604
        %v3607 = vrot.slane %v3585, 4
        %v3608 = vrot.slane %v3586, 4
        %v3609 = vsel %vm1954, %v3607, %v3608
        %v3610 = vsel %vm436, %v3585, %v3593
        %v3611 = vsel %vm1833, %v3610, %v3599
        %v3612 = vsel %vm1854, %v3611, %v3605
        %s3613 = scalar_lea.vmem %s10, 160
        %v3614 = vld [vmem:[%s3613] sm:$0xff]
        %v3615 = vld [vmem:[%s3613 + $0x8] sm:$0xff]
        %v3616 = vld [vmem:[%s3613 + $0x10] sm:$0xff]
        %v3617 = vld [vmem:[%s3613 + $0x18] sm:$0xff]
        %v3618 = vld [vmem:[%s3613 + $0x20] sm:$0xff]
        %v3619 = vld [vmem:[%s3613 + $0x28] sm:$0xff]
        %v3620 = vld [vmem:[%s3613 + $0x30] sm:$0xff]
        %v3621 = vld [vmem:[%s3613 + $0x38] sm:$0xff]
        %v3622 = vld [vmem:[%s3613 + $0x40] sm:$0xff]
        %v3623 = vld [vmem:[%s3613 + $0x48] sm:$0xff]
        %v3624 = vld [vmem:[%s3613 + $0x50] sm:$0xff]
        %v3625 = vld [vmem:[%s3613 + $0x58] sm:$0xff]
        %v3626 = vld [vmem:[%s3613 + $0x60] sm:$0xff]
        %v3627 = vld [vmem:[%s3613 + $0x68] sm:$0xff]
        %v3628 = vld [vmem:[%s3613 + $0x70] sm:$0xff]
        %v3629 = vld [vmem:[%s3613 + $0x78] sm:$0xff]
        %v3630 = vld [vmem:[%s3613 + $0x80] sm:$0xff]
        %v3631 = vld [vmem:[%s3613 + $0x88] sm:$0xff]
        %v3632 = vld [vmem:[%s3613 + $0x90] sm:$0xff]
        %v3633 = vld [vmem:[%s3613 + $0x98] sm:$0xff]
        %v3634 = vstv %s3455
        %v3635 = vsel %vm436, %v3609, 0
        %3637 = vmatprep.subr.mxu0 0.0
        %3638 = vmatpush1.msra.mxu0 %v3614
        %3639 = vmatprep.subr.mxu0 0.0
        %3640 = vmatpush1.msra.mxu0 %v3615
        %3641 = vmatprep.subr.mxu0 0.0
        %3642 = vmatpush1.msra.mxu0 %v3616
        %3643 = vmatprep.subr.mxu0 0.0
        %3644 = vmatpush1.msra.mxu0 %v3617
        %3645 = vmatprep.subr.mxu0 0.0
        %3646 = vmatpush1.msra.mxu0 %v3618
        %3647 = vmatprep.subr.mxu0 0.0
        %3648 = vmatpush1.msra.mxu0 %v3619
        %3649 = vmatprep.subr.mxu0 0.0
        %3650 = vmatpush1.msra.mxu0 %v3620
        %3651 = vmatprep.subr.mxu0 0.0
        %3652 = vmatpush1.msra.mxu0 %v3621
        %3653 = vmatprep.subr.mxu0 0.0
        %3654 = vmatpush1.msra.mxu0 %v3622
        %3655 = vmatprep.subr.mxu0 0.0
        %3656 = vmatpush1.msra.mxu0 %v3623
        %3657 = vmatprep.subr.mxu0 0.0
        %3658 = vmatpush1.msra.mxu0 %v3624
        %3659 = vmatprep.subr.mxu0 0.0
        %3660 = vmatpush1.msra.mxu0 %v3625
        %3661 = vmatprep.subr.mxu0 0.0
        %3662 = vmatpush1.msra.mxu0 %v3626
        %3663 = vmatprep.subr.mxu0 0.0
        %3664 = vmatpush1.msra.mxu0 %v3627
        %3665 = vmatprep.subr.mxu0 0.0
        %3666 = vmatpush1.msra.mxu0 %v3628
        %3667 = vmatprep.subr.mxu0 0.0
        %3668 = vmatpush1.msra.mxu0 %v3629
        %3669 = vmatprep.subr.mxu0 0.0
        %3670 = vmatpush1.msra.mxu0 %v3630
        %3671 = vmatprep.subr.mxu0 0.0
        %3672 = vmatpush1.msra.mxu0 %v3631
        %3673 = vmatprep.subr.mxu0 0.0
        %3674 = vmatpush1.msra.mxu0 %v3632
        %3675 = vmatprep.subr.mxu0 0.0
        %3676 = vmatpush1.msra.mxu0 %v3633
        %3677 = vmatprep.subr.mxu0 0.0
        %3678 = vmatpush1.msra.mxu0 0.0
        %3679 = vmatprep.subr.mxu0 0.0
        %3680 = vmatpush1.msra.mxu0 0.0
        %3681 = vmatprep.subr.mxu0 0.0
        %3682 = vmatpush1.msra.mxu0 0.0
        %3683 = vmatprep.subr.mxu0 0.0
        %3684 = vmatpush1.msra.mxu0 0.0
        %3685 = vmatprep.subr.mxu0 0.0
        %3686 = vmatpush1.msra.mxu0 0.0
        %3687 = vmatprep.subr.mxu0 0.0
        %3688 = vmatpush1.msra.mxu0 0.0
        %3689 = vmatprep.subr.mxu0 0.0
        %3690 = vmatpush1.msra.mxu0 0.0
        %3691 = vmatprep.subr.mxu0 0.0
        %3692 = vmatpush1.msra.mxu0 0.0
        %3693 = vmatprep.subr.mxu0 0.0
        %3694 = vmatpush1.msra.mxu0 0.0
        %3695 = vmatprep.subr.mxu0 0.0
        %3696 = vmatpush1.msra.mxu0 0.0
        %3697 = vmatprep.subr.mxu0 0.0
        %3698 = vmatpush1.msra.mxu0 0.0
        %3699 = vmatprep.subr.mxu0 0.0
        %3700 = vmatpush1.msra.mxu0 0.0
        %3701 = vmatprep.mubr.f32.mxu0 %v3635
        %3702 = vmatmul.mubr.f32.gmra.mrb[0].mxu0 %v3612
        %v3703 = vpop.f32.mrb[0].mxu0
        %v3704 = vadd.f32 %v3634, %v3703
        %v3705 = vpop.f32.mrb[0].mxu0
        %3706 = vdwg.mxu0
        %v3707 = vmax.f32 %v3704, 0.0
        %v3708 = vadd.f32 %v3451, %v3707
        %v3709 = vsel %vm436, %v3708, 0.0
        %3710 = vadd.xlane.f32.xlu0 %v3709
        %v3711 = vpop.xlane.xlu0 %3710
        %v3712 = vmul.f32 %v3711, %v1773
        %v3713 = vsub.f32 %v3708, %v3712
        %v3714 = vmul.f32 %v3713, %v3713
        %v3715 = vsel %vm436, %v3714, 0.0
        %3716 = vadd.xlane.f32.xlu0 %v3715
        %v3717 = vpop.xlane.xlu0 %3716
        %v3718 = vmul.f32 %v3717, %v1773
        %v3719 = vadd.f32 %v3718, 1e-05
        %v3720 = vrsqrt.pop %v3719
        %v3721 = vmul.f32 %v3713, %v3720
        %v3722 = vlaneseq
        %v3723 = vshrl.u32 %v3722, 7
        %v3724 = vsub.s32 3, %v3723
        %v3725 = vrot.slane %v2080, %v3724
        %v3726 = vmul.f32 %v3721, %v3725
        %v3727 = vlaneseq
        %v3728 = vshrl.u32 %v3727, 7
        %v3729 = vsub.s32 4, %v3728
        %v3730 = vrot.slane %v2080, %v3729
        %v3731 = vadd.f32 %v3726, %v3730
        %3732 = vst.msk [vmem:[%s418] sm:$0xff] %vm436, %v3731
        %s3733 = sand.u32 %s292, 1
        %s3734 = scalar_lea.sflag [#allocation3], %s3733
        %s3735 = sand.u32 %s292, 1
        %s3736 = smul.addr %s3735, 8
        %s3737 = scalar_lea.vmem [#allocation5], %s3736
        // Predicated region
        $region73: #{encoder_forward.1} parent=67 // pred_check
          %p3738 = pneg %p302
        $region74: #{encoder_forward.1} parent=67 // pred_check_branch
          %3740 = sbr.rel (%p3738) target = $region76
        $region75: #{encoder_forward.1} parent=67 // pred_region
          %s3742 = ssub.s32 128, 128
          %3743 = vsyncadd %s3734, %s3742
          %s3744 = smul.addr %s27, 128
          %s3745 = scalar_lea.hbm %s12, %s3744
          %s3747 = sshll.u32 %s3737, 4
          %s3748 = int_to_ptr.vmem [resolvable:$true] %s3747
          %3750 = dma.vmem_to_hbm [thread:$0]  %s3748, 128, %s3745, %s3734
        $region76: #{encoder_forward.1} parent=67 // pred_fallthru
          _
      $region68: #{encoder_forward.1} parent=5 // pred_fallthru
        _
      %p3751 = scmp.le.s32.totalorder 2, %s22
      // Predicated region
      $region77: #{encoder_forward.1} parent=5 // pred_check
        %p3752 = pneg %p3751
      $region78: #{encoder_forward.1} parent=5 // pred_check_branch
        %3754 = sbr.rel (%p3752) target = $region80
      $region79: #{encoder_forward.1} parent=5 // pred_region
        %s3755 = ssub.s32 %s22, 2
        // Predicated region
        $region81: #{encoder_forward.1} parent=79 // pred_check
          %p3756 = pneg %p308
        $region82: #{encoder_forward.1} parent=79 // pred_check_branch
          %3758 = sbr.rel (%p3756) target = $region84
        $region83: #{encoder_forward.1} parent=79 // pred_region
          %s3759 = sand.u32 %s293, 1
          %s3760 = scalar_lea.sflag [#allocation3], %s3759
          %s3761 = sand.u32 %s293, 1
          %s3762 = smul.addr %s3761, 8
          %s3763 = scalar_lea.vmem [#allocation5], %s3762
          %3764 = dma.done %s3760, 128
        $region84: #{encoder_forward.1} parent=79 // pred_fallthru
          _
      $region80: #{encoder_forward.1} parent=5 // pred_fallthru
        _
    $region6: #{encoder_forward.1} parent=1 // loop_footer
      %s26 = sadd.s32 1, %s22
    $region7: #{encoder_forward.1} parent=1 // loop_footer_branch
      %21 = sbr.rel target = $region3
    $region8: #{encoder_forward.1} parent=1 // loop_exit
      _
    %3765 = vsyncpa [#allocation3], 1
    %s3766 = scalar_lea.sflag [#allocation3], 1
    %3767 = vsyncpa %s3766, 1
    %3768 = vsyncpa [#allocation4], 1
    %s3769 = scalar_lea.sflag [#allocation4], 1
    %3770 = vsyncpa %s3769, 1

</llo_original>
